<compile_context>
chip_gen: v5e
topology: v5e:2x2
jax: 0.10.0
libtpu: 0.0.40
codegen_flags: <defaults>
</compile_context>

<pallas_src>
import jax
import jax.numpy as jnp
from jax.experimental import pallas as pl
from jax.experimental.pallas import tpu as pltpu


def _leaky_relu(x, slope=0.2):
    return jnp.where(x > 0, x, slope * x)


def _round_up(x, m):
    return ((x + m - 1) // m) * m


def muscle_nn_kernel(x_ref, w1_ref, w2_ref, w3_ref, w4_ref, b_ref, out_ref):
    h1 = w1_ref.shape[1]
    h2 = w2_ref.shape[1]
    h3 = w3_ref.shape[1]
    nm = w4_ref.shape[1]

    # Static, lane-aligned slices of the packed bias row (f32).
    # (h1/h2/h3/nm are multiples of 128 for the defaults; non-multiples stay
    #  correct but fall back to slower cross-tile slices / masked stores.)
    b1 = b_ref[:, 0:h1]
    b2 = b_ref[:, h1:h1 + h2]
    b3 = b_ref[:, h1 + h2:h1 + h2 + h3]
    b4 = b_ref[:, h1 + h2 + h3:h1 + h2 + h3 + nm]

    # Input is already bf16 (pre-cast in the wrapper); 1/200 scaling is folded
    # into W1.  Single K=128 MXU dot for layer 1, f32 accumulation throughout,
    # bf16 inter-layer intermediates.
    x = x_ref[...]

    h = jnp.dot(x, w1_ref[...], preferred_element_type=jnp.float32) + b1
    h = _leaky_relu(h).astype(jnp.bfloat16)

    h = jnp.dot(h, w2_ref[...], preferred_element_type=jnp.float32) + b2
    h = _leaky_relu(h).astype(jnp.bfloat16)

    h = jnp.dot(h, w3_ref[...], preferred_element_type=jnp.float32) + b3
    h = _leaky_relu(h).astype(jnp.bfloat16)

    h = jnp.dot(h, w4_ref[...], preferred_element_type=jnp.float32) + b4
    h = jnp.tanh(h)

    # nn.ReLU()(out)
    out_ref[...] = jnp.maximum(h, 0.0)


def muscle_nn_forward(muscle_tau, tau, prepped, *, block_m=512):
    """muscle_tau: [B, num_total_muscle_related_dofs] f32, tau: [B, num_dofs] f32."""
    w1, w2, w3, w4, b_all = prepped
    batch = muscle_tau.shape[0]
    k_in = w1.shape[0]                 # padded concat-input width (multiple of 128)
    h1, h2, h3 = w1.shape[1], w2.shape[1], w3.shape[1]
    num_muscles = w4.shape[1]

    # Fuse the two inputs into one lane-aligned [B, k_in] bf16 slab.
    x = jnp.concatenate([muscle_tau, tau], axis=1)
    feat = x.shape[1]
    if feat < k_in:
        x = jnp.pad(x, ((0, 0), (0, k_in - feat)))
    x = x.astype(jnp.bfloat16)

    # Batch tile: >= 8 (sublane granularity), <= block_m; for batches >= 256
    # cap the tile so the grid has >= 2 steps (v7x: both TensorCores get work).
    bm_cap = block_m
    if batch >= 256:
        bm_cap = min(bm_cap, _round_up((batch + 1) // 2, 8))
    bm = min(bm_cap, _round_up(batch, 8))
    batch_p = _round_up(batch, bm)
    if batch_p != batch:
        x = jnp.pad(x, ((0, batch_p - batch), (0, 0)))
    grid = (batch_p // bm,)

    # Weights / packed bias: full-array blocks, constant index_maps (fetched
    # once, VMEM-resident across grid steps), single-buffered (never re-DMA'd).
    const2 = lambda i: (0, 0)

    def _wspec(shape):
        return pl.BlockSpec(shape, const2, pipeline_mode=pl.Buffered(buffer_count=1))

    in_specs = [
        pl.BlockSpec((bm, k_in), lambda i: (i, 0)),
        _wspec(w1.shape),
        _wspec(w2.shape),
        _wspec(w3.shape),
        _wspec(w4.shape),
        _wspec(b_all.shape),
    ]
    out_specs = pl.BlockSpec((bm, num_muscles), lambda i: (i, 0))

    # Advisory cost estimate so XLA overlaps neighbouring ops around this call.
    weight_elems = k_in * h1 + h1 * h2 + h2 * h3 + h3 * num_muscles
    cost = pl.CostEstimate(
        flops=2 * batch_p * weight_elems,
        transcendentals=batch_p * num_muscles,
        bytes_accessed=(2 * weight_elems                      # bf16 weights
                        + 4 * (h1 + h2 + h3 + num_muscles)    # f32 biases
                        + 2 * batch_p * k_in                  # bf16 input
                        + 4 * batch_p * num_muscles),         # f32 output
    )

    out = pl.pallas_call(
        muscle_nn_kernel,
        out_shape=jax.ShapeDtypeStruct((batch_p, num_muscles), jnp.float32),
        grid=grid,
        in_specs=in_specs,
        out_specs=out_specs,
        compiler_params=pltpu.CompilerParams(
            dimension_semantics=("parallel",),
            vmem_limit_bytes=32 * 1024 * 1024,
        ),
        cost_estimate=cost,
    )(x, w1, w2, w3, w4, b_all)

    return out[:batch]


def init_params(key, num_total_muscle_related_dofs, num_dofs, num_muscles,
                num_h1=1024, num_h2=512, num_h3=512):
    """PyTorch-style uniform(-1/sqrt(fan_in), 1/sqrt(fan_in)) init.

    Weights stored [in, out] (transposed vs. nn.Linear), biases as [1, out].
    """
    dims = [(num_total_muscle_related_dofs + num_dofs, num_h1),
            (num_h1, num_h2),
            (num_h2, num_h3),
            (num_h3, num_muscles)]
    params = []
    for (fan_in, fan_out) in dims:
        key, kw, kb = jax.random.split(key, 3)
        bound = 1.0 / jnp.sqrt(jnp.float32(fan_in))
        w = jax.random.uniform(kw, (fan_in, fan_out), jnp.float32, -bound, bound)
        b = jax.random.uniform(kb, (1, fan_out), jnp.float32, -bound, bound)
        params += [w, b]
    return tuple(params)


def prepare_params(params):
    """One-time host prep: fold 1/200 into W1, zero-pad its input dim to a
    128 multiple, cast weights to bf16, pack biases into one f32 row."""
    (w1, b1, w2, b2, w3, b3, w4, b4) = params
    w1_scaled = w1 * (1.0 / 200.0)
    k_raw = w1_scaled.shape[0]
    k_pad = _round_up(k_raw, 128)
    if k_pad != k_raw:
        w1_scaled = jnp.pad(w1_scaled, ((0, k_pad - k_raw), (0, 0)))
    w1b = w1_scaled.astype(jnp.bfloat16)
    w2b = w2.astype(jnp.bfloat16)
    w3b = w3.astype(jnp.bfloat16)
    w4b = w4.astype(jnp.bfloat16)
    b_all = jnp.concatenate([b1, b2, b3, b4], axis=1).astype(jnp.float32)
    return (w1b, w2b, w3b, w4b, b_all)


def reference_forward_f32(muscle_tau, tau, params):
    """Original MuscleNN semantics in f32 (loose sanity reference)."""
    (w1, b1, w2, b2, w3, b3, w4, b4) = params
    x = jnp.concatenate([muscle_tau / 200.0, tau / 200.0], axis=1)
    h = _leaky_relu(x @ w1 + b1)
    h = _leaky_relu(h @ w2 + b2)
    h = _leaky_relu(h @ w3 + b3)
    h = jnp.tanh(h @ w4 + b4)
    return jnp.maximum(h, 0.0)


def reference_forward_bf16(muscle_tau, tau, prepped):
    """Pure-JAX reference with identical bf16/f32 numerics to the kernel."""
    w1, w2, w3, w4, b_all = prepped
    h1, h2, h3, nm = w1.shape[1], w2.shape[1], w3.shape[1], w4.shape[1]
    b1 = b_all[:, 0:h1]
    b2 = b_all[:, h1:h1 + h2]
    b3 = b_all[:, h1 + h2:h1 + h2 + h3]
    b4 = b_all[:, h1 + h2 + h3:h1 + h2 + h3 + nm]

    x = jnp.concatenate([muscle_tau, tau], axis=1)
    k_in = w1.shape[0]
    if x.shape[1] < k_in:
        x = jnp.pad(x, ((0, 0), (0, k_in - x.shape[1])))
    x = x.astype(jnp.bfloat16)

    h = jnp.dot(x, w1, preferred_element_type=jnp.float32) + b1
    h = _leaky_relu(h).astype(jnp.bfloat16)
    h = jnp.dot(h, w2, preferred_element_type=jnp.float32) + b2
    h = _leaky_relu(h).astype(jnp.bfloat16)
    h = jnp.dot(h, w3, preferred_element_type=jnp.float32) + b3
    h = _leaky_relu(h).astype(jnp.bfloat16)
    h = jnp.dot(h, w4, preferred_element_type=jnp.float32) + b4
    return jnp.maximum(jnp.tanh(h), 0.0)


if __name__ == "__main__":
    # Small, lane-friendly sizes consistent with the module (96 + 32 = 128).
    num_total_muscle_related_dofs = 96
    num_dofs = 32
    num_muscles = 128
    batch = 8

    key = jax.random.PRNGKey(0)
    k_p, k_mt, k_tau = jax.random.split(key, 3)

    params = init_params(k_p, num_total_muscle_related_dofs, num_dofs, num_muscles)
    prepped = prepare_params(params)

    muscle_tau = jax.random.normal(
        k_mt, (batch, num_total_muscle_related_dofs), jnp.float32) * 200.0
    tau = jax.random.normal(k_tau, (batch, num_dofs), jnp.float32) * 200.0

    out = muscle_nn_forward(muscle_tau, tau, prepped)
    out = jax.block_until_ready(out)
    assert out.shape == (batch, num_muscles)

    # Tight check vs. a pure-JAX reference with identical bf16/f32 numerics.
    ref_bf16 = reference_forward_bf16(muscle_tau, tau, prepped)
    assert jnp.allclose(out, ref_bf16, atol=1e-4, rtol=1e-4), \
        float(jnp.max(jnp.abs(out - ref_bf16)))

    # Loose sanity check vs. the original f32 MuscleNN semantics.
    ref_f32 = reference_forward_f32(muscle_tau, tau, params)
    assert jnp.allclose(out, ref_f32, atol=3e-2, rtol=3e-2), \
        float(jnp.max(jnp.abs(out - ref_f32)))

    print("KERNEL_OK")
</pallas_src>

<mosaic_0001>
module attributes {stable_mosaic.version = 11 : i64} {
  func.func @muscle_nn_kernel(%arg0: i32, %arg1: memref<8x128xbf16, #tpu.memory_space<vmem>>, %arg2: memref<128x1024xbf16, #tpu.memory_space<vmem>>, %arg3: memref<1024x512xbf16, #tpu.memory_space<vmem>>, %arg4: memref<512x512xbf16, #tpu.memory_space<vmem>>, %arg5: memref<512x128xbf16, #tpu.memory_space<vmem>>, %arg6: memref<1x2176xf32, #tpu.memory_space<vmem>>, %arg7: memref<8x128xf32, #tpu.memory_space<vmem>>) attributes {dimension_semantics = [#tpu.dimension_semantics<parallel>], iteration_bounds = array<i64: 1>, scalar_prefetch = 0 : i64, scratch_operands = 0 : i64, tpu.core_type = #tpu.core_type<tc>, window_params = [{transform_indices = @transform_0, window_bounds = array<i64: 8, 128>}, {pipeline_mode = #tpu.pipeline_mode<synchronous>, transform_indices = @transform_1, window_bounds = array<i64: 128, 1024>}, {pipeline_mode = #tpu.pipeline_mode<synchronous>, transform_indices = @transform_2, window_bounds = array<i64: 1024, 512>}, {pipeline_mode = #tpu.pipeline_mode<synchronous>, transform_indices = @transform_3, window_bounds = array<i64: 512, 512>}, {pipeline_mode = #tpu.pipeline_mode<synchronous>, transform_indices = @transform_4, window_bounds = array<i64: 512, 128>}, {pipeline_mode = #tpu.pipeline_mode<synchronous>, transform_indices = @transform_5, window_bounds = array<i64: 1, 2176>}, {transform_indices = @transform_6, window_bounds = array<i64: 8, 128>}]} {
    %c0 = arith.constant 0 : index
    %c0_0 = arith.constant 0 : index
    %0 = vector.load %arg6[%c0, %c0_0] : memref<1x2176xf32, #tpu.memory_space<vmem>>, vector<1x1024xf32>
    %c0_1 = arith.constant 0 : index
    %c1024 = arith.constant 1024 : index
    %1 = vector.load %arg6[%c0_1, %c1024] : memref<1x2176xf32, #tpu.memory_space<vmem>>, vector<1x512xf32>
    %c0_2 = arith.constant 0 : index
    %c1536 = arith.constant 1536 : index
    %2 = vector.load %arg6[%c0_2, %c1536] : memref<1x2176xf32, #tpu.memory_space<vmem>>, vector<1x512xf32>
    %c0_3 = arith.constant 0 : index
    %c2048 = arith.constant 2048 : index
    %3 = vector.load %arg6[%c0_3, %c2048] : memref<1x2176xf32, #tpu.memory_space<vmem>>, vector<1x128xf32>
    %c0_4 = arith.constant 0 : index
    %c0_5 = arith.constant 0 : index
    %4 = vector.load %arg1[%c0_4, %c0_5] : memref<8x128xbf16, #tpu.memory_space<vmem>>, vector<8x128xbf16>
    %c0_6 = arith.constant 0 : index
    %c0_7 = arith.constant 0 : index
    %5 = vector.load %arg2[%c0_6, %c0_7] : memref<128x1024xbf16, #tpu.memory_space<vmem>>, vector<128x1024xbf16>
    %cst = arith.constant dense<0.000000e+00> : vector<8x1024xf32>
    %6 = tpu.matmul %4, %5, %cst {dimension_numbers = #tpu.dot_dimension_numbers<[1], [0], [0], [1], [0, 0, 1, 1], [], []>} : vector<8x128xbf16>, vector<128x1024xbf16>, vector<8x1024xf32> -> vector<8x1024xf32>
    %7 = vector.broadcast %0 : vector<1x1024xf32> to vector<8x1024xf32>
    %8 = arith.addf %6, %7 : vector<8x1024xf32>
    %cst_8 = arith.constant 0.000000e+00 : f32
    %9 = vector.broadcast %cst_8 : f32 to vector<8x1024xf32>
    %10 = arith.cmpf ogt, %8, %9 : vector<8x1024xf32>
    %cst_9 = arith.constant 2.000000e-01 : f32
    %11 = vector.broadcast %cst_9 : f32 to vector<8x1024xf32>
    %12 = arith.mulf %11, %8 : vector<8x1024xf32>
    %13 = arith.select %10, %8, %12 : vector<8x1024xi1>, vector<8x1024xf32>
    %14 = arith.truncf %13 : vector<8x1024xf32> to vector<8x1024xbf16>
    %c0_10 = arith.constant 0 : index
    %c0_11 = arith.constant 0 : index
    %15 = vector.load %arg3[%c0_10, %c0_11] : memref<1024x512xbf16, #tpu.memory_space<vmem>>, vector<1024x512xbf16>
    %cst_12 = arith.constant dense<0.000000e+00> : vector<8x512xf32>
    %16 = tpu.matmul %14, %15, %cst_12 {dimension_numbers = #tpu.dot_dimension_numbers<[1], [0], [0], [1], [0, 0, 1, 1], [], []>} : vector<8x1024xbf16>, vector<1024x512xbf16>, vector<8x512xf32> -> vector<8x512xf32>
    %17 = vector.broadcast %1 : vector<1x512xf32> to vector<8x512xf32>
    %18 = arith.addf %16, %17 : vector<8x512xf32>
    %cst_13 = arith.constant 0.000000e+00 : f32
    %19 = vector.broadcast %cst_13 : f32 to vector<8x512xf32>
    %20 = arith.cmpf ogt, %18, %19 : vector<8x512xf32>
    %cst_14 = arith.constant 2.000000e-01 : f32
    %21 = vector.broadcast %cst_14 : f32 to vector<8x512xf32>
    %22 = arith.mulf %21, %18 : vector<8x512xf32>
    %23 = arith.select %20, %18, %22 : vector<8x512xi1>, vector<8x512xf32>
    %24 = arith.truncf %23 : vector<8x512xf32> to vector<8x512xbf16>
    %c0_15 = arith.constant 0 : index
    %c0_16 = arith.constant 0 : index
    %25 = vector.load %arg4[%c0_15, %c0_16] : memref<512x512xbf16, #tpu.memory_space<vmem>>, vector<512x512xbf16>
    %cst_17 = arith.constant dense<0.000000e+00> : vector<8x512xf32>
    %26 = tpu.matmul %24, %25, %cst_17 {dimension_numbers = #tpu.dot_dimension_numbers<[1], [0], [0], [1], [0, 0, 1, 1], [], []>} : vector<8x512xbf16>, vector<512x512xbf16>, vector<8x512xf32> -> vector<8x512xf32>
    %27 = vector.broadcast %2 : vector<1x512xf32> to vector<8x512xf32>
    %28 = arith.addf %26, %27 : vector<8x512xf32>
    %cst_18 = arith.constant 0.000000e+00 : f32
    %29 = vector.broadcast %cst_18 : f32 to vector<8x512xf32>
    %30 = arith.cmpf ogt, %28, %29 : vector<8x512xf32>
    %cst_19 = arith.constant 2.000000e-01 : f32
    %31 = vector.broadcast %cst_19 : f32 to vector<8x512xf32>
    %32 = arith.mulf %31, %28 : vector<8x512xf32>
    %33 = arith.select %30, %28, %32 : vector<8x512xi1>, vector<8x512xf32>
    %34 = arith.truncf %33 : vector<8x512xf32> to vector<8x512xbf16>
    %c0_20 = arith.constant 0 : index
    %c0_21 = arith.constant 0 : index
    %35 = vector.load %arg5[%c0_20, %c0_21] : memref<512x128xbf16, #tpu.memory_space<vmem>>, vector<512x128xbf16>
    %cst_22 = arith.constant dense<0.000000e+00> : vector<8x128xf32>
    %36 = tpu.matmul %34, %35, %cst_22 {dimension_numbers = #tpu.dot_dimension_numbers<[1], [0], [0], [1], [0, 0, 1, 1], [], []>} : vector<8x512xbf16>, vector<512x128xbf16>, vector<8x128xf32> -> vector<8x128xf32>
    %37 = vector.broadcast %3 : vector<1x128xf32> to vector<8x128xf32>
    %38 = arith.addf %36, %37 : vector<8x128xf32>
    %39 = math.tanh %38 : vector<8x128xf32>
    %cst_23 = arith.constant 0.000000e+00 : f32
    %40 = vector.broadcast %cst_23 : f32 to vector<8x128xf32>
    %41 = arith.maximumf %39, %40 : vector<8x128xf32>
    %c0_24 = arith.constant 0 : index
    %c0_25 = arith.constant 0 : index
    %42 = vector.load %arg7[%c0_24, %c0_25] : memref<8x128xf32, #tpu.memory_space<vmem>>, vector<8x128xf32>
    tpu.vector_store %arg7[%c0_24, %c0_25], %41 {strides = array<i32>} : memref<8x128xf32, #tpu.memory_space<vmem>>, vector<8x128xf32>,
    return
  }
  func.func @transform_0(%arg0: i32) -> (i32, i32) {
    %c0_i32 = arith.constant 0 : i32
    %c0_i32_0 = arith.constant 0 : i32
    return %arg0, %c0_i32 : i32, i32
  }
  func.func @transform_1(%arg0: i32) -> (i32, i32) {
    %c0_i32 = arith.constant 0 : i32
    %c0_i32_0 = arith.constant 0 : i32
    %c0_i32_1 = arith.constant 0 : i32
    return %c0_i32, %c0_i32_0 : i32, i32
  }
  func.func @transform_2(%arg0: i32) -> (i32, i32) {
    %c0_i32 = arith.constant 0 : i32
    %c0_i32_0 = arith.constant 0 : i32
    %c0_i32_1 = arith.constant 0 : i32
    return %c0_i32, %c0_i32_0 : i32, i32
  }
  func.func @transform_3(%arg0: i32) -> (i32, i32) {
    %c0_i32 = arith.constant 0 : i32
    %c0_i32_0 = arith.constant 0 : i32
    %c0_i32_1 = arith.constant 0 : i32
    return %c0_i32, %c0_i32_0 : i32, i32
  }
  func.func @transform_4(%arg0: i32) -> (i32, i32) {
    %c0_i32 = arith.constant 0 : i32
    %c0_i32_0 = arith.constant 0 : i32
    %c0_i32_1 = arith.constant 0 : i32
    return %c0_i32, %c0_i32_0 : i32, i32
  }
  func.func @transform_5(%arg0: i32) -> (i32, i32) {
    %c0_i32 = arith.constant 0 : i32
    %c0_i32_0 = arith.constant 0 : i32
    %c0_i32_1 = arith.constant 0 : i32
    return %c0_i32, %c0_i32_0 : i32, i32
  }
  func.func @transform_6(%arg0: i32) -> (i32, i32) {
    %c0_i32 = arith.constant 0 : i32
    %c0_i32_0 = arith.constant 0 : i32
    return %arg0, %c0_i32 : i32, i32
  }
}

</mosaic_0001>

<llo_original>
// kernel: tpu_custom_call.1
$region0: #{tpu_custom_call.1}
  #allocation0 [shape = 'u32[]', space=smem, size = 0x4, offset = 0x4, fixed_abs, tag = 'smem constant byte address 0x4 - core index']
  #allocation1 [shape = 'u32[72,128]{1,0:T(1,128)}', space=vmem, size = 0x9000, scoped, tag = 'internal scratch']
  %s0 = inlined_call_operand.hbm [shape: bf16[8,128], index: 0, kind: input, shape index: {}]
  %s1 = inlined_call_operand.hbm [shape: bf16[128,1024], index: 1, kind: input, shape index: {}]
  %s2 = inlined_call_operand.hbm [shape: bf16[1024,512], index: 2, kind: input, shape index: {}]
  %s3 = inlined_call_operand.hbm [shape: bf16[512,512], index: 3, kind: input, shape index: {}]
  %s4 = inlined_call_operand.hbm [shape: bf16[512,128], index: 4, kind: input, shape index: {}]
  %s5 = inlined_call_operand.hbm [shape: f32[1,2176], index: 5, kind: input, shape index: {}]
  %s6 = inlined_call_operand.hbm [shape: f32[8,128], index: 6, kind: output, shape index: {}]
  %s7 = sld [smem:[#allocation0]]
  $region58: #{tpu_custom_call.1} parent=0
    _
  %s9 = ssub.s32 1, %s7
  %s10 = scalar_select 0, %s9, %s7
  $region1: #{tpu_custom_call.1} parent=0
    #allocation2 [shape = 'u8[2048]{0}', space=vmem, size = 0x800, scoped, tag = 'input window, operand 0, single buffered']
    #allocation3 [shape = 's32[1]{0}', space=sflag, size = 0x4, scoped, tag = 'scoped memory for tpu_custom_call.1']
    #allocation4 [shape = 's32[1]{0}', space=sflag, size = 0x4, scoped, tag = 'scoped memory for tpu_custom_call.1']
    #allocation5 [shape = 'u8[262144]{0}', space=vmem, size = 0x40000, scoped, tag = 'input window, operand 1, single buffered']
    #allocation6 [shape = 's32[1]{0}', space=sflag, size = 0x4, scoped, tag = 'scoped memory for tpu_custom_call.1']
    #allocation7 [shape = 'u8[1048576]{0}', space=vmem, size = 0x100000, scoped, tag = 'input window, operand 2, single buffered']
    #allocation8 [shape = 'u8[524288]{0}', space=vmem, size = 0x80000, scoped, tag = 'input window, operand 3, single buffered']
    #allocation9 [shape = 's32[1]{0}', space=sflag, size = 0x4, scoped, tag = 'scoped memory for tpu_custom_call.1']
    #allocation10 [shape = 'u8[131072]{0}', space=vmem, size = 0x20000, scoped, tag = 'input window, operand 4, single buffered']
    #allocation11 [shape = 'u8[8704]{0}', space=vmem, size = 0x2400, scoped, tag = 'input window, operand 5, single buffered']
    #allocation12 [shape = 's32[1]{0}', space=sflag, size = 0x4, scoped, tag = 'scoped memory for tpu_custom_call.1']
    #allocation13 [shape = 'u8[4096]{0}', space=vmem, size = 0x1000, scoped, tag = 'output window, operand 0, single buffered']
    %11 = vsyncpa [#allocation3], 0
    %12 = vsyncpa [#allocation6], 0
    %13 = vsyncpa [#allocation9], 0
    %14 = vsyncpa [#allocation12], 0
    %15 = vsyncpa [#allocation4], 0
    // Predicated region
    $region2: #{tpu_custom_call.1} parent=1 // pred_check
      _
    $region3: #{tpu_custom_call.1} parent=1 // pred_check_branch
      %17 = sbr.rel (0) target = $region5
    $region4: #{tpu_custom_call.1} parent=1 // pred_region
      %19 = vsyncadd [#allocation3], 0
      %s21 = sshll.u32 %s0, 4
      %s22 = int_to_ptr.hbm [resolvable:$true] %s21
      %s23 = sshll.u32 [#allocation2], 4
      %s24 = int_to_ptr.vmem [resolvable:$true] %s23
      %26 = dma.hbm_to_vmem [thread:$0]  %s22, 64, %s24, [#allocation3]
    $region5: #{tpu_custom_call.1} parent=1 // pred_fallthru
      _
    // Predicated region
    $region6: #{tpu_custom_call.1} parent=1 // pred_check
      _
    $region7: #{tpu_custom_call.1} parent=1 // pred_check_branch
      %28 = sbr.rel (0) target = $region9
    $region8: #{tpu_custom_call.1} parent=1 // pred_region
      %30 = vsyncadd [#allocation6], 0
      %s31 = sshll.u32 %s1, 4
      %s32 = int_to_ptr.hbm [resolvable:$true] %s31
      %s33 = sshll.u32 [#allocation5], 4
      %s34 = int_to_ptr.vmem [resolvable:$true] %s33
      %39 = dma.hbm_to_vmem [thread:$0]  %s32, 8192, %s34, [#allocation6], 512, 512, 32
    $region9: #{tpu_custom_call.1} parent=1 // pred_fallthru
      _
    // Predicated region
    $region10: #{tpu_custom_call.1} parent=1 // pred_check
      _
    $region11: #{tpu_custom_call.1} parent=1 // pred_check_branch
      %41 = sbr.rel (0) target = $region13
    $region12: #{tpu_custom_call.1} parent=1 // pred_region
      %43 = vsyncadd [#allocation6], 0
      %s44 = sshll.u32 %s2, 4
      %s45 = int_to_ptr.hbm [resolvable:$true] %s44
      %s46 = sshll.u32 [#allocation7], 4
      %s47 = int_to_ptr.vmem [resolvable:$true] %s46
      %52 = dma.hbm_to_vmem [thread:$0]  %s45, 32768, %s47, [#allocation6], 256, 256, 16
    $region13: #{tpu_custom_call.1} parent=1 // pred_fallthru
      _
    // Predicated region
    $region14: #{tpu_custom_call.1} parent=1 // pred_check
      _
    $region15: #{tpu_custom_call.1} parent=1 // pred_check_branch
      %54 = sbr.rel (0) target = $region17
    $region16: #{tpu_custom_call.1} parent=1 // pred_region
      %56 = vsyncadd [#allocation9], 0
      %s57 = sshll.u32 %s3, 4
      %s58 = int_to_ptr.hbm [resolvable:$true] %s57
      %s59 = sshll.u32 [#allocation8], 4
      %s60 = int_to_ptr.vmem [resolvable:$true] %s59
      %65 = dma.hbm_to_vmem [thread:$0]  %s58, 16384, %s60, [#allocation9], 256, 256, 16
    $region17: #{tpu_custom_call.1} parent=1 // pred_fallthru
      _
    // Predicated region
    $region18: #{tpu_custom_call.1} parent=1 // pred_check
      _
    $region19: #{tpu_custom_call.1} parent=1 // pred_check_branch
      %67 = sbr.rel (0) target = $region21
    $region20: #{tpu_custom_call.1} parent=1 // pred_region
      %69 = vsyncadd [#allocation9], 0
      %s70 = sshll.u32 %s4, 4
      %s71 = int_to_ptr.hbm [resolvable:$true] %s70
      %s72 = sshll.u32 [#allocation10], 4
      %s73 = int_to_ptr.vmem [resolvable:$true] %s72
      %78 = dma.hbm_to_vmem [thread:$0]  %s71, 4096, %s73, [#allocation9], 64, 64, 4
    $region21: #{tpu_custom_call.1} parent=1 // pred_fallthru
      _
    // Predicated region
    $region22: #{tpu_custom_call.1} parent=1 // pred_check
      _
    $region23: #{tpu_custom_call.1} parent=1 // pred_check_branch
      %80 = sbr.rel (0) target = $region25
    $region24: #{tpu_custom_call.1} parent=1 // pred_region
      %82 = vsyncadd [#allocation12], 0
      %s84 = sshll.u32 %s5, 4
      %s85 = int_to_ptr.hbm [resolvable:$true] %s84
      %s86 = sshll.u32 [#allocation11], 4
      %s87 = int_to_ptr.vmem [resolvable:$true] %s86
      %89 = dma.hbm_to_vmem [thread:$0]  %s85, 272, %s87, [#allocation12]
    $region25: #{tpu_custom_call.1} parent=1 // pred_fallthru
      _
    // Predicated region
    $region26: #{tpu_custom_call.1} parent=1 // pred_check
      _
    $region27: #{tpu_custom_call.1} parent=1 // pred_check_branch
      %91 = sbr.rel (0) target = $region29
    $region28: #{tpu_custom_call.1} parent=1 // pred_region
      %93 = dma.done [#allocation3], 64
    $region29: #{tpu_custom_call.1} parent=1 // pred_fallthru
      _
    // Predicated region
    $region30: #{tpu_custom_call.1} parent=1 // pred_check
      _
    $region31: #{tpu_custom_call.1} parent=1 // pred_check_branch
      %95 = sbr.rel (0) target = $region33
    $region32: #{tpu_custom_call.1} parent=1 // pred_region
      %97 = dma.done [#allocation6], 8192
    $region33: #{tpu_custom_call.1} parent=1 // pred_fallthru
      _
    // Predicated region
    $region34: #{tpu_custom_call.1} parent=1 // pred_check
      _
    $region35: #{tpu_custom_call.1} parent=1 // pred_check_branch
      %99 = sbr.rel (0) target = $region37
    $region36: #{tpu_custom_call.1} parent=1 // pred_region
      %101 = dma.done [#allocation6], 32768
    $region37: #{tpu_custom_call.1} parent=1 // pred_fallthru
      _
    // Predicated region
    $region38: #{tpu_custom_call.1} parent=1 // pred_check
      _
    $region39: #{tpu_custom_call.1} parent=1 // pred_check_branch
      %103 = sbr.rel (0) target = $region41
    $region40: #{tpu_custom_call.1} parent=1 // pred_region
      %105 = dma.done [#allocation9], 16384
    $region41: #{tpu_custom_call.1} parent=1 // pred_fallthru
      _
    // Predicated region
    $region42: #{tpu_custom_call.1} parent=1 // pred_check
      _
    $region43: #{tpu_custom_call.1} parent=1 // pred_check_branch
      %107 = sbr.rel (0) target = $region45
    $region44: #{tpu_custom_call.1} parent=1 // pred_region
      %109 = dma.done [#allocation9], 4096
    $region45: #{tpu_custom_call.1} parent=1 // pred_fallthru
      _
    // Predicated region
    $region46: #{tpu_custom_call.1} parent=1 // pred_check
      _
    $region47: #{tpu_custom_call.1} parent=1 // pred_check_branch
      %111 = sbr.rel (0) target = $region49
    $region48: #{tpu_custom_call.1} parent=1 // pred_region
      %113 = dma.done [#allocation12], 272
    $region49: #{tpu_custom_call.1} parent=1 // pred_fallthru
      _
    %v114 = vld [vmem:[#allocation11] sm:$0xff]
    %v115 = vld [vmem:[#allocation11 + $0x8] sm:$0xf]
    %v116 = vld [vmem:[#allocation11 + $0xc] sm:$0xf]
    %v117 = vld [vmem:[#allocation11 + $0x10] sm:$0x1]
    %v118 = vld [vmem:[#allocation2] sm:$0xf]
    %v119 = vld [vmem:[#allocation5] sm:$0xff]
    %v120 = vld [vmem:[#allocation5 + $0x8] sm:$0xff]
    %v121 = vld [vmem:[#allocation5 + $0x10] sm:$0xff]
    %v122 = vld [vmem:[#allocation5 + $0x18] sm:$0xff]
    %v123 = vld [vmem:[#allocation5 + $0x20] sm:$0xff]
    %v124 = vld [vmem:[#allocation5 + $0x28] sm:$0xff]
    %v125 = vld [vmem:[#allocation5 + $0x30] sm:$0xff]
    %v126 = vld [vmem:[#allocation5 + $0x38] sm:$0xff]
    %v127 = vld [vmem:[#allocation5 + $0x40] sm:$0xff]
    %v128 = vld [vmem:[#allocation5 + $0x48] sm:$0xff]
    %v129 = vld [vmem:[#allocation5 + $0x50] sm:$0xff]
    %v130 = vld [vmem:[#allocation5 + $0x58] sm:$0xff]
    %v131 = vld [vmem:[#allocation5 + $0x60] sm:$0xff]
    %v132 = vld [vmem:[#allocation5 + $0x68] sm:$0xff]
    %v133 = vld [vmem:[#allocation5 + $0x70] sm:$0xff]
    %v134 = vld [vmem:[#allocation5 + $0x78] sm:$0xff]
    %v135 = vld [vmem:[#allocation5 + $0x80] sm:$0xff]
    %v136 = vld [vmem:[#allocation5 + $0x88] sm:$0xff]
    %v137 = vld [vmem:[#allocation5 + $0x90] sm:$0xff]
    %v138 = vld [vmem:[#allocation5 + $0x98] sm:$0xff]
    %v139 = vld [vmem:[#allocation5 + $0xa0] sm:$0xff]
    %v140 = vld [vmem:[#allocation5 + $0xa8] sm:$0xff]
    %v141 = vld [vmem:[#allocation5 + $0xb0] sm:$0xff]
    %v142 = vld [vmem:[#allocation5 + $0xb8] sm:$0xff]
    %v143 = vld [vmem:[#allocation5 + $0xc0] sm:$0xff]
    %v144 = vld [vmem:[#allocation5 + $0xc8] sm:$0xff]
    %v145 = vld [vmem:[#allocation5 + $0xd0] sm:$0xff]
    %v146 = vld [vmem:[#allocation5 + $0xd8] sm:$0xff]
    %v147 = vld [vmem:[#allocation5 + $0xe0] sm:$0xff]
    %v148 = vld [vmem:[#allocation5 + $0xe8] sm:$0xff]
    %v149 = vld [vmem:[#allocation5 + $0xf0] sm:$0xff]
    %v150 = vld [vmem:[#allocation5 + $0xf8] sm:$0xff]
    %v151 = vld [vmem:[#allocation5 + $0x100] sm:$0xff]
    %v152 = vld [vmem:[#allocation5 + $0x108] sm:$0xff]
    %v153 = vld [vmem:[#allocation5 + $0x110] sm:$0xff]
    %v154 = vld [vmem:[#allocation5 + $0x118] sm:$0xff]
    %v155 = vld [vmem:[#allocation5 + $0x120] sm:$0xff]
    %v156 = vld [vmem:[#allocation5 + $0x128] sm:$0xff]
    %v157 = vld [vmem:[#allocation5 + $0x130] sm:$0xff]
    %v158 = vld [vmem:[#allocation5 + $0x138] sm:$0xff]
    %v159 = vld [vmem:[#allocation5 + $0x140] sm:$0xff]
    %v160 = vld [vmem:[#allocation5 + $0x148] sm:$0xff]
    %v161 = vld [vmem:[#allocation5 + $0x150] sm:$0xff]
    %v162 = vld [vmem:[#allocation5 + $0x158] sm:$0xff]
    %v163 = vld [vmem:[#allocation5 + $0x160] sm:$0xff]
    %v164 = vld [vmem:[#allocation5 + $0x168] sm:$0xff]
    %v165 = vld [vmem:[#allocation5 + $0x170] sm:$0xff]
    %v166 = vld [vmem:[#allocation5 + $0x178] sm:$0xff]
    %v167 = vld [vmem:[#allocation5 + $0x180] sm:$0xff]
    %v168 = vld [vmem:[#allocation5 + $0x188] sm:$0xff]
    %v169 = vld [vmem:[#allocation5 + $0x190] sm:$0xff]
    %v170 = vld [vmem:[#allocation5 + $0x198] sm:$0xff]
    %v171 = vld [vmem:[#allocation5 + $0x1a0] sm:$0xff]
    %v172 = vld [vmem:[#allocation5 + $0x1a8] sm:$0xff]
    %v173 = vld [vmem:[#allocation5 + $0x1b0] sm:$0xff]
    %v174 = vld [vmem:[#allocation5 + $0x1b8] sm:$0xff]
    %v175 = vld [vmem:[#allocation5 + $0x1c0] sm:$0xff]
    %v176 = vld [vmem:[#allocation5 + $0x1c8] sm:$0xff]
    %v177 = vld [vmem:[#allocation5 + $0x1d0] sm:$0xff]
    %v178 = vld [vmem:[#allocation5 + $0x1d8] sm:$0xff]
    %v179 = vld [vmem:[#allocation5 + $0x1e0] sm:$0xff]
    %v180 = vld [vmem:[#allocation5 + $0x1e8] sm:$0xff]
    %v181 = vld [vmem:[#allocation5 + $0x1f0] sm:$0xff]
    %v182 = vld [vmem:[#allocation5 + $0x1f8] sm:$0xff]
    %v184 = vperm.slane %v114, 0
    %v185 = vperm.slane %v114, 1
    %v186 = vperm.slane %v114, 2
    %v187 = vperm.slane %v114, 3
    %v188 = vperm.slane %v114, 4
    %v189 = vperm.slane %v114, 5
    %v190 = vperm.slane %v114, 6
    %v191 = vperm.slane %v114, 7
    %v264 = vunpack.c.l.b16 %v119
    %v265 = vunpack.c.h.b16 %v119
    %v266 = vunpack.c.l.b16 %v120
    %v267 = vunpack.c.h.b16 %v120
    %v268 = vunpack.c.l.b16 %v121
    %v269 = vunpack.c.h.b16 %v121
    %v270 = vunpack.c.l.b16 %v122
    %v271 = vunpack.c.h.b16 %v122
    %v272 = vunpack.c.l.b16 %v123
    %v273 = vunpack.c.h.b16 %v123
    %v274 = vunpack.c.l.b16 %v124
    %v275 = vunpack.c.h.b16 %v124
    %v276 = vunpack.c.l.b16 %v125
    %v277 = vunpack.c.h.b16 %v125
    %v278 = vunpack.c.l.b16 %v126
    %v279 = vunpack.c.h.b16 %v126
    %v280 = vunpack.c.l.b16 %v127
    %v281 = vunpack.c.h.b16 %v127
    %v282 = vunpack.c.l.b16 %v128
    %v283 = vunpack.c.h.b16 %v128
    %v284 = vunpack.c.l.b16 %v129
    %v285 = vunpack.c.h.b16 %v129
    %v286 = vunpack.c.l.b16 %v130
    %v287 = vunpack.c.h.b16 %v130
    %v288 = vunpack.c.l.b16 %v131
    %v289 = vunpack.c.h.b16 %v131
    %v290 = vunpack.c.l.b16 %v132
    %v291 = vunpack.c.h.b16 %v132
    %v292 = vunpack.c.l.b16 %v133
    %v293 = vunpack.c.h.b16 %v133
    %v294 = vunpack.c.l.b16 %v134
    %v295 = vunpack.c.h.b16 %v134
    %v296 = vunpack.c.l.b16 %v135
    %v297 = vunpack.c.h.b16 %v135
    %v298 = vunpack.c.l.b16 %v136
    %v299 = vunpack.c.h.b16 %v136
    %v300 = vunpack.c.l.b16 %v137
    %v301 = vunpack.c.h.b16 %v137
    %v302 = vunpack.c.l.b16 %v138
    %v303 = vunpack.c.h.b16 %v138
    %v304 = vunpack.c.l.b16 %v139
    %v305 = vunpack.c.h.b16 %v139
    %v306 = vunpack.c.l.b16 %v140
    %v307 = vunpack.c.h.b16 %v140
    %v308 = vunpack.c.l.b16 %v141
    %v309 = vunpack.c.h.b16 %v141
    %v310 = vunpack.c.l.b16 %v142
    %v311 = vunpack.c.h.b16 %v142
    %v312 = vunpack.c.l.b16 %v143
    %v313 = vunpack.c.h.b16 %v143
    %v314 = vunpack.c.l.b16 %v144
    %v315 = vunpack.c.h.b16 %v144
    %v316 = vunpack.c.l.b16 %v145
    %v317 = vunpack.c.h.b16 %v145
    %v318 = vunpack.c.l.b16 %v146
    %v319 = vunpack.c.h.b16 %v146
    %v320 = vunpack.c.l.b16 %v147
    %v321 = vunpack.c.h.b16 %v147
    %v322 = vunpack.c.l.b16 %v148
    %v323 = vunpack.c.h.b16 %v148
    %v324 = vunpack.c.l.b16 %v149
    %v325 = vunpack.c.h.b16 %v149
    %v326 = vunpack.c.l.b16 %v150
    %v327 = vunpack.c.h.b16 %v150
    %v328 = vunpack.c.l.b16 %v151
    %v329 = vunpack.c.h.b16 %v151
    %v330 = vunpack.c.l.b16 %v152
    %v331 = vunpack.c.h.b16 %v152
    %v332 = vunpack.c.l.b16 %v153
    %v333 = vunpack.c.h.b16 %v153
    %v334 = vunpack.c.l.b16 %v154
    %v335 = vunpack.c.h.b16 %v154
    %v336 = vunpack.c.l.b16 %v155
    %v337 = vunpack.c.h.b16 %v155
    %v338 = vunpack.c.l.b16 %v156
    %v339 = vunpack.c.h.b16 %v156
    %v340 = vunpack.c.l.b16 %v157
    %v341 = vunpack.c.h.b16 %v157
    %v342 = vunpack.c.l.b16 %v158
    %v343 = vunpack.c.h.b16 %v158
    %v344 = vunpack.c.l.b16 %v159
    %v345 = vunpack.c.h.b16 %v159
    %v346 = vunpack.c.l.b16 %v160
    %v347 = vunpack.c.h.b16 %v160
    %v348 = vunpack.c.l.b16 %v161
    %v349 = vunpack.c.h.b16 %v161
    %v350 = vunpack.c.l.b16 %v162
    %v351 = vunpack.c.h.b16 %v162
    %v352 = vunpack.c.l.b16 %v163
    %v353 = vunpack.c.h.b16 %v163
    %v354 = vunpack.c.l.b16 %v164
    %v355 = vunpack.c.h.b16 %v164
    %v356 = vunpack.c.l.b16 %v165
    %v357 = vunpack.c.h.b16 %v165
    %v358 = vunpack.c.l.b16 %v166
    %v359 = vunpack.c.h.b16 %v166
    %v360 = vunpack.c.l.b16 %v167
    %v361 = vunpack.c.h.b16 %v167
    %v362 = vunpack.c.l.b16 %v168
    %v363 = vunpack.c.h.b16 %v168
    %v364 = vunpack.c.l.b16 %v169
    %v365 = vunpack.c.h.b16 %v169
    %v366 = vunpack.c.l.b16 %v170
    %v367 = vunpack.c.h.b16 %v170
    %v368 = vunpack.c.l.b16 %v171
    %v369 = vunpack.c.h.b16 %v171
    %v370 = vunpack.c.l.b16 %v172
    %v371 = vunpack.c.h.b16 %v172
    %v372 = vunpack.c.l.b16 %v173
    %v373 = vunpack.c.h.b16 %v173
    %v374 = vunpack.c.l.b16 %v174
    %v375 = vunpack.c.h.b16 %v174
    %v376 = vunpack.c.l.b16 %v175
    %v377 = vunpack.c.h.b16 %v175
    %v378 = vunpack.c.l.b16 %v176
    %v379 = vunpack.c.h.b16 %v176
    %v380 = vunpack.c.l.b16 %v177
    %v381 = vunpack.c.h.b16 %v177
    %v382 = vunpack.c.l.b16 %v178
    %v383 = vunpack.c.h.b16 %v178
    %v384 = vunpack.c.l.b16 %v179
    %v385 = vunpack.c.h.b16 %v179
    %v386 = vunpack.c.l.b16 %v180
    %v387 = vunpack.c.h.b16 %v180
    %v388 = vunpack.c.l.b16 %v181
    %v389 = vunpack.c.h.b16 %v181
    %v390 = vunpack.c.l.b16 %v182
    %v391 = vunpack.c.h.b16 %v182
    %v392 = vpack.c.b16 %v272, %v264
    %v393 = vpack.c.b16 %v273, %v265
    %v394 = vpack.c.b16 %v274, %v266
    %v395 = vpack.c.b16 %v275, %v267
    %v396 = vpack.c.b16 %v276, %v268
    %v397 = vpack.c.b16 %v277, %v269
    %v398 = vpack.c.b16 %v278, %v270
    %v399 = vpack.c.b16 %v279, %v271
    %v400 = vpack.c.b16 %v288, %v280
    %v401 = vpack.c.b16 %v289, %v281
    %v402 = vpack.c.b16 %v290, %v282
    %v403 = vpack.c.b16 %v291, %v283
    %v404 = vpack.c.b16 %v292, %v284
    %v405 = vpack.c.b16 %v293, %v285
    %v406 = vpack.c.b16 %v294, %v286
    %v407 = vpack.c.b16 %v295, %v287
    %v408 = vpack.c.b16 %v304, %v296
    %v409 = vpack.c.b16 %v305, %v297
    %v410 = vpack.c.b16 %v306, %v298
    %v411 = vpack.c.b16 %v307, %v299
    %v412 = vpack.c.b16 %v308, %v300
    %v413 = vpack.c.b16 %v309, %v301
    %v414 = vpack.c.b16 %v310, %v302
    %v415 = vpack.c.b16 %v311, %v303
    %v416 = vpack.c.b16 %v320, %v312
    %v417 = vpack.c.b16 %v321, %v313
    %v418 = vpack.c.b16 %v322, %v314
    %v419 = vpack.c.b16 %v323, %v315
    %v420 = vpack.c.b16 %v324, %v316
    %v421 = vpack.c.b16 %v325, %v317
    %v422 = vpack.c.b16 %v326, %v318
    %v423 = vpack.c.b16 %v327, %v319
    %v424 = vpack.c.b16 %v336, %v328
    %v425 = vpack.c.b16 %v337, %v329
    %v426 = vpack.c.b16 %v338, %v330
    %v427 = vpack.c.b16 %v339, %v331
    %v428 = vpack.c.b16 %v340, %v332
    %v429 = vpack.c.b16 %v341, %v333
    %v430 = vpack.c.b16 %v342, %v334
    %v431 = vpack.c.b16 %v343, %v335
    %v432 = vpack.c.b16 %v352, %v344
    %v433 = vpack.c.b16 %v353, %v345
    %v434 = vpack.c.b16 %v354, %v346
    %v435 = vpack.c.b16 %v355, %v347
    %v436 = vpack.c.b16 %v356, %v348
    %v437 = vpack.c.b16 %v357, %v349
    %v438 = vpack.c.b16 %v358, %v350
    %v439 = vpack.c.b16 %v359, %v351
    %v440 = vpack.c.b16 %v368, %v360
    %v441 = vpack.c.b16 %v369, %v361
    %v442 = vpack.c.b16 %v370, %v362
    %v443 = vpack.c.b16 %v371, %v363
    %v444 = vpack.c.b16 %v372, %v364
    %v445 = vpack.c.b16 %v373, %v365
    %v446 = vpack.c.b16 %v374, %v366
    %v447 = vpack.c.b16 %v375, %v367
    %v448 = vpack.c.b16 %v384, %v376
    %v449 = vpack.c.b16 %v385, %v377
    %v450 = vpack.c.b16 %v386, %v378
    %v451 = vpack.c.b16 %v387, %v379
    %v452 = vpack.c.b16 %v388, %v380
    %v453 = vpack.c.b16 %v389, %v381
    %v454 = vpack.c.b16 %v390, %v382
    %v455 = vpack.c.b16 %v391, %v383
    %520 = vmatpush.bf16.msra.mxu0 %v448
    %521 = vmatpush.bf16.msra.mxu0 %v440
    %522 = vmatpush.bf16.msra.mxu0 %v432
    %523 = vmatpush.bf16.msra.mxu0 %v424
    %524 = vmatpush.bf16.msra.mxu0 %v416
    %525 = vmatpush.bf16.msra.mxu0 %v408
    %526 = vmatpush.bf16.msra.mxu0 %v400
    %527 = vmatpush.bf16.msra.mxu0 %v392
    %528 = vmatmul.bf16.gmra.mxu0 %v118
    %v529 = vpop.f32.mrf.mxu0
    %v530 = vadd.f32 %v184, %v529
    %v531 = vpop.f32.mrf.mxu0
    %532 = vdwg.mxu0
    %533 = vmatpush.bf16.msra.mxu0 %v449
    %534 = vmatpush.bf16.msra.mxu0 %v441
    %535 = vmatpush.bf16.msra.mxu0 %v433
    %536 = vmatpush.bf16.msra.mxu0 %v425
    %537 = vmatpush.bf16.msra.mxu0 %v417
    %538 = vmatpush.bf16.msra.mxu0 %v409
    %539 = vmatpush.bf16.msra.mxu0 %v401
    %540 = vmatpush.bf16.msra.mxu0 %v393
    %541 = vmatmul.bf16.gmra.mxu0 %v118
    %v542 = vpop.f32.mrf.mxu0
    %v543 = vadd.f32 %v185, %v542
    %v544 = vpop.f32.mrf.mxu0
    %545 = vdwg.mxu0
    %546 = vmatpush.bf16.msra.mxu0 %v450
    %547 = vmatpush.bf16.msra.mxu0 %v442
    %548 = vmatpush.bf16.msra.mxu0 %v434
    %549 = vmatpush.bf16.msra.mxu0 %v426
    %550 = vmatpush.bf16.msra.mxu0 %v418
    %551 = vmatpush.bf16.msra.mxu0 %v410
    %552 = vmatpush.bf16.msra.mxu0 %v402
    %553 = vmatpush.bf16.msra.mxu0 %v394
    %554 = vmatmul.bf16.gmra.mxu0 %v118
    %v555 = vpop.f32.mrf.mxu0
    %v556 = vadd.f32 %v186, %v555
    %v557 = vpop.f32.mrf.mxu0
    %558 = vdwg.mxu0
    %559 = vmatpush.bf16.msra.mxu0 %v451
    %560 = vmatpush.bf16.msra.mxu0 %v443
    %561 = vmatpush.bf16.msra.mxu0 %v435
    %562 = vmatpush.bf16.msra.mxu0 %v427
    %563 = vmatpush.bf16.msra.mxu0 %v419
    %564 = vmatpush.bf16.msra.mxu0 %v411
    %565 = vmatpush.bf16.msra.mxu0 %v403
    %566 = vmatpush.bf16.msra.mxu0 %v395
    %567 = vmatmul.bf16.gmra.mxu0 %v118
    %v568 = vpop.f32.mrf.mxu0
    %v569 = vadd.f32 %v187, %v568
    %v570 = vpop.f32.mrf.mxu0
    %571 = vdwg.mxu0
    %572 = vmatpush.bf16.msra.mxu0 %v452
    %573 = vmatpush.bf16.msra.mxu0 %v444
    %574 = vmatpush.bf16.msra.mxu0 %v436
    %575 = vmatpush.bf16.msra.mxu0 %v428
    %576 = vmatpush.bf16.msra.mxu0 %v420
    %577 = vmatpush.bf16.msra.mxu0 %v412
    %578 = vmatpush.bf16.msra.mxu0 %v404
    %579 = vmatpush.bf16.msra.mxu0 %v396
    %580 = vmatmul.bf16.gmra.mxu0 %v118
    %v581 = vpop.f32.mrf.mxu0
    %v582 = vadd.f32 %v188, %v581
    %v583 = vpop.f32.mrf.mxu0
    %584 = vdwg.mxu0
    %585 = vmatpush.bf16.msra.mxu0 %v453
    %586 = vmatpush.bf16.msra.mxu0 %v445
    %587 = vmatpush.bf16.msra.mxu0 %v437
    %588 = vmatpush.bf16.msra.mxu0 %v429
    %589 = vmatpush.bf16.msra.mxu0 %v421
    %590 = vmatpush.bf16.msra.mxu0 %v413
    %591 = vmatpush.bf16.msra.mxu0 %v405
    %592 = vmatpush.bf16.msra.mxu0 %v397
    %593 = vmatmul.bf16.gmra.mxu0 %v118
    %v594 = vpop.f32.mrf.mxu0
    %v595 = vadd.f32 %v189, %v594
    %v596 = vpop.f32.mrf.mxu0
    %597 = vdwg.mxu0
    %598 = vmatpush.bf16.msra.mxu0 %v454
    %599 = vmatpush.bf16.msra.mxu0 %v446
    %600 = vmatpush.bf16.msra.mxu0 %v438
    %601 = vmatpush.bf16.msra.mxu0 %v430
    %602 = vmatpush.bf16.msra.mxu0 %v422
    %603 = vmatpush.bf16.msra.mxu0 %v414
    %604 = vmatpush.bf16.msra.mxu0 %v406
    %605 = vmatpush.bf16.msra.mxu0 %v398
    %606 = vmatmul.bf16.gmra.mxu0 %v118
    %v607 = vpop.f32.mrf.mxu0
    %v608 = vadd.f32 %v190, %v607
    %v609 = vpop.f32.mrf.mxu0
    %610 = vdwg.mxu0
    %611 = vmatpush.bf16.msra.mxu0 %v455
    %612 = vmatpush.bf16.msra.mxu0 %v447
    %613 = vmatpush.bf16.msra.mxu0 %v439
    %614 = vmatpush.bf16.msra.mxu0 %v431
    %615 = vmatpush.bf16.msra.mxu0 %v423
    %616 = vmatpush.bf16.msra.mxu0 %v415
    %617 = vmatpush.bf16.msra.mxu0 %v407
    %618 = vmatpush.bf16.msra.mxu0 %v399
    %619 = vmatmul.bf16.gmra.mxu0 %v118
    %v620 = vpop.f32.mrf.mxu0
    %v621 = vadd.f32 %v191, %v620
    %v622 = vpop.f32.mrf.mxu0
    %623 = vdwg.mxu0
    %vm624 = vcmp.gt.f32.partialorder %v530, 0.0
    %vm625 = vcmp.gt.f32.partialorder %v543, 0.0
    %vm626 = vcmp.gt.f32.partialorder %v556, 0.0
    %vm627 = vcmp.gt.f32.partialorder %v569, 0.0
    %vm628 = vcmp.gt.f32.partialorder %v582, 0.0
    %vm629 = vcmp.gt.f32.partialorder %v595, 0.0
    %vm630 = vcmp.gt.f32.partialorder %v608, 0.0
    %vm631 = vcmp.gt.f32.partialorder %v621, 0.0
    %v632 = vmul.f32 %v530, 0.2
    %v633 = vmul.f32 %v543, 0.2
    %v634 = vmul.f32 %v556, 0.2
    %v635 = vmul.f32 %v569, 0.2
    %v636 = vmul.f32 %v582, 0.2
    %v637 = vmul.f32 %v595, 0.2
    %v638 = vmul.f32 %v608, 0.2
    %v639 = vmul.f32 %v621, 0.2
    %v640 = vsel %vm624, %v530, %v632
    %v641 = vsel %vm625, %v543, %v633
    %v642 = vsel %vm626, %v556, %v634
    %v643 = vsel %vm627, %v569, %v635
    %v644 = vsel %vm628, %v582, %v636
    %v645 = vsel %vm629, %v595, %v637
    %v646 = vsel %vm630, %v608, %v638
    %v647 = vsel %vm631, %v621, %v639
    %v648 = vpack.c.bf16 %v640, %v640
    %v649 = vpack.c.bf16 %v641, %v641
    %v650 = vpack.c.bf16 %v642, %v642
    %v651 = vpack.c.bf16 %v643, %v643
    %v652 = vpack.c.bf16 %v644, %v644
    %v653 = vpack.c.bf16 %v645, %v645
    %v654 = vpack.c.bf16 %v646, %v646
    %v655 = vpack.c.bf16 %v647, %v647
    %v656 = vld [vmem:[#allocation7] sm:$0xff]
    %v657 = vld [vmem:[#allocation7 + $0x8] sm:$0xff]
    %v658 = vld [vmem:[#allocation7 + $0x10] sm:$0xff]
    %v659 = vld [vmem:[#allocation7 + $0x18] sm:$0xff]
    %v660 = vld [vmem:[#allocation7 + $0x20] sm:$0xff]
    %v661 = vld [vmem:[#allocation7 + $0x28] sm:$0xff]
    %v662 = vld [vmem:[#allocation7 + $0x30] sm:$0xff]
    %v663 = vld [vmem:[#allocation7 + $0x38] sm:$0xff]
    %v664 = vld [vmem:[#allocation7 + $0x40] sm:$0xff]
    %v665 = vld [vmem:[#allocation7 + $0x48] sm:$0xff]
    %v666 = vld [vmem:[#allocation7 + $0x50] sm:$0xff]
    %v667 = vld [vmem:[#allocation7 + $0x58] sm:$0xff]
    %v668 = vld [vmem:[#allocation7 + $0x60] sm:$0xff]
    %v669 = vld [vmem:[#allocation7 + $0x68] sm:$0xff]
    %v670 = vld [vmem:[#allocation7 + $0x70] sm:$0xff]
    %v671 = vld [vmem:[#allocation7 + $0x78] sm:$0xff]
    %v672 = vld [vmem:[#allocation7 + $0x80] sm:$0xff]
    %v673 = vld [vmem:[#allocation7 + $0x88] sm:$0xff]
    %v674 = vld [vmem:[#allocation7 + $0x90] sm:$0xff]
    %v675 = vld [vmem:[#allocation7 + $0x98] sm:$0xff]
    %v676 = vld [vmem:[#allocation7 + $0xa0] sm:$0xff]
    %v677 = vld [vmem:[#allocation7 + $0xa8] sm:$0xff]
    %v678 = vld [vmem:[#allocation7 + $0xb0] sm:$0xff]
    %v679 = vld [vmem:[#allocation7 + $0xb8] sm:$0xff]
    %v680 = vld [vmem:[#allocation7 + $0xc0] sm:$0xff]
    %v681 = vld [vmem:[#allocation7 + $0xc8] sm:$0xff]
    %v682 = vld [vmem:[#allocation7 + $0xd0] sm:$0xff]
    %v683 = vld [vmem:[#allocation7 + $0xd8] sm:$0xff]
    %v684 = vld [vmem:[#allocation7 + $0xe0] sm:$0xff]
    %v685 = vld [vmem:[#allocation7 + $0xe8] sm:$0xff]
    %v686 = vld [vmem:[#allocation7 + $0xf0] sm:$0xff]
    %v687 = vld [vmem:[#allocation7 + $0xf8] sm:$0xff]
    %v688 = vld [vmem:[#allocation7 + $0x100] sm:$0xff]
    %v689 = vld [vmem:[#allocation7 + $0x108] sm:$0xff]
    %v690 = vld [vmem:[#allocation7 + $0x110] sm:$0xff]
    %v691 = vld [vmem:[#allocation7 + $0x118] sm:$0xff]
    %v692 = vld [vmem:[#allocation7 + $0x120] sm:$0xff]
    %v693 = vld [vmem:[#allocation7 + $0x128] sm:$0xff]
    %v694 = vld [vmem:[#allocation7 + $0x130] sm:$0xff]
    %v695 = vld [vmem:[#allocation7 + $0x138] sm:$0xff]
    %v696 = vld [vmem:[#allocation7 + $0x140] sm:$0xff]
    %v697 = vld [vmem:[#allocation7 + $0x148] sm:$0xff]
    %v698 = vld [vmem:[#allocation7 + $0x150] sm:$0xff]
    %v699 = vld [vmem:[#allocation7 + $0x158] sm:$0xff]
    %v700 = vld [vmem:[#allocation7 + $0x160] sm:$0xff]
    %v701 = vld [vmem:[#allocation7 + $0x168] sm:$0xff]
    %v702 = vld [vmem:[#allocation7 + $0x170] sm:$0xff]
    %v703 = vld [vmem:[#allocation7 + $0x178] sm:$0xff]
    %v704 = vld [vmem:[#allocation7 + $0x180] sm:$0xff]
    %v705 = vld [vmem:[#allocation7 + $0x188] sm:$0xff]
    %v706 = vld [vmem:[#allocation7 + $0x190] sm:$0xff]
    %v707 = vld [vmem:[#allocation7 + $0x198] sm:$0xff]
    %v708 = vld [vmem:[#allocation7 + $0x1a0] sm:$0xff]
    %v709 = vld [vmem:[#allocation7 + $0x1a8] sm:$0xff]
    %v710 = vld [vmem:[#allocation7 + $0x1b0] sm:$0xff]
    %v711 = vld [vmem:[#allocation7 + $0x1b8] sm:$0xff]
    %v712 = vld [vmem:[#allocation7 + $0x1c0] sm:$0xff]
    %v713 = vld [vmem:[#allocation7 + $0x1c8] sm:$0xff]
    %v714 = vld [vmem:[#allocation7 + $0x1d0] sm:$0xff]
    %v715 = vld [vmem:[#allocation7 + $0x1d8] sm:$0xff]
    %v716 = vld [vmem:[#allocation7 + $0x1e0] sm:$0xff]
    %v717 = vld [vmem:[#allocation7 + $0x1e8] sm:$0xff]
    %v718 = vld [vmem:[#allocation7 + $0x1f0] sm:$0xff]
    %v719 = vld [vmem:[#allocation7 + $0x1f8] sm:$0xff]
    %v720 = vld [vmem:[#allocation7 + $0x200] sm:$0xff]
    %v721 = vld [vmem:[#allocation7 + $0x208] sm:$0xff]
    %v722 = vld [vmem:[#allocation7 + $0x210] sm:$0xff]
    %v723 = vld [vmem:[#allocation7 + $0x218] sm:$0xff]
    %v724 = vld [vmem:[#allocation7 + $0x220] sm:$0xff]
    %v725 = vld [vmem:[#allocation7 + $0x228] sm:$0xff]
    %v726 = vld [vmem:[#allocation7 + $0x230] sm:$0xff]
    %v727 = vld [vmem:[#allocation7 + $0x238] sm:$0xff]
    %v728 = vld [vmem:[#allocation7 + $0x240] sm:$0xff]
    %v729 = vld [vmem:[#allocation7 + $0x248] sm:$0xff]
    %v730 = vld [vmem:[#allocation7 + $0x250] sm:$0xff]
    %v731 = vld [vmem:[#allocation7 + $0x258] sm:$0xff]
    %v732 = vld [vmem:[#allocation7 + $0x260] sm:$0xff]
    %v733 = vld [vmem:[#allocation7 + $0x268] sm:$0xff]
    %v734 = vld [vmem:[#allocation7 + $0x270] sm:$0xff]
    %v735 = vld [vmem:[#allocation7 + $0x278] sm:$0xff]
    %v736 = vld [vmem:[#allocation7 + $0x280] sm:$0xff]
    %v737 = vld [vmem:[#allocation7 + $0x288] sm:$0xff]
    %v738 = vld [vmem:[#allocation7 + $0x290] sm:$0xff]
    %v739 = vld [vmem:[#allocation7 + $0x298] sm:$0xff]
    %v740 = vld [vmem:[#allocation7 + $0x2a0] sm:$0xff]
    %v741 = vld [vmem:[#allocation7 + $0x2a8] sm:$0xff]
    %v742 = vld [vmem:[#allocation7 + $0x2b0] sm:$0xff]
    %v743 = vld [vmem:[#allocation7 + $0x2b8] sm:$0xff]
    %v744 = vld [vmem:[#allocation7 + $0x2c0] sm:$0xff]
    %v745 = vld [vmem:[#allocation7 + $0x2c8] sm:$0xff]
    %v746 = vld [vmem:[#allocation7 + $0x2d0] sm:$0xff]
    %v747 = vld [vmem:[#allocation7 + $0x2d8] sm:$0xff]
    %v748 = vld [vmem:[#allocation7 + $0x2e0] sm:$0xff]
    %v749 = vld [vmem:[#allocation7 + $0x2e8] sm:$0xff]
    %v750 = vld [vmem:[#allocation7 + $0x2f0] sm:$0xff]
    %v751 = vld [vmem:[#allocation7 + $0x2f8] sm:$0xff]
    %v752 = vld [vmem:[#allocation7 + $0x300] sm:$0xff]
    %v753 = vld [vmem:[#allocation7 + $0x308] sm:$0xff]
    %v754 = vld [vmem:[#allocation7 + $0x310] sm:$0xff]
    %v755 = vld [vmem:[#allocation7 + $0x318] sm:$0xff]
    %v756 = vld [vmem:[#allocation7 + $0x320] sm:$0xff]
    %v757 = vld [vmem:[#allocation7 + $0x328] sm:$0xff]
    %v758 = vld [vmem:[#allocation7 + $0x330] sm:$0xff]
    %v759 = vld [vmem:[#allocation7 + $0x338] sm:$0xff]
    %v760 = vld [vmem:[#allocation7 + $0x340] sm:$0xff]
    %v761 = vld [vmem:[#allocation7 + $0x348] sm:$0xff]
    %v762 = vld [vmem:[#allocation7 + $0x350] sm:$0xff]
    %v763 = vld [vmem:[#allocation7 + $0x358] sm:$0xff]
    %v764 = vld [vmem:[#allocation7 + $0x360] sm:$0xff]
    %v765 = vld [vmem:[#allocation7 + $0x368] sm:$0xff]
    %v766 = vld [vmem:[#allocation7 + $0x370] sm:$0xff]
    %v767 = vld [vmem:[#allocation7 + $0x378] sm:$0xff]
    %v768 = vld [vmem:[#allocation7 + $0x380] sm:$0xff]
    %v769 = vld [vmem:[#allocation7 + $0x388] sm:$0xff]
    %v770 = vld [vmem:[#allocation7 + $0x390] sm:$0xff]
    %v771 = vld [vmem:[#allocation7 + $0x398] sm:$0xff]
    %v772 = vld [vmem:[#allocation7 + $0x3a0] sm:$0xff]
    %v773 = vld [vmem:[#allocation7 + $0x3a8] sm:$0xff]
    %v774 = vld [vmem:[#allocation7 + $0x3b0] sm:$0xff]
    %v775 = vld [vmem:[#allocation7 + $0x3b8] sm:$0xff]
    %v776 = vld [vmem:[#allocation7 + $0x3c0] sm:$0xff]
    %v777 = vld [vmem:[#allocation7 + $0x3c8] sm:$0xff]
    %v778 = vld [vmem:[#allocation7 + $0x3d0] sm:$0xff]
    %v779 = vld [vmem:[#allocation7 + $0x3d8] sm:$0xff]
    %v780 = vld [vmem:[#allocation7 + $0x3e0] sm:$0xff]
    %v781 = vld [vmem:[#allocation7 + $0x3e8] sm:$0xff]
    %v782 = vld [vmem:[#allocation7 + $0x3f0] sm:$0xff]
    %v783 = vld [vmem:[#allocation7 + $0x3f8] sm:$0xff]
    %v784 = vld [vmem:[#allocation7 + $0x400] sm:$0xff]
    %v785 = vld [vmem:[#allocation7 + $0x408] sm:$0xff]
    %v786 = vld [vmem:[#allocation7 + $0x410] sm:$0xff]
    %v787 = vld [vmem:[#allocation7 + $0x418] sm:$0xff]
    %v788 = vld [vmem:[#allocation7 + $0x420] sm:$0xff]
    %v789 = vld [vmem:[#allocation7 + $0x428] sm:$0xff]
    %v790 = vld [vmem:[#allocation7 + $0x430] sm:$0xff]
    %v791 = vld [vmem:[#allocation7 + $0x438] sm:$0xff]
    %v792 = vld [vmem:[#allocation7 + $0x440] sm:$0xff]
    %v793 = vld [vmem:[#allocation7 + $0x448] sm:$0xff]
    %v794 = vld [vmem:[#allocation7 + $0x450] sm:$0xff]
    %v795 = vld [vmem:[#allocation7 + $0x458] sm:$0xff]
    %v796 = vld [vmem:[#allocation7 + $0x460] sm:$0xff]
    %v797 = vld [vmem:[#allocation7 + $0x468] sm:$0xff]
    %v798 = vld [vmem:[#allocation7 + $0x470] sm:$0xff]
    %v799 = vld [vmem:[#allocation7 + $0x478] sm:$0xff]
    %v800 = vld [vmem:[#allocation7 + $0x480] sm:$0xff]
    %v801 = vld [vmem:[#allocation7 + $0x488] sm:$0xff]
    %v802 = vld [vmem:[#allocation7 + $0x490] sm:$0xff]
    %v803 = vld [vmem:[#allocation7 + $0x498] sm:$0xff]
    %v804 = vld [vmem:[#allocation7 + $0x4a0] sm:$0xff]
    %v805 = vld [vmem:[#allocation7 + $0x4a8] sm:$0xff]
    %v806 = vld [vmem:[#allocation7 + $0x4b0] sm:$0xff]
    %v807 = vld [vmem:[#allocation7 + $0x4b8] sm:$0xff]
    %v808 = vld [vmem:[#allocation7 + $0x4c0] sm:$0xff]
    %v809 = vld [vmem:[#allocation7 + $0x4c8] sm:$0xff]
    %v810 = vld [vmem:[#allocation7 + $0x4d0] sm:$0xff]
    %v811 = vld [vmem:[#allocation7 + $0x4d8] sm:$0xff]
    %v812 = vld [vmem:[#allocation7 + $0x4e0] sm:$0xff]
    %v813 = vld [vmem:[#allocation7 + $0x4e8] sm:$0xff]
    %v814 = vld [vmem:[#allocation7 + $0x4f0] sm:$0xff]
    %v815 = vld [vmem:[#allocation7 + $0x4f8] sm:$0xff]
    %v816 = vld [vmem:[#allocation7 + $0x500] sm:$0xff]
    %v817 = vld [vmem:[#allocation7 + $0x508] sm:$0xff]
    %v818 = vld [vmem:[#allocation7 + $0x510] sm:$0xff]
    %v819 = vld [vmem:[#allocation7 + $0x518] sm:$0xff]
    %v820 = vld [vmem:[#allocation7 + $0x520] sm:$0xff]
    %v821 = vld [vmem:[#allocation7 + $0x528] sm:$0xff]
    %v822 = vld [vmem:[#allocation7 + $0x530] sm:$0xff]
    %v823 = vld [vmem:[#allocation7 + $0x538] sm:$0xff]
    %v824 = vld [vmem:[#allocation7 + $0x540] sm:$0xff]
    %v825 = vld [vmem:[#allocation7 + $0x548] sm:$0xff]
    %v826 = vld [vmem:[#allocation7 + $0x550] sm:$0xff]
    %v827 = vld [vmem:[#allocation7 + $0x558] sm:$0xff]
    %v828 = vld [vmem:[#allocation7 + $0x560] sm:$0xff]
    %v829 = vld [vmem:[#allocation7 + $0x568] sm:$0xff]
    %v830 = vld [vmem:[#allocation7 + $0x570] sm:$0xff]
    %v831 = vld [vmem:[#allocation7 + $0x578] sm:$0xff]
    %v832 = vld [vmem:[#allocation7 + $0x580] sm:$0xff]
    %v833 = vld [vmem:[#allocation7 + $0x588] sm:$0xff]
    %v834 = vld [vmem:[#allocation7 + $0x590] sm:$0xff]
    %v835 = vld [vmem:[#allocation7 + $0x598] sm:$0xff]
    %v836 = vld [vmem:[#allocation7 + $0x5a0] sm:$0xff]
    %v837 = vld [vmem:[#allocation7 + $0x5a8] sm:$0xff]
    %v838 = vld [vmem:[#allocation7 + $0x5b0] sm:$0xff]
    %v839 = vld [vmem:[#allocation7 + $0x5b8] sm:$0xff]
    %v840 = vld [vmem:[#allocation7 + $0x5c0] sm:$0xff]
    %v841 = vld [vmem:[#allocation7 + $0x5c8] sm:$0xff]
    %v842 = vld [vmem:[#allocation7 + $0x5d0] sm:$0xff]
    %v843 = vld [vmem:[#allocation7 + $0x5d8] sm:$0xff]
    %v844 = vld [vmem:[#allocation7 + $0x5e0] sm:$0xff]
    %v845 = vld [vmem:[#allocation7 + $0x5e8] sm:$0xff]
    %v846 = vld [vmem:[#allocation7 + $0x5f0] sm:$0xff]
    %v847 = vld [vmem:[#allocation7 + $0x5f8] sm:$0xff]
    %v848 = vld [vmem:[#allocation7 + $0x600] sm:$0xff]
    %v849 = vld [vmem:[#allocation7 + $0x608] sm:$0xff]
    %v850 = vld [vmem:[#allocation7 + $0x610] sm:$0xff]
    %v851 = vld [vmem:[#allocation7 + $0x618] sm:$0xff]
    %v852 = vld [vmem:[#allocation7 + $0x620] sm:$0xff]
    %v853 = vld [vmem:[#allocation7 + $0x628] sm:$0xff]
    %v854 = vld [vmem:[#allocation7 + $0x630] sm:$0xff]
    %v855 = vld [vmem:[#allocation7 + $0x638] sm:$0xff]
    %v856 = vld [vmem:[#allocation7 + $0x640] sm:$0xff]
    %v857 = vld [vmem:[#allocation7 + $0x648] sm:$0xff]
    %v858 = vld [vmem:[#allocation7 + $0x650] sm:$0xff]
    %v859 = vld [vmem:[#allocation7 + $0x658] sm:$0xff]
    %v860 = vld [vmem:[#allocation7 + $0x660] sm:$0xff]
    %v861 = vld [vmem:[#allocation7 + $0x668] sm:$0xff]
    %v862 = vld [vmem:[#allocation7 + $0x670] sm:$0xff]
    %v863 = vld [vmem:[#allocation7 + $0x678] sm:$0xff]
    %v864 = vld [vmem:[#allocation7 + $0x680] sm:$0xff]
    %v865 = vld [vmem:[#allocation7 + $0x688] sm:$0xff]
    %v866 = vld [vmem:[#allocation7 + $0x690] sm:$0xff]
    %v867 = vld [vmem:[#allocation7 + $0x698] sm:$0xff]
    %v868 = vld [vmem:[#allocation7 + $0x6a0] sm:$0xff]
    %v869 = vld [vmem:[#allocation7 + $0x6a8] sm:$0xff]
    %v870 = vld [vmem:[#allocation7 + $0x6b0] sm:$0xff]
    %v871 = vld [vmem:[#allocation7 + $0x6b8] sm:$0xff]
    %v872 = vld [vmem:[#allocation7 + $0x6c0] sm:$0xff]
    %v873 = vld [vmem:[#allocation7 + $0x6c8] sm:$0xff]
    %v874 = vld [vmem:[#allocation7 + $0x6d0] sm:$0xff]
    %v875 = vld [vmem:[#allocation7 + $0x6d8] sm:$0xff]
    %v876 = vld [vmem:[#allocation7 + $0x6e0] sm:$0xff]
    %v877 = vld [vmem:[#allocation7 + $0x6e8] sm:$0xff]
    %v878 = vld [vmem:[#allocation7 + $0x6f0] sm:$0xff]
    %v879 = vld [vmem:[#allocation7 + $0x6f8] sm:$0xff]
    %v880 = vld [vmem:[#allocation7 + $0x700] sm:$0xff]
    %v881 = vld [vmem:[#allocation7 + $0x708] sm:$0xff]
    %v882 = vld [vmem:[#allocation7 + $0x710] sm:$0xff]
    %v883 = vld [vmem:[#allocation7 + $0x718] sm:$0xff]
    %v884 = vld [vmem:[#allocation7 + $0x720] sm:$0xff]
    %v885 = vld [vmem:[#allocation7 + $0x728] sm:$0xff]
    %v886 = vld [vmem:[#allocation7 + $0x730] sm:$0xff]
    %v887 = vld [vmem:[#allocation7 + $0x738] sm:$0xff]
    %v888 = vld [vmem:[#allocation7 + $0x740] sm:$0xff]
    %v889 = vld [vmem:[#allocation7 + $0x748] sm:$0xff]
    %v890 = vld [vmem:[#allocation7 + $0x750] sm:$0xff]
    %v891 = vld [vmem:[#allocation7 + $0x758] sm:$0xff]
    %v892 = vld [vmem:[#allocation7 + $0x760] sm:$0xff]
    %v893 = vld [vmem:[#allocation7 + $0x768] sm:$0xff]
    %v894 = vld [vmem:[#allocation7 + $0x770] sm:$0xff]
    %v895 = vld [vmem:[#allocation7 + $0x778] sm:$0xff]
    %v896 = vld [vmem:[#allocation7 + $0x780] sm:$0xff]
    %v897 = vld [vmem:[#allocation7 + $0x788] sm:$0xff]
    %v898 = vld [vmem:[#allocation7 + $0x790] sm:$0xff]
    %v899 = vld [vmem:[#allocation7 + $0x798] sm:$0xff]
    %v900 = vld [vmem:[#allocation7 + $0x7a0] sm:$0xff]
    %v901 = vld [vmem:[#allocation7 + $0x7a8] sm:$0xff]
    %v902 = vld [vmem:[#allocation7 + $0x7b0] sm:$0xff]
    %v903 = vld [vmem:[#allocation7 + $0x7b8] sm:$0xff]
    %v904 = vld [vmem:[#allocation7 + $0x7c0] sm:$0xff]
    %v905 = vld [vmem:[#allocation7 + $0x7c8] sm:$0xff]
    %v906 = vld [vmem:[#allocation7 + $0x7d0] sm:$0xff]
    %v907 = vld [vmem:[#allocation7 + $0x7d8] sm:$0xff]
    %v908 = vld [vmem:[#allocation7 + $0x7e0] sm:$0xff]
    %v909 = vld [vmem:[#allocation7 + $0x7e8] sm:$0xff]
    %v910 = vld [vmem:[#allocation7 + $0x7f0] sm:$0xff]
    %v911 = vld [vmem:[#allocation7 + $0x7f8] sm:$0xff]
    %v913 = vperm.slane %v115, 0
    %v914 = vperm.slane %v115, 1
    %v915 = vperm.slane %v115, 2
    %v916 = vperm.slane %v115, 3
    %v1177 = vunpack.c.l.b16 %v656
    %v1178 = vunpack.c.h.b16 %v656
    %v1179 = vunpack.c.l.b16 %v657
    %v1180 = vunpack.c.h.b16 %v657
    %v1181 = vunpack.c.l.b16 %v658
    %v1182 = vunpack.c.h.b16 %v658
    %v1183 = vunpack.c.l.b16 %v659
    %v1184 = vunpack.c.h.b16 %v659
    %v1185 = vunpack.c.l.b16 %v660
    %v1186 = vunpack.c.h.b16 %v660
    %v1187 = vunpack.c.l.b16 %v661
    %v1188 = vunpack.c.h.b16 %v661
    %v1189 = vunpack.c.l.b16 %v662
    %v1190 = vunpack.c.h.b16 %v662
    %v1191 = vunpack.c.l.b16 %v663
    %v1192 = vunpack.c.h.b16 %v663
    %v1193 = vunpack.c.l.b16 %v664
    %v1194 = vunpack.c.h.b16 %v664
    %v1195 = vunpack.c.l.b16 %v665
    %v1196 = vunpack.c.h.b16 %v665
    %v1197 = vunpack.c.l.b16 %v666
    %v1198 = vunpack.c.h.b16 %v666
    %v1199 = vunpack.c.l.b16 %v667
    %v1200 = vunpack.c.h.b16 %v667
    %v1201 = vunpack.c.l.b16 %v668
    %v1202 = vunpack.c.h.b16 %v668
    %v1203 = vunpack.c.l.b16 %v669
    %v1204 = vunpack.c.h.b16 %v669
    %v1205 = vunpack.c.l.b16 %v670
    %v1206 = vunpack.c.h.b16 %v670
    %v1207 = vunpack.c.l.b16 %v671
    %v1208 = vunpack.c.h.b16 %v671
    %v1209 = vunpack.c.l.b16 %v672
    %v1210 = vunpack.c.h.b16 %v672
    %v1211 = vunpack.c.l.b16 %v673
    %v1212 = vunpack.c.h.b16 %v673
    %v1213 = vunpack.c.l.b16 %v674
    %v1214 = vunpack.c.h.b16 %v674
    %v1215 = vunpack.c.l.b16 %v675
    %v1216 = vunpack.c.h.b16 %v675
    %v1217 = vunpack.c.l.b16 %v676
    %v1218 = vunpack.c.h.b16 %v676
    %v1219 = vunpack.c.l.b16 %v677
    %v1220 = vunpack.c.h.b16 %v677
    %v1221 = vunpack.c.l.b16 %v678
    %v1222 = vunpack.c.h.b16 %v678
    %v1223 = vunpack.c.l.b16 %v679
    %v1224 = vunpack.c.h.b16 %v679
    %v1225 = vunpack.c.l.b16 %v680
    %v1226 = vunpack.c.h.b16 %v680
    %v1227 = vunpack.c.l.b16 %v681
    %v1228 = vunpack.c.h.b16 %v681
    %v1229 = vunpack.c.l.b16 %v682
    %v1230 = vunpack.c.h.b16 %v682
    %v1231 = vunpack.c.l.b16 %v683
    %v1232 = vunpack.c.h.b16 %v683
    %v1233 = vunpack.c.l.b16 %v684
    %v1234 = vunpack.c.h.b16 %v684
    %v1235 = vunpack.c.l.b16 %v685
    %v1236 = vunpack.c.h.b16 %v685
    %v1237 = vunpack.c.l.b16 %v686
    %v1238 = vunpack.c.h.b16 %v686
    %v1239 = vunpack.c.l.b16 %v687
    %v1240 = vunpack.c.h.b16 %v687
    %v1241 = vunpack.c.l.b16 %v688
    %v1242 = vunpack.c.h.b16 %v688
    %v1243 = vunpack.c.l.b16 %v689
    %v1244 = vunpack.c.h.b16 %v689
    %v1245 = vunpack.c.l.b16 %v690
    %v1246 = vunpack.c.h.b16 %v690
    %v1247 = vunpack.c.l.b16 %v691
    %v1248 = vunpack.c.h.b16 %v691
    %v1249 = vunpack.c.l.b16 %v692
    %v1250 = vunpack.c.h.b16 %v692
    %v1251 = vunpack.c.l.b16 %v693
    %v1252 = vunpack.c.h.b16 %v693
    %v1253 = vunpack.c.l.b16 %v694
    %v1254 = vunpack.c.h.b16 %v694
    %v1255 = vunpack.c.l.b16 %v695
    %v1256 = vunpack.c.h.b16 %v695
    %v1257 = vunpack.c.l.b16 %v696
    %v1258 = vunpack.c.h.b16 %v696
    %v1259 = vunpack.c.l.b16 %v697
    %v1260 = vunpack.c.h.b16 %v697
    %v1261 = vunpack.c.l.b16 %v698
    %v1262 = vunpack.c.h.b16 %v698
    %v1263 = vunpack.c.l.b16 %v699
    %v1264 = vunpack.c.h.b16 %v699
    %v1265 = vunpack.c.l.b16 %v700
    %v1266 = vunpack.c.h.b16 %v700
    %v1267 = vunpack.c.l.b16 %v701
    %v1268 = vunpack.c.h.b16 %v701
    %v1269 = vunpack.c.l.b16 %v702
    %v1270 = vunpack.c.h.b16 %v702
    %v1271 = vunpack.c.l.b16 %v703
    %v1272 = vunpack.c.h.b16 %v703
    %v1273 = vunpack.c.l.b16 %v704
    %v1274 = vunpack.c.h.b16 %v704
    %v1275 = vunpack.c.l.b16 %v705
    %v1276 = vunpack.c.h.b16 %v705
    %v1277 = vunpack.c.l.b16 %v706
    %v1278 = vunpack.c.h.b16 %v706
    %v1279 = vunpack.c.l.b16 %v707
    %v1280 = vunpack.c.h.b16 %v707
    %v1281 = vunpack.c.l.b16 %v708
    %v1282 = vunpack.c.h.b16 %v708
    %v1283 = vunpack.c.l.b16 %v709
    %v1284 = vunpack.c.h.b16 %v709
    %v1285 = vunpack.c.l.b16 %v710
    %v1286 = vunpack.c.h.b16 %v710
    %v1287 = vunpack.c.l.b16 %v711
    %v1288 = vunpack.c.h.b16 %v711
    %v1289 = vunpack.c.l.b16 %v712
    %v1290 = vunpack.c.h.b16 %v712
    %v1291 = vunpack.c.l.b16 %v713
    %v1292 = vunpack.c.h.b16 %v713
    %v1293 = vunpack.c.l.b16 %v714
    %v1294 = vunpack.c.h.b16 %v714
    %v1295 = vunpack.c.l.b16 %v715
    %v1296 = vunpack.c.h.b16 %v715
    %v1297 = vunpack.c.l.b16 %v716
    %v1298 = vunpack.c.h.b16 %v716
    %v1299 = vunpack.c.l.b16 %v717
    %v1300 = vunpack.c.h.b16 %v717
    %v1301 = vunpack.c.l.b16 %v718
    %v1302 = vunpack.c.h.b16 %v718
    %v1303 = vunpack.c.l.b16 %v719
    %v1304 = vunpack.c.h.b16 %v719
    %v1305 = vunpack.c.l.b16 %v720
    %v1306 = vunpack.c.h.b16 %v720
    %v1307 = vunpack.c.l.b16 %v721
    %v1308 = vunpack.c.h.b16 %v721
    %v1309 = vunpack.c.l.b16 %v722
    %v1310 = vunpack.c.h.b16 %v722
    %v1311 = vunpack.c.l.b16 %v723
    %v1312 = vunpack.c.h.b16 %v723
    %v1313 = vunpack.c.l.b16 %v724
    %v1314 = vunpack.c.h.b16 %v724
    %v1315 = vunpack.c.l.b16 %v725
    %v1316 = vunpack.c.h.b16 %v725
    %v1317 = vunpack.c.l.b16 %v726
    %v1318 = vunpack.c.h.b16 %v726
    %v1319 = vunpack.c.l.b16 %v727
    %v1320 = vunpack.c.h.b16 %v727
    %v1321 = vunpack.c.l.b16 %v728
    %v1322 = vunpack.c.h.b16 %v728
    %v1323 = vunpack.c.l.b16 %v729
    %v1324 = vunpack.c.h.b16 %v729
    %v1325 = vunpack.c.l.b16 %v730
    %v1326 = vunpack.c.h.b16 %v730
    %v1327 = vunpack.c.l.b16 %v731
    %v1328 = vunpack.c.h.b16 %v731
    %v1329 = vunpack.c.l.b16 %v732
    %v1330 = vunpack.c.h.b16 %v732
    %v1331 = vunpack.c.l.b16 %v733
    %v1332 = vunpack.c.h.b16 %v733
    %v1333 = vunpack.c.l.b16 %v734
    %v1334 = vunpack.c.h.b16 %v734
    %v1335 = vunpack.c.l.b16 %v735
    %v1336 = vunpack.c.h.b16 %v735
    %v1337 = vunpack.c.l.b16 %v736
    %v1338 = vunpack.c.h.b16 %v736
    %v1339 = vunpack.c.l.b16 %v737
    %v1340 = vunpack.c.h.b16 %v737
    %v1341 = vunpack.c.l.b16 %v738
    %v1342 = vunpack.c.h.b16 %v738
    %v1343 = vunpack.c.l.b16 %v739
    %v1344 = vunpack.c.h.b16 %v739
    %v1345 = vunpack.c.l.b16 %v740
    %v1346 = vunpack.c.h.b16 %v740
    %v1347 = vunpack.c.l.b16 %v741
    %v1348 = vunpack.c.h.b16 %v741
    %v1349 = vunpack.c.l.b16 %v742
    %v1350 = vunpack.c.h.b16 %v742
    %v1351 = vunpack.c.l.b16 %v743
    %v1352 = vunpack.c.h.b16 %v743
    %v1353 = vunpack.c.l.b16 %v744
    %v1354 = vunpack.c.h.b16 %v744
    %v1355 = vunpack.c.l.b16 %v745
    %v1356 = vunpack.c.h.b16 %v745
    %v1357 = vunpack.c.l.b16 %v746
    %v1358 = vunpack.c.h.b16 %v746
    %v1359 = vunpack.c.l.b16 %v747
    %v1360 = vunpack.c.h.b16 %v747
    %v1361 = vunpack.c.l.b16 %v748
    %v1362 = vunpack.c.h.b16 %v748
    %v1363 = vunpack.c.l.b16 %v749
    %v1364 = vunpack.c.h.b16 %v749
    %v1365 = vunpack.c.l.b16 %v750
    %v1366 = vunpack.c.h.b16 %v750
    %v1367 = vunpack.c.l.b16 %v751
    %v1368 = vunpack.c.h.b16 %v751
    %v1369 = vunpack.c.l.b16 %v752
    %v1370 = vunpack.c.h.b16 %v752
    %v1371 = vunpack.c.l.b16 %v753
    %v1372 = vunpack.c.h.b16 %v753
    %v1373 = vunpack.c.l.b16 %v754
    %v1374 = vunpack.c.h.b16 %v754
    %v1375 = vunpack.c.l.b16 %v755
    %v1376 = vunpack.c.h.b16 %v755
    %v1377 = vunpack.c.l.b16 %v756
    %v1378 = vunpack.c.h.b16 %v756
    %v1379 = vunpack.c.l.b16 %v757
    %v1380 = vunpack.c.h.b16 %v757
    %v1381 = vunpack.c.l.b16 %v758
    %v1382 = vunpack.c.h.b16 %v758
    %v1383 = vunpack.c.l.b16 %v759
    %v1384 = vunpack.c.h.b16 %v759
    %v1385 = vunpack.c.l.b16 %v760
    %v1386 = vunpack.c.h.b16 %v760
    %v1387 = vunpack.c.l.b16 %v761
    %v1388 = vunpack.c.h.b16 %v761
    %v1389 = vunpack.c.l.b16 %v762
    %v1390 = vunpack.c.h.b16 %v762
    %v1391 = vunpack.c.l.b16 %v763
    %v1392 = vunpack.c.h.b16 %v763
    %v1393 = vunpack.c.l.b16 %v764
    %v1394 = vunpack.c.h.b16 %v764
    %v1395 = vunpack.c.l.b16 %v765
    %v1396 = vunpack.c.h.b16 %v765
    %v1397 = vunpack.c.l.b16 %v766
    %v1398 = vunpack.c.h.b16 %v766
    %v1399 = vunpack.c.l.b16 %v767
    %v1400 = vunpack.c.h.b16 %v767
    %v1401 = vunpack.c.l.b16 %v768
    %v1402 = vunpack.c.h.b16 %v768
    %v1403 = vunpack.c.l.b16 %v769
    %v1404 = vunpack.c.h.b16 %v769
    %v1405 = vunpack.c.l.b16 %v770
    %v1406 = vunpack.c.h.b16 %v770
    %v1407 = vunpack.c.l.b16 %v771
    %v1408 = vunpack.c.h.b16 %v771
    %v1409 = vunpack.c.l.b16 %v772
    %v1410 = vunpack.c.h.b16 %v772
    %v1411 = vunpack.c.l.b16 %v773
    %v1412 = vunpack.c.h.b16 %v773
    %v1413 = vunpack.c.l.b16 %v774
    %v1414 = vunpack.c.h.b16 %v774
    %v1415 = vunpack.c.l.b16 %v775
    %v1416 = vunpack.c.h.b16 %v775
    %v1417 = vunpack.c.l.b16 %v776
    %v1418 = vunpack.c.h.b16 %v776
    %v1419 = vunpack.c.l.b16 %v777
    %v1420 = vunpack.c.h.b16 %v777
    %v1421 = vunpack.c.l.b16 %v778
    %v1422 = vunpack.c.h.b16 %v778
    %v1423 = vunpack.c.l.b16 %v779
    %v1424 = vunpack.c.h.b16 %v779
    %v1425 = vunpack.c.l.b16 %v780
    %v1426 = vunpack.c.h.b16 %v780
    %v1427 = vunpack.c.l.b16 %v781
    %v1428 = vunpack.c.h.b16 %v781
    %v1429 = vunpack.c.l.b16 %v782
    %v1430 = vunpack.c.h.b16 %v782
    %v1431 = vunpack.c.l.b16 %v783
    %v1432 = vunpack.c.h.b16 %v783
    %v1433 = vunpack.c.l.b16 %v784
    %v1434 = vunpack.c.h.b16 %v784
    %v1435 = vunpack.c.l.b16 %v785
    %v1436 = vunpack.c.h.b16 %v785
    %v1437 = vunpack.c.l.b16 %v786
    %v1438 = vunpack.c.h.b16 %v786
    %v1439 = vunpack.c.l.b16 %v787
    %v1440 = vunpack.c.h.b16 %v787
    %v1441 = vunpack.c.l.b16 %v788
    %v1442 = vunpack.c.h.b16 %v788
    %v1443 = vunpack.c.l.b16 %v789
    %v1444 = vunpack.c.h.b16 %v789
    %v1445 = vunpack.c.l.b16 %v790
    %v1446 = vunpack.c.h.b16 %v790
    %v1447 = vunpack.c.l.b16 %v791
    %v1448 = vunpack.c.h.b16 %v791
    %v1449 = vunpack.c.l.b16 %v792
    %v1450 = vunpack.c.h.b16 %v792
    %v1451 = vunpack.c.l.b16 %v793
    %v1452 = vunpack.c.h.b16 %v793
    %v1453 = vunpack.c.l.b16 %v794
    %v1454 = vunpack.c.h.b16 %v794
    %v1455 = vunpack.c.l.b16 %v795
    %v1456 = vunpack.c.h.b16 %v795
    %v1457 = vunpack.c.l.b16 %v796
    %v1458 = vunpack.c.h.b16 %v796
    %v1459 = vunpack.c.l.b16 %v797
    %v1460 = vunpack.c.h.b16 %v797
    %v1461 = vunpack.c.l.b16 %v798
    %v1462 = vunpack.c.h.b16 %v798
    %v1463 = vunpack.c.l.b16 %v799
    %v1464 = vunpack.c.h.b16 %v799
    %v1465 = vunpack.c.l.b16 %v800
    %v1466 = vunpack.c.h.b16 %v800
    %v1467 = vunpack.c.l.b16 %v801
    %v1468 = vunpack.c.h.b16 %v801
    %v1469 = vunpack.c.l.b16 %v802
    %v1470 = vunpack.c.h.b16 %v802
    %v1471 = vunpack.c.l.b16 %v803
    %v1472 = vunpack.c.h.b16 %v803
    %v1473 = vunpack.c.l.b16 %v804
    %v1474 = vunpack.c.h.b16 %v804
    %v1475 = vunpack.c.l.b16 %v805
    %v1476 = vunpack.c.h.b16 %v805
    %v1477 = vunpack.c.l.b16 %v806
    %v1478 = vunpack.c.h.b16 %v806
    %v1479 = vunpack.c.l.b16 %v807
    %v1480 = vunpack.c.h.b16 %v807
    %v1481 = vunpack.c.l.b16 %v808
    %v1482 = vunpack.c.h.b16 %v808
    %v1483 = vunpack.c.l.b16 %v809
    %v1484 = vunpack.c.h.b16 %v809
    %v1485 = vunpack.c.l.b16 %v810
    %v1486 = vunpack.c.h.b16 %v810
    %v1487 = vunpack.c.l.b16 %v811
    %v1488 = vunpack.c.h.b16 %v811
    %v1489 = vunpack.c.l.b16 %v812
    %v1490 = vunpack.c.h.b16 %v812
    %v1491 = vunpack.c.l.b16 %v813
    %v1492 = vunpack.c.h.b16 %v813
    %v1493 = vunpack.c.l.b16 %v814
    %v1494 = vunpack.c.h.b16 %v814
    %v1495 = vunpack.c.l.b16 %v815
    %v1496 = vunpack.c.h.b16 %v815
    %v1497 = vunpack.c.l.b16 %v816
    %v1498 = vunpack.c.h.b16 %v816
    %v1499 = vunpack.c.l.b16 %v817
    %v1500 = vunpack.c.h.b16 %v817
    %v1501 = vunpack.c.l.b16 %v818
    %v1502 = vunpack.c.h.b16 %v818
    %v1503 = vunpack.c.l.b16 %v819
    %v1504 = vunpack.c.h.b16 %v819
    %v1505 = vunpack.c.l.b16 %v820
    %v1506 = vunpack.c.h.b16 %v820
    %v1507 = vunpack.c.l.b16 %v821
    %v1508 = vunpack.c.h.b16 %v821
    %v1509 = vunpack.c.l.b16 %v822
    %v1510 = vunpack.c.h.b16 %v822
    %v1511 = vunpack.c.l.b16 %v823
    %v1512 = vunpack.c.h.b16 %v823
    %v1513 = vunpack.c.l.b16 %v824
    %v1514 = vunpack.c.h.b16 %v824
    %v1515 = vunpack.c.l.b16 %v825
    %v1516 = vunpack.c.h.b16 %v825
    %v1517 = vunpack.c.l.b16 %v826
    %v1518 = vunpack.c.h.b16 %v826
    %v1519 = vunpack.c.l.b16 %v827
    %v1520 = vunpack.c.h.b16 %v827
    %v1521 = vunpack.c.l.b16 %v828
    %v1522 = vunpack.c.h.b16 %v828
    %v1523 = vunpack.c.l.b16 %v829
    %v1524 = vunpack.c.h.b16 %v829
    %v1525 = vunpack.c.l.b16 %v830
    %v1526 = vunpack.c.h.b16 %v830
    %v1527 = vunpack.c.l.b16 %v831
    %v1528 = vunpack.c.h.b16 %v831
    %v1529 = vunpack.c.l.b16 %v832
    %v1530 = vunpack.c.h.b16 %v832
    %v1531 = vunpack.c.l.b16 %v833
    %v1532 = vunpack.c.h.b16 %v833
    %v1533 = vunpack.c.l.b16 %v834
    %v1534 = vunpack.c.h.b16 %v834
    %v1535 = vunpack.c.l.b16 %v835
    %v1536 = vunpack.c.h.b16 %v835
    %v1537 = vunpack.c.l.b16 %v836
    %v1538 = vunpack.c.h.b16 %v836
    %v1539 = vunpack.c.l.b16 %v837
    %v1540 = vunpack.c.h.b16 %v837
    %v1541 = vunpack.c.l.b16 %v838
    %v1542 = vunpack.c.h.b16 %v838
    %v1543 = vunpack.c.l.b16 %v839
    %v1544 = vunpack.c.h.b16 %v839
    %v1545 = vunpack.c.l.b16 %v840
    %v1546 = vunpack.c.h.b16 %v840
    %v1547 = vunpack.c.l.b16 %v841
    %v1548 = vunpack.c.h.b16 %v841
    %v1549 = vunpack.c.l.b16 %v842
    %v1550 = vunpack.c.h.b16 %v842
    %v1551 = vunpack.c.l.b16 %v843
    %v1552 = vunpack.c.h.b16 %v843
    %v1553 = vunpack.c.l.b16 %v844
    %v1554 = vunpack.c.h.b16 %v844
    %v1555 = vunpack.c.l.b16 %v845
    %v1556 = vunpack.c.h.b16 %v845
    %v1557 = vunpack.c.l.b16 %v846
    %v1558 = vunpack.c.h.b16 %v846
    %v1559 = vunpack.c.l.b16 %v847
    %v1560 = vunpack.c.h.b16 %v847
    %v1561 = vunpack.c.l.b16 %v848
    %v1562 = vunpack.c.h.b16 %v848
    %v1563 = vunpack.c.l.b16 %v849
    %v1564 = vunpack.c.h.b16 %v849
    %v1565 = vunpack.c.l.b16 %v850
    %v1566 = vunpack.c.h.b16 %v850
    %v1567 = vunpack.c.l.b16 %v851
    %v1568 = vunpack.c.h.b16 %v851
    %v1569 = vunpack.c.l.b16 %v852
    %v1570 = vunpack.c.h.b16 %v852
    %v1571 = vunpack.c.l.b16 %v853
    %v1572 = vunpack.c.h.b16 %v853
    %v1573 = vunpack.c.l.b16 %v854
    %v1574 = vunpack.c.h.b16 %v854
    %v1575 = vunpack.c.l.b16 %v855
    %v1576 = vunpack.c.h.b16 %v855
    %v1577 = vunpack.c.l.b16 %v856
    %v1578 = vunpack.c.h.b16 %v856
    %v1579 = vunpack.c.l.b16 %v857
    %v1580 = vunpack.c.h.b16 %v857
    %v1581 = vunpack.c.l.b16 %v858
    %v1582 = vunpack.c.h.b16 %v858
    %v1583 = vunpack.c.l.b16 %v859
    %v1584 = vunpack.c.h.b16 %v859
    %v1585 = vunpack.c.l.b16 %v860
    %v1586 = vunpack.c.h.b16 %v860
    %v1587 = vunpack.c.l.b16 %v861
    %v1588 = vunpack.c.h.b16 %v861
    %v1589 = vunpack.c.l.b16 %v862
    %v1590 = vunpack.c.h.b16 %v862
    %v1591 = vunpack.c.l.b16 %v863
    %v1592 = vunpack.c.h.b16 %v863
    %v1593 = vunpack.c.l.b16 %v864
    %v1594 = vunpack.c.h.b16 %v864
    %v1595 = vunpack.c.l.b16 %v865
    %v1596 = vunpack.c.h.b16 %v865
    %v1597 = vunpack.c.l.b16 %v866
    %v1598 = vunpack.c.h.b16 %v866
    %v1599 = vunpack.c.l.b16 %v867
    %v1600 = vunpack.c.h.b16 %v867
    %v1601 = vunpack.c.l.b16 %v868
    %v1602 = vunpack.c.h.b16 %v868
    %v1603 = vunpack.c.l.b16 %v869
    %v1604 = vunpack.c.h.b16 %v869
    %v1605 = vunpack.c.l.b16 %v870
    %v1606 = vunpack.c.h.b16 %v870
    %v1607 = vunpack.c.l.b16 %v871
    %v1608 = vunpack.c.h.b16 %v871
    %v1609 = vunpack.c.l.b16 %v872
    %v1610 = vunpack.c.h.b16 %v872
    %v1611 = vunpack.c.l.b16 %v873
    %v1612 = vunpack.c.h.b16 %v873
    %v1613 = vunpack.c.l.b16 %v874
    %v1614 = vunpack.c.h.b16 %v874
    %v1615 = vunpack.c.l.b16 %v875
    %v1616 = vunpack.c.h.b16 %v875
    %v1617 = vunpack.c.l.b16 %v876
    %v1618 = vunpack.c.h.b16 %v876
    %v1619 = vunpack.c.l.b16 %v877
    %v1620 = vunpack.c.h.b16 %v877
    %v1621 = vunpack.c.l.b16 %v878
    %v1622 = vunpack.c.h.b16 %v878
    %v1623 = vunpack.c.l.b16 %v879
    %v1624 = vunpack.c.h.b16 %v879
    %v1625 = vunpack.c.l.b16 %v880
    %v1626 = vunpack.c.h.b16 %v880
    %v1627 = vunpack.c.l.b16 %v881
    %v1628 = vunpack.c.h.b16 %v881
    %v1629 = vunpack.c.l.b16 %v882
    %v1630 = vunpack.c.h.b16 %v882
    %v1631 = vunpack.c.l.b16 %v883
    %v1632 = vunpack.c.h.b16 %v883
    %v1633 = vunpack.c.l.b16 %v884
    %v1634 = vunpack.c.h.b16 %v884
    %v1635 = vunpack.c.l.b16 %v885
    %v1636 = vunpack.c.h.b16 %v885
    %v1637 = vunpack.c.l.b16 %v886
    %v1638 = vunpack.c.h.b16 %v886
    %v1639 = vunpack.c.l.b16 %v887
    %v1640 = vunpack.c.h.b16 %v887
    %v1641 = vunpack.c.l.b16 %v888
    %v1642 = vunpack.c.h.b16 %v888
    %v1643 = vunpack.c.l.b16 %v889
    %v1644 = vunpack.c.h.b16 %v889
    %v1645 = vunpack.c.l.b16 %v890
    %v1646 = vunpack.c.h.b16 %v890
    %v1647 = vunpack.c.l.b16 %v891
    %v1648 = vunpack.c.h.b16 %v891
    %v1649 = vunpack.c.l.b16 %v892
    %v1650 = vunpack.c.h.b16 %v892
    %v1651 = vunpack.c.l.b16 %v893
    %v1652 = vunpack.c.h.b16 %v893
    %v1653 = vunpack.c.l.b16 %v894
    %v1654 = vunpack.c.h.b16 %v894
    %v1655 = vunpack.c.l.b16 %v895
    %v1656 = vunpack.c.h.b16 %v895
    %v1657 = vunpack.c.l.b16 %v896
    %v1658 = vunpack.c.h.b16 %v896
    %v1659 = vunpack.c.l.b16 %v897
    %v1660 = vunpack.c.h.b16 %v897
    %v1661 = vunpack.c.l.b16 %v898
    %v1662 = vunpack.c.h.b16 %v898
    %v1663 = vunpack.c.l.b16 %v899
    %v1664 = vunpack.c.h.b16 %v899
    %v1665 = vunpack.c.l.b16 %v900
    %v1666 = vunpack.c.h.b16 %v900
    %v1667 = vunpack.c.l.b16 %v901
    %v1668 = vunpack.c.h.b16 %v901
    %v1669 = vunpack.c.l.b16 %v902
    %v1670 = vunpack.c.h.b16 %v902
    %v1671 = vunpack.c.l.b16 %v903
    %v1672 = vunpack.c.h.b16 %v903
    %v1673 = vunpack.c.l.b16 %v904
    %v1674 = vunpack.c.h.b16 %v904
    %v1675 = vunpack.c.l.b16 %v905
    %v1676 = vunpack.c.h.b16 %v905
    %v1677 = vunpack.c.l.b16 %v906
    %v1678 = vunpack.c.h.b16 %v906
    %v1679 = vunpack.c.l.b16 %v907
    %v1680 = vunpack.c.h.b16 %v907
    %v1681 = vunpack.c.l.b16 %v908
    %v1682 = vunpack.c.h.b16 %v908
    %v1683 = vunpack.c.l.b16 %v909
    %v1684 = vunpack.c.h.b16 %v909
    %v1685 = vunpack.c.l.b16 %v910
    %v1686 = vunpack.c.h.b16 %v910
    %v1687 = vunpack.c.l.b16 %v911
    %v1688 = vunpack.c.h.b16 %v911
    %v1689 = vpack.c.b16 %v1181, %v1177
    %v1690 = vpack.c.b16 %v1182, %v1178
    %v1691 = vpack.c.b16 %v1183, %v1179
    %v1692 = vpack.c.b16 %v1184, %v1180
    %v1693 = vpack.c.b16 %v1189, %v1185
    %v1694 = vpack.c.b16 %v1190, %v1186
    %v1695 = vpack.c.b16 %v1191, %v1187
    %v1696 = vpack.c.b16 %v1192, %v1188
    %v1697 = vpack.c.b16 %v1197, %v1193
    %v1698 = vpack.c.b16 %v1198, %v1194
    %v1699 = vpack.c.b16 %v1199, %v1195
    %v1700 = vpack.c.b16 %v1200, %v1196
    %v1701 = vpack.c.b16 %v1205, %v1201
    %v1702 = vpack.c.b16 %v1206, %v1202
    %v1703 = vpack.c.b16 %v1207, %v1203
    %v1704 = vpack.c.b16 %v1208, %v1204
    %v1705 = vpack.c.b16 %v1213, %v1209
    %v1706 = vpack.c.b16 %v1214, %v1210
    %v1707 = vpack.c.b16 %v1215, %v1211
    %v1708 = vpack.c.b16 %v1216, %v1212
    %v1709 = vpack.c.b16 %v1221, %v1217
    %v1710 = vpack.c.b16 %v1222, %v1218
    %v1711 = vpack.c.b16 %v1223, %v1219
    %v1712 = vpack.c.b16 %v1224, %v1220
    %v1713 = vpack.c.b16 %v1229, %v1225
    %v1714 = vpack.c.b16 %v1230, %v1226
    %v1715 = vpack.c.b16 %v1231, %v1227
    %v1716 = vpack.c.b16 %v1232, %v1228
    %v1717 = vpack.c.b16 %v1237, %v1233
    %v1718 = vpack.c.b16 %v1238, %v1234
    %v1719 = vpack.c.b16 %v1239, %v1235
    %v1720 = vpack.c.b16 %v1240, %v1236
    %v1721 = vpack.c.b16 %v1245, %v1241
    %v1722 = vpack.c.b16 %v1246, %v1242
    %v1723 = vpack.c.b16 %v1247, %v1243
    %v1724 = vpack.c.b16 %v1248, %v1244
    %v1725 = vpack.c.b16 %v1253, %v1249
    %v1726 = vpack.c.b16 %v1254, %v1250
    %v1727 = vpack.c.b16 %v1255, %v1251
    %v1728 = vpack.c.b16 %v1256, %v1252
    %v1729 = vpack.c.b16 %v1261, %v1257
    %v1730 = vpack.c.b16 %v1262, %v1258
    %v1731 = vpack.c.b16 %v1263, %v1259
    %v1732 = vpack.c.b16 %v1264, %v1260
    %v1733 = vpack.c.b16 %v1269, %v1265
    %v1734 = vpack.c.b16 %v1270, %v1266
    %v1735 = vpack.c.b16 %v1271, %v1267
    %v1736 = vpack.c.b16 %v1272, %v1268
    %v1737 = vpack.c.b16 %v1277, %v1273
    %v1738 = vpack.c.b16 %v1278, %v1274
    %v1739 = vpack.c.b16 %v1279, %v1275
    %v1740 = vpack.c.b16 %v1280, %v1276
    %v1741 = vpack.c.b16 %v1285, %v1281
    %v1742 = vpack.c.b16 %v1286, %v1282
    %v1743 = vpack.c.b16 %v1287, %v1283
    %v1744 = vpack.c.b16 %v1288, %v1284
    %v1745 = vpack.c.b16 %v1293, %v1289
    %v1746 = vpack.c.b16 %v1294, %v1290
    %v1747 = vpack.c.b16 %v1295, %v1291
    %v1748 = vpack.c.b16 %v1296, %v1292
    %v1749 = vpack.c.b16 %v1301, %v1297
    %v1750 = vpack.c.b16 %v1302, %v1298
    %v1751 = vpack.c.b16 %v1303, %v1299
    %v1752 = vpack.c.b16 %v1304, %v1300
    %v1753 = vpack.c.b16 %v1309, %v1305
    %v1754 = vpack.c.b16 %v1310, %v1306
    %v1755 = vpack.c.b16 %v1311, %v1307
    %v1756 = vpack.c.b16 %v1312, %v1308
    %v1757 = vpack.c.b16 %v1317, %v1313
    %v1758 = vpack.c.b16 %v1318, %v1314
    %v1759 = vpack.c.b16 %v1319, %v1315
    %v1760 = vpack.c.b16 %v1320, %v1316
    %v1761 = vpack.c.b16 %v1325, %v1321
    %v1762 = vpack.c.b16 %v1326, %v1322
    %v1763 = vpack.c.b16 %v1327, %v1323
    %v1764 = vpack.c.b16 %v1328, %v1324
    %v1765 = vpack.c.b16 %v1333, %v1329
    %v1766 = vpack.c.b16 %v1334, %v1330
    %v1767 = vpack.c.b16 %v1335, %v1331
    %v1768 = vpack.c.b16 %v1336, %v1332
    %v1769 = vpack.c.b16 %v1341, %v1337
    %v1770 = vpack.c.b16 %v1342, %v1338
    %v1771 = vpack.c.b16 %v1343, %v1339
    %v1772 = vpack.c.b16 %v1344, %v1340
    %v1773 = vpack.c.b16 %v1349, %v1345
    %v1774 = vpack.c.b16 %v1350, %v1346
    %v1775 = vpack.c.b16 %v1351, %v1347
    %v1776 = vpack.c.b16 %v1352, %v1348
    %v1777 = vpack.c.b16 %v1357, %v1353
    %v1778 = vpack.c.b16 %v1358, %v1354
    %v1779 = vpack.c.b16 %v1359, %v1355
    %v1780 = vpack.c.b16 %v1360, %v1356
    %v1781 = vpack.c.b16 %v1365, %v1361
    %v1782 = vpack.c.b16 %v1366, %v1362
    %v1783 = vpack.c.b16 %v1367, %v1363
    %v1784 = vpack.c.b16 %v1368, %v1364
    %v1785 = vpack.c.b16 %v1373, %v1369
    %v1786 = vpack.c.b16 %v1374, %v1370
    %v1787 = vpack.c.b16 %v1375, %v1371
    %v1788 = vpack.c.b16 %v1376, %v1372
    %v1789 = vpack.c.b16 %v1381, %v1377
    %v1790 = vpack.c.b16 %v1382, %v1378
    %v1791 = vpack.c.b16 %v1383, %v1379
    %v1792 = vpack.c.b16 %v1384, %v1380
    %v1793 = vpack.c.b16 %v1389, %v1385
    %v1794 = vpack.c.b16 %v1390, %v1386
    %v1795 = vpack.c.b16 %v1391, %v1387
    %v1796 = vpack.c.b16 %v1392, %v1388
    %v1797 = vpack.c.b16 %v1397, %v1393
    %v1798 = vpack.c.b16 %v1398, %v1394
    %v1799 = vpack.c.b16 %v1399, %v1395
    %v1800 = vpack.c.b16 %v1400, %v1396
    %v1801 = vpack.c.b16 %v1405, %v1401
    %v1802 = vpack.c.b16 %v1406, %v1402
    %v1803 = vpack.c.b16 %v1407, %v1403
    %v1804 = vpack.c.b16 %v1408, %v1404
    %v1805 = vpack.c.b16 %v1413, %v1409
    %v1806 = vpack.c.b16 %v1414, %v1410
    %v1807 = vpack.c.b16 %v1415, %v1411
    %v1808 = vpack.c.b16 %v1416, %v1412
    %v1809 = vpack.c.b16 %v1421, %v1417
    %v1810 = vpack.c.b16 %v1422, %v1418
    %v1811 = vpack.c.b16 %v1423, %v1419
    %v1812 = vpack.c.b16 %v1424, %v1420
    %v1813 = vpack.c.b16 %v1429, %v1425
    %v1814 = vpack.c.b16 %v1430, %v1426
    %v1815 = vpack.c.b16 %v1431, %v1427
    %v1816 = vpack.c.b16 %v1432, %v1428
    %v1817 = vpack.c.b16 %v1437, %v1433
    %v1818 = vpack.c.b16 %v1438, %v1434
    %v1819 = vpack.c.b16 %v1439, %v1435
    %v1820 = vpack.c.b16 %v1440, %v1436
    %v1821 = vpack.c.b16 %v1445, %v1441
    %v1822 = vpack.c.b16 %v1446, %v1442
    %v1823 = vpack.c.b16 %v1447, %v1443
    %v1824 = vpack.c.b16 %v1448, %v1444
    %v1825 = vpack.c.b16 %v1453, %v1449
    %v1826 = vpack.c.b16 %v1454, %v1450
    %v1827 = vpack.c.b16 %v1455, %v1451
    %v1828 = vpack.c.b16 %v1456, %v1452
    %v1829 = vpack.c.b16 %v1461, %v1457
    %v1830 = vpack.c.b16 %v1462, %v1458
    %v1831 = vpack.c.b16 %v1463, %v1459
    %v1832 = vpack.c.b16 %v1464, %v1460
    %v1833 = vpack.c.b16 %v1469, %v1465
    %v1834 = vpack.c.b16 %v1470, %v1466
    %v1835 = vpack.c.b16 %v1471, %v1467
    %v1836 = vpack.c.b16 %v1472, %v1468
    %v1837 = vpack.c.b16 %v1477, %v1473
    %v1838 = vpack.c.b16 %v1478, %v1474
    %v1839 = vpack.c.b16 %v1479, %v1475
    %v1840 = vpack.c.b16 %v1480, %v1476
    %v1841 = vpack.c.b16 %v1485, %v1481
    %v1842 = vpack.c.b16 %v1486, %v1482
    %v1843 = vpack.c.b16 %v1487, %v1483
    %v1844 = vpack.c.b16 %v1488, %v1484
    %v1845 = vpack.c.b16 %v1493, %v1489
    %v1846 = vpack.c.b16 %v1494, %v1490
    %v1847 = vpack.c.b16 %v1495, %v1491
    %v1848 = vpack.c.b16 %v1496, %v1492
    %v1849 = vpack.c.b16 %v1501, %v1497
    %v1850 = vpack.c.b16 %v1502, %v1498
    %v1851 = vpack.c.b16 %v1503, %v1499
    %v1852 = vpack.c.b16 %v1504, %v1500
    %v1853 = vpack.c.b16 %v1509, %v1505
    %v1854 = vpack.c.b16 %v1510, %v1506
    %v1855 = vpack.c.b16 %v1511, %v1507
    %v1856 = vpack.c.b16 %v1512, %v1508
    %v1857 = vpack.c.b16 %v1517, %v1513
    %v1858 = vpack.c.b16 %v1518, %v1514
    %v1859 = vpack.c.b16 %v1519, %v1515
    %v1860 = vpack.c.b16 %v1520, %v1516
    %v1861 = vpack.c.b16 %v1525, %v1521
    %v1862 = vpack.c.b16 %v1526, %v1522
    %v1863 = vpack.c.b16 %v1527, %v1523
    %v1864 = vpack.c.b16 %v1528, %v1524
    %v1865 = vpack.c.b16 %v1533, %v1529
    %v1866 = vpack.c.b16 %v1534, %v1530
    %v1867 = vpack.c.b16 %v1535, %v1531
    %v1868 = vpack.c.b16 %v1536, %v1532
    %v1869 = vpack.c.b16 %v1541, %v1537
    %v1870 = vpack.c.b16 %v1542, %v1538
    %v1871 = vpack.c.b16 %v1543, %v1539
    %v1872 = vpack.c.b16 %v1544, %v1540
    %v1873 = vpack.c.b16 %v1549, %v1545
    %v1874 = vpack.c.b16 %v1550, %v1546
    %v1875 = vpack.c.b16 %v1551, %v1547
    %v1876 = vpack.c.b16 %v1552, %v1548
    %v1877 = vpack.c.b16 %v1557, %v1553
    %v1878 = vpack.c.b16 %v1558, %v1554
    %v1879 = vpack.c.b16 %v1559, %v1555
    %v1880 = vpack.c.b16 %v1560, %v1556
    %v1881 = vpack.c.b16 %v1565, %v1561
    %v1882 = vpack.c.b16 %v1566, %v1562
    %v1883 = vpack.c.b16 %v1567, %v1563
    %v1884 = vpack.c.b16 %v1568, %v1564
    %v1885 = vpack.c.b16 %v1573, %v1569
    %v1886 = vpack.c.b16 %v1574, %v1570
    %v1887 = vpack.c.b16 %v1575, %v1571
    %v1888 = vpack.c.b16 %v1576, %v1572
    %v1889 = vpack.c.b16 %v1581, %v1577
    %v1890 = vpack.c.b16 %v1582, %v1578
    %v1891 = vpack.c.b16 %v1583, %v1579
    %v1892 = vpack.c.b16 %v1584, %v1580
    %v1893 = vpack.c.b16 %v1589, %v1585
    %v1894 = vpack.c.b16 %v1590, %v1586
    %v1895 = vpack.c.b16 %v1591, %v1587
    %v1896 = vpack.c.b16 %v1592, %v1588
    %v1897 = vpack.c.b16 %v1597, %v1593
    %v1898 = vpack.c.b16 %v1598, %v1594
    %v1899 = vpack.c.b16 %v1599, %v1595
    %v1900 = vpack.c.b16 %v1600, %v1596
    %v1901 = vpack.c.b16 %v1605, %v1601
    %v1902 = vpack.c.b16 %v1606, %v1602
    %v1903 = vpack.c.b16 %v1607, %v1603
    %v1904 = vpack.c.b16 %v1608, %v1604
    %v1905 = vpack.c.b16 %v1613, %v1609
    %v1906 = vpack.c.b16 %v1614, %v1610
    %v1907 = vpack.c.b16 %v1615, %v1611
    %v1908 = vpack.c.b16 %v1616, %v1612
    %v1909 = vpack.c.b16 %v1621, %v1617
    %v1910 = vpack.c.b16 %v1622, %v1618
    %v1911 = vpack.c.b16 %v1623, %v1619
    %v1912 = vpack.c.b16 %v1624, %v1620
    %v1913 = vpack.c.b16 %v1629, %v1625
    %v1914 = vpack.c.b16 %v1630, %v1626
    %v1915 = vpack.c.b16 %v1631, %v1627
    %v1916 = vpack.c.b16 %v1632, %v1628
    %v1917 = vpack.c.b16 %v1637, %v1633
    %v1918 = vpack.c.b16 %v1638, %v1634
    %v1919 = vpack.c.b16 %v1639, %v1635
    %v1920 = vpack.c.b16 %v1640, %v1636
    %v1921 = vpack.c.b16 %v1645, %v1641
    %v1922 = vpack.c.b16 %v1646, %v1642
    %v1923 = vpack.c.b16 %v1647, %v1643
    %v1924 = vpack.c.b16 %v1648, %v1644
    %v1925 = vpack.c.b16 %v1653, %v1649
    %v1926 = vpack.c.b16 %v1654, %v1650
    %v1927 = vpack.c.b16 %v1655, %v1651
    %v1928 = vpack.c.b16 %v1656, %v1652
    %v1929 = vpack.c.b16 %v1661, %v1657
    %v1930 = vpack.c.b16 %v1662, %v1658
    %v1931 = vpack.c.b16 %v1663, %v1659
    %v1932 = vpack.c.b16 %v1664, %v1660
    %v1933 = vpack.c.b16 %v1669, %v1665
    %v1934 = vpack.c.b16 %v1670, %v1666
    %v1935 = vpack.c.b16 %v1671, %v1667
    %v1936 = vpack.c.b16 %v1672, %v1668
    %v1937 = vpack.c.b16 %v1677, %v1673
    %v1938 = vpack.c.b16 %v1678, %v1674
    %v1939 = vpack.c.b16 %v1679, %v1675
    %v1940 = vpack.c.b16 %v1680, %v1676
    %v1941 = vpack.c.b16 %v1685, %v1681
    %v1942 = vpack.c.b16 %v1686, %v1682
    %v1943 = vpack.c.b16 %v1687, %v1683
    %v1944 = vpack.c.b16 %v1688, %v1684
    %2201 = vmatpush.bf16.msra.mxu0 %v1717
    %2202 = vmatpush.bf16.msra.mxu0 %v1713
    %2203 = vmatpush.bf16.msra.mxu0 %v1709
    %2204 = vmatpush.bf16.msra.mxu0 %v1705
    %2205 = vmatpush.bf16.msra.mxu0 %v1701
    %2206 = vmatpush.bf16.msra.mxu0 %v1697
    %2207 = vmatpush.bf16.msra.mxu0 %v1693
    %2208 = vmatpush.bf16.msra.mxu0 %v1689
    %2209 = vmatmul.bf16.gmra.mxu0 %v648
    %v2210 = vpop.f32.mrf.mxu0
    %v2211 = vadd.f32 %v913, %v2210
    %v2212 = vpop.f32.mrf.mxu0
    %2213 = vdwg.mxu0
    %2214 = vmatpush.bf16.msra.mxu0 %v1749
    %2215 = vmatpush.bf16.msra.mxu0 %v1745
    %2216 = vmatpush.bf16.msra.mxu0 %v1741
    %2217 = vmatpush.bf16.msra.mxu0 %v1737
    %2218 = vmatpush.bf16.msra.mxu0 %v1733
    %2219 = vmatpush.bf16.msra.mxu0 %v1729
    %2220 = vmatpush.bf16.msra.mxu0 %v1725
    %2221 = vmatpush.bf16.msra.mxu0 %v1721
    %2222 = vmatmul.bf16.gmra.mxu0 %v649
    %v2223 = vpop.f32.mrf.mxu0
    %v2224 = vadd.f32 %v2211, %v2223
    %v2225 = vpop.f32.mrf.mxu0
    %2226 = vdwg.mxu0
    %2227 = vmatpush.bf16.msra.mxu0 %v1781
    %2228 = vmatpush.bf16.msra.mxu0 %v1777
    %2229 = vmatpush.bf16.msra.mxu0 %v1773
    %2230 = vmatpush.bf16.msra.mxu0 %v1769
    %2231 = vmatpush.bf16.msra.mxu0 %v1765
    %2232 = vmatpush.bf16.msra.mxu0 %v1761
    %2233 = vmatpush.bf16.msra.mxu0 %v1757
    %2234 = vmatpush.bf16.msra.mxu0 %v1753
    %2235 = vmatmul.bf16.gmra.mxu0 %v650
    %v2236 = vpop.f32.mrf.mxu0
    %v2237 = vadd.f32 %v2224, %v2236
    %v2238 = vpop.f32.mrf.mxu0
    %2239 = vdwg.mxu0
    %2240 = vmatpush.bf16.msra.mxu0 %v1813
    %2241 = vmatpush.bf16.msra.mxu0 %v1809
    %2242 = vmatpush.bf16.msra.mxu0 %v1805
    %2243 = vmatpush.bf16.msra.mxu0 %v1801
    %2244 = vmatpush.bf16.msra.mxu0 %v1797
    %2245 = vmatpush.bf16.msra.mxu0 %v1793
    %2246 = vmatpush.bf16.msra.mxu0 %v1789
    %2247 = vmatpush.bf16.msra.mxu0 %v1785
    %2248 = vmatmul.bf16.gmra.mxu0 %v651
    %v2249 = vpop.f32.mrf.mxu0
    %v2250 = vadd.f32 %v2237, %v2249
    %v2251 = vpop.f32.mrf.mxu0
    %2252 = vdwg.mxu0
    %2253 = vmatpush.bf16.msra.mxu0 %v1845
    %2254 = vmatpush.bf16.msra.mxu0 %v1841
    %2255 = vmatpush.bf16.msra.mxu0 %v1837
    %2256 = vmatpush.bf16.msra.mxu0 %v1833
    %2257 = vmatpush.bf16.msra.mxu0 %v1829
    %2258 = vmatpush.bf16.msra.mxu0 %v1825
    %2259 = vmatpush.bf16.msra.mxu0 %v1821
    %2260 = vmatpush.bf16.msra.mxu0 %v1817
    %2261 = vmatmul.bf16.gmra.mxu0 %v652
    %v2262 = vpop.f32.mrf.mxu0
    %v2263 = vadd.f32 %v2250, %v2262
    %v2264 = vpop.f32.mrf.mxu0
    %2265 = vdwg.mxu0
    %2266 = vmatpush.bf16.msra.mxu0 %v1877
    %2267 = vmatpush.bf16.msra.mxu0 %v1873
    %2268 = vmatpush.bf16.msra.mxu0 %v1869
    %2269 = vmatpush.bf16.msra.mxu0 %v1865
    %2270 = vmatpush.bf16.msra.mxu0 %v1861
    %2271 = vmatpush.bf16.msra.mxu0 %v1857
    %2272 = vmatpush.bf16.msra.mxu0 %v1853
    %2273 = vmatpush.bf16.msra.mxu0 %v1849
    %2274 = vmatmul.bf16.gmra.mxu0 %v653
    %v2275 = vpop.f32.mrf.mxu0
    %v2276 = vadd.f32 %v2263, %v2275
    %v2277 = vpop.f32.mrf.mxu0
    %2278 = vdwg.mxu0
    %2279 = vmatpush.bf16.msra.mxu0 %v1909
    %2280 = vmatpush.bf16.msra.mxu0 %v1905
    %2281 = vmatpush.bf16.msra.mxu0 %v1901
    %2282 = vmatpush.bf16.msra.mxu0 %v1897
    %2283 = vmatpush.bf16.msra.mxu0 %v1893
    %2284 = vmatpush.bf16.msra.mxu0 %v1889
    %2285 = vmatpush.bf16.msra.mxu0 %v1885
    %2286 = vmatpush.bf16.msra.mxu0 %v1881
    %2287 = vmatmul.bf16.gmra.mxu0 %v654
    %v2288 = vpop.f32.mrf.mxu0
    %v2289 = vadd.f32 %v2276, %v2288
    %v2290 = vpop.f32.mrf.mxu0
    %2291 = vdwg.mxu0
    %2292 = vmatpush.bf16.msra.mxu0 %v1941
    %2293 = vmatpush.bf16.msra.mxu0 %v1937
    %2294 = vmatpush.bf16.msra.mxu0 %v1933
    %2295 = vmatpush.bf16.msra.mxu0 %v1929
    %2296 = vmatpush.bf16.msra.mxu0 %v1925
    %2297 = vmatpush.bf16.msra.mxu0 %v1921
    %2298 = vmatpush.bf16.msra.mxu0 %v1917
    %2299 = vmatpush.bf16.msra.mxu0 %v1913
    %2300 = vmatmul.bf16.gmra.mxu0 %v655
    %v2301 = vpop.f32.mrf.mxu0
    %v2302 = vadd.f32 %v2289, %v2301
    %v2303 = vpop.f32.mrf.mxu0
    %2304 = vdwg.mxu0
    %2305 = vmatpush.bf16.msra.mxu0 %v1718
    %2306 = vmatpush.bf16.msra.mxu0 %v1714
    %2307 = vmatpush.bf16.msra.mxu0 %v1710
    %2308 = vmatpush.bf16.msra.mxu0 %v1706
    %2309 = vmatpush.bf16.msra.mxu0 %v1702
    %2310 = vmatpush.bf16.msra.mxu0 %v1698
    %2311 = vmatpush.bf16.msra.mxu0 %v1694
    %2312 = vmatpush.bf16.msra.mxu0 %v1690
    %2313 = vmatmul.bf16.gmra.mxu0 %v648
    %v2314 = vpop.f32.mrf.mxu0
    %v2315 = vadd.f32 %v914, %v2314
    %v2316 = vpop.f32.mrf.mxu0
    %2317 = vdwg.mxu0
    %2318 = vmatpush.bf16.msra.mxu0 %v1750
    %2319 = vmatpush.bf16.msra.mxu0 %v1746
    %2320 = vmatpush.bf16.msra.mxu0 %v1742
    %2321 = vmatpush.bf16.msra.mxu0 %v1738
    %2322 = vmatpush.bf16.msra.mxu0 %v1734
    %2323 = vmatpush.bf16.msra.mxu0 %v1730
    %2324 = vmatpush.bf16.msra.mxu0 %v1726
    %2325 = vmatpush.bf16.msra.mxu0 %v1722
    %2326 = vmatmul.bf16.gmra.mxu0 %v649
    %v2327 = vpop.f32.mrf.mxu0
    %v2328 = vadd.f32 %v2315, %v2327
    %v2329 = vpop.f32.mrf.mxu0
    %2330 = vdwg.mxu0
    %2331 = vmatpush.bf16.msra.mxu0 %v1782
    %2332 = vmatpush.bf16.msra.mxu0 %v1778
    %2333 = vmatpush.bf16.msra.mxu0 %v1774
    %2334 = vmatpush.bf16.msra.mxu0 %v1770
    %2335 = vmatpush.bf16.msra.mxu0 %v1766
    %2336 = vmatpush.bf16.msra.mxu0 %v1762
    %2337 = vmatpush.bf16.msra.mxu0 %v1758
    %2338 = vmatpush.bf16.msra.mxu0 %v1754
    %2339 = vmatmul.bf16.gmra.mxu0 %v650
    %v2340 = vpop.f32.mrf.mxu0
    %v2341 = vadd.f32 %v2328, %v2340
    %v2342 = vpop.f32.mrf.mxu0
    %2343 = vdwg.mxu0
    %2344 = vmatpush.bf16.msra.mxu0 %v1814
    %2345 = vmatpush.bf16.msra.mxu0 %v1810
    %2346 = vmatpush.bf16.msra.mxu0 %v1806
    %2347 = vmatpush.bf16.msra.mxu0 %v1802
    %2348 = vmatpush.bf16.msra.mxu0 %v1798
    %2349 = vmatpush.bf16.msra.mxu0 %v1794
    %2350 = vmatpush.bf16.msra.mxu0 %v1790
    %2351 = vmatpush.bf16.msra.mxu0 %v1786
    %2352 = vmatmul.bf16.gmra.mxu0 %v651
    %v2353 = vpop.f32.mrf.mxu0
    %v2354 = vadd.f32 %v2341, %v2353
    %v2355 = vpop.f32.mrf.mxu0
    %2356 = vdwg.mxu0
    %2357 = vmatpush.bf16.msra.mxu0 %v1846
    %2358 = vmatpush.bf16.msra.mxu0 %v1842
    %2359 = vmatpush.bf16.msra.mxu0 %v1838
    %2360 = vmatpush.bf16.msra.mxu0 %v1834
    %2361 = vmatpush.bf16.msra.mxu0 %v1830
    %2362 = vmatpush.bf16.msra.mxu0 %v1826
    %2363 = vmatpush.bf16.msra.mxu0 %v1822
    %2364 = vmatpush.bf16.msra.mxu0 %v1818
    %2365 = vmatmul.bf16.gmra.mxu0 %v652
    %v2366 = vpop.f32.mrf.mxu0
    %v2367 = vadd.f32 %v2354, %v2366
    %v2368 = vpop.f32.mrf.mxu0
    %2369 = vdwg.mxu0
    %2370 = vmatpush.bf16.msra.mxu0 %v1878
    %2371 = vmatpush.bf16.msra.mxu0 %v1874
    %2372 = vmatpush.bf16.msra.mxu0 %v1870
    %2373 = vmatpush.bf16.msra.mxu0 %v1866
    %2374 = vmatpush.bf16.msra.mxu0 %v1862
    %2375 = vmatpush.bf16.msra.mxu0 %v1858
    %2376 = vmatpush.bf16.msra.mxu0 %v1854
    %2377 = vmatpush.bf16.msra.mxu0 %v1850
    %2378 = vmatmul.bf16.gmra.mxu0 %v653
    %v2379 = vpop.f32.mrf.mxu0
    %v2380 = vadd.f32 %v2367, %v2379
    %v2381 = vpop.f32.mrf.mxu0
    %2382 = vdwg.mxu0
    %2383 = vmatpush.bf16.msra.mxu0 %v1910
    %2384 = vmatpush.bf16.msra.mxu0 %v1906
    %2385 = vmatpush.bf16.msra.mxu0 %v1902
    %2386 = vmatpush.bf16.msra.mxu0 %v1898
    %2387 = vmatpush.bf16.msra.mxu0 %v1894
    %2388 = vmatpush.bf16.msra.mxu0 %v1890
    %2389 = vmatpush.bf16.msra.mxu0 %v1886
    %2390 = vmatpush.bf16.msra.mxu0 %v1882
    %2391 = vmatmul.bf16.gmra.mxu0 %v654
    %v2392 = vpop.f32.mrf.mxu0
    %v2393 = vadd.f32 %v2380, %v2392
    %v2394 = vpop.f32.mrf.mxu0
    %2395 = vdwg.mxu0
    %2396 = vmatpush.bf16.msra.mxu0 %v1942
    %2397 = vmatpush.bf16.msra.mxu0 %v1938
    %2398 = vmatpush.bf16.msra.mxu0 %v1934
    %2399 = vmatpush.bf16.msra.mxu0 %v1930
    %2400 = vmatpush.bf16.msra.mxu0 %v1926
    %2401 = vmatpush.bf16.msra.mxu0 %v1922
    %2402 = vmatpush.bf16.msra.mxu0 %v1918
    %2403 = vmatpush.bf16.msra.mxu0 %v1914
    %2404 = vmatmul.bf16.gmra.mxu0 %v655
    %v2405 = vpop.f32.mrf.mxu0
    %v2406 = vadd.f32 %v2393, %v2405
    %v2407 = vpop.f32.mrf.mxu0
    %2408 = vdwg.mxu0
    %2409 = vmatpush.bf16.msra.mxu0 %v1719
    %2410 = vmatpush.bf16.msra.mxu0 %v1715
    %2411 = vmatpush.bf16.msra.mxu0 %v1711
    %2412 = vmatpush.bf16.msra.mxu0 %v1707
    %2413 = vmatpush.bf16.msra.mxu0 %v1703
    %2414 = vmatpush.bf16.msra.mxu0 %v1699
    %2415 = vmatpush.bf16.msra.mxu0 %v1695
    %2416 = vmatpush.bf16.msra.mxu0 %v1691
    %2417 = vmatmul.bf16.gmra.mxu0 %v648
    %v2418 = vpop.f32.mrf.mxu0
    %v2419 = vadd.f32 %v915, %v2418
    %v2420 = vpop.f32.mrf.mxu0
    %2421 = vdwg.mxu0
    %2422 = vmatpush.bf16.msra.mxu0 %v1751
    %2423 = vmatpush.bf16.msra.mxu0 %v1747
    %2424 = vmatpush.bf16.msra.mxu0 %v1743
    %2425 = vmatpush.bf16.msra.mxu0 %v1739
    %2426 = vmatpush.bf16.msra.mxu0 %v1735
    %2427 = vmatpush.bf16.msra.mxu0 %v1731
    %2428 = vmatpush.bf16.msra.mxu0 %v1727
    %2429 = vmatpush.bf16.msra.mxu0 %v1723
    %2430 = vmatmul.bf16.gmra.mxu0 %v649
    %v2431 = vpop.f32.mrf.mxu0
    %v2432 = vadd.f32 %v2419, %v2431
    %v2433 = vpop.f32.mrf.mxu0
    %2434 = vdwg.mxu0
    %2435 = vmatpush.bf16.msra.mxu0 %v1783
    %2436 = vmatpush.bf16.msra.mxu0 %v1779
    %2437 = vmatpush.bf16.msra.mxu0 %v1775
    %2438 = vmatpush.bf16.msra.mxu0 %v1771
    %2439 = vmatpush.bf16.msra.mxu0 %v1767
    %2440 = vmatpush.bf16.msra.mxu0 %v1763
    %2441 = vmatpush.bf16.msra.mxu0 %v1759
    %2442 = vmatpush.bf16.msra.mxu0 %v1755
    %2443 = vmatmul.bf16.gmra.mxu0 %v650
    %v2444 = vpop.f32.mrf.mxu0
    %v2445 = vadd.f32 %v2432, %v2444
    %v2446 = vpop.f32.mrf.mxu0
    %2447 = vdwg.mxu0
    %2448 = vmatpush.bf16.msra.mxu0 %v1815
    %2449 = vmatpush.bf16.msra.mxu0 %v1811
    %2450 = vmatpush.bf16.msra.mxu0 %v1807
    %2451 = vmatpush.bf16.msra.mxu0 %v1803
    %2452 = vmatpush.bf16.msra.mxu0 %v1799
    %2453 = vmatpush.bf16.msra.mxu0 %v1795
    %2454 = vmatpush.bf16.msra.mxu0 %v1791
    %2455 = vmatpush.bf16.msra.mxu0 %v1787
    %2456 = vmatmul.bf16.gmra.mxu0 %v651
    %v2457 = vpop.f32.mrf.mxu0
    %v2458 = vadd.f32 %v2445, %v2457
    %v2459 = vpop.f32.mrf.mxu0
    %2460 = vdwg.mxu0
    %2461 = vmatpush.bf16.msra.mxu0 %v1847
    %2462 = vmatpush.bf16.msra.mxu0 %v1843
    %2463 = vmatpush.bf16.msra.mxu0 %v1839
    %2464 = vmatpush.bf16.msra.mxu0 %v1835
    %2465 = vmatpush.bf16.msra.mxu0 %v1831
    %2466 = vmatpush.bf16.msra.mxu0 %v1827
    %2467 = vmatpush.bf16.msra.mxu0 %v1823
    %2468 = vmatpush.bf16.msra.mxu0 %v1819
    %2469 = vmatmul.bf16.gmra.mxu0 %v652
    %v2470 = vpop.f32.mrf.mxu0
    %v2471 = vadd.f32 %v2458, %v2470
    %v2472 = vpop.f32.mrf.mxu0
    %2473 = vdwg.mxu0
    %2474 = vmatpush.bf16.msra.mxu0 %v1879
    %2475 = vmatpush.bf16.msra.mxu0 %v1875
    %2476 = vmatpush.bf16.msra.mxu0 %v1871
    %2477 = vmatpush.bf16.msra.mxu0 %v1867
    %2478 = vmatpush.bf16.msra.mxu0 %v1863
    %2479 = vmatpush.bf16.msra.mxu0 %v1859
    %2480 = vmatpush.bf16.msra.mxu0 %v1855
    %2481 = vmatpush.bf16.msra.mxu0 %v1851
    %2482 = vmatmul.bf16.gmra.mxu0 %v653
    %v2483 = vpop.f32.mrf.mxu0
    %v2484 = vadd.f32 %v2471, %v2483
    %v2485 = vpop.f32.mrf.mxu0
    %2486 = vdwg.mxu0
    %2487 = vmatpush.bf16.msra.mxu0 %v1911
    %2488 = vmatpush.bf16.msra.mxu0 %v1907
    %2489 = vmatpush.bf16.msra.mxu0 %v1903
    %2490 = vmatpush.bf16.msra.mxu0 %v1899
    %2491 = vmatpush.bf16.msra.mxu0 %v1895
    %2492 = vmatpush.bf16.msra.mxu0 %v1891
    %2493 = vmatpush.bf16.msra.mxu0 %v1887
    %2494 = vmatpush.bf16.msra.mxu0 %v1883
    %2495 = vmatmul.bf16.gmra.mxu0 %v654
    %v2496 = vpop.f32.mrf.mxu0
    %v2497 = vadd.f32 %v2484, %v2496
    %v2498 = vpop.f32.mrf.mxu0
    %2499 = vdwg.mxu0
    %2500 = vmatpush.bf16.msra.mxu0 %v1943
    %2501 = vmatpush.bf16.msra.mxu0 %v1939
    %2502 = vmatpush.bf16.msra.mxu0 %v1935
    %2503 = vmatpush.bf16.msra.mxu0 %v1931
    %2504 = vmatpush.bf16.msra.mxu0 %v1927
    %2505 = vmatpush.bf16.msra.mxu0 %v1923
    %2506 = vmatpush.bf16.msra.mxu0 %v1919
    %2507 = vmatpush.bf16.msra.mxu0 %v1915
    %2508 = vmatmul.bf16.gmra.mxu0 %v655
    %v2509 = vpop.f32.mrf.mxu0
    %v2510 = vadd.f32 %v2497, %v2509
    %v2511 = vpop.f32.mrf.mxu0
    %2512 = vdwg.mxu0
    %2513 = vmatpush.bf16.msra.mxu0 %v1720
    %2514 = vmatpush.bf16.msra.mxu0 %v1716
    %2515 = vmatpush.bf16.msra.mxu0 %v1712
    %2516 = vmatpush.bf16.msra.mxu0 %v1708
    %2517 = vmatpush.bf16.msra.mxu0 %v1704
    %2518 = vmatpush.bf16.msra.mxu0 %v1700
    %2519 = vmatpush.bf16.msra.mxu0 %v1696
    %2520 = vmatpush.bf16.msra.mxu0 %v1692
    %2521 = vmatmul.bf16.gmra.mxu0 %v648
    %v2522 = vpop.f32.mrf.mxu0
    %v2523 = vadd.f32 %v916, %v2522
    %v2524 = vpop.f32.mrf.mxu0
    %2525 = vdwg.mxu0
    %2526 = vmatpush.bf16.msra.mxu0 %v1752
    %2527 = vmatpush.bf16.msra.mxu0 %v1748
    %2528 = vmatpush.bf16.msra.mxu0 %v1744
    %2529 = vmatpush.bf16.msra.mxu0 %v1740
    %2530 = vmatpush.bf16.msra.mxu0 %v1736
    %2531 = vmatpush.bf16.msra.mxu0 %v1732
    %2532 = vmatpush.bf16.msra.mxu0 %v1728
    %2533 = vmatpush.bf16.msra.mxu0 %v1724
    %2534 = vmatmul.bf16.gmra.mxu0 %v649
    %v2535 = vpop.f32.mrf.mxu0
    %v2536 = vadd.f32 %v2523, %v2535
    %v2537 = vpop.f32.mrf.mxu0
    %2538 = vdwg.mxu0
    %2539 = vmatpush.bf16.msra.mxu0 %v1784
    %2540 = vmatpush.bf16.msra.mxu0 %v1780
    %2541 = vmatpush.bf16.msra.mxu0 %v1776
    %2542 = vmatpush.bf16.msra.mxu0 %v1772
    %2543 = vmatpush.bf16.msra.mxu0 %v1768
    %2544 = vmatpush.bf16.msra.mxu0 %v1764
    %2545 = vmatpush.bf16.msra.mxu0 %v1760
    %2546 = vmatpush.bf16.msra.mxu0 %v1756
    %2547 = vmatmul.bf16.gmra.mxu0 %v650
    %v2548 = vpop.f32.mrf.mxu0
    %v2549 = vadd.f32 %v2536, %v2548
    %v2550 = vpop.f32.mrf.mxu0
    %2551 = vdwg.mxu0
    %2552 = vmatpush.bf16.msra.mxu0 %v1816
    %2553 = vmatpush.bf16.msra.mxu0 %v1812
    %2554 = vmatpush.bf16.msra.mxu0 %v1808
    %2555 = vmatpush.bf16.msra.mxu0 %v1804
    %2556 = vmatpush.bf16.msra.mxu0 %v1800
    %2557 = vmatpush.bf16.msra.mxu0 %v1796
    %2558 = vmatpush.bf16.msra.mxu0 %v1792
    %2559 = vmatpush.bf16.msra.mxu0 %v1788
    %2560 = vmatmul.bf16.gmra.mxu0 %v651
    %v2561 = vpop.f32.mrf.mxu0
    %v2562 = vadd.f32 %v2549, %v2561
    %v2563 = vpop.f32.mrf.mxu0
    %2564 = vdwg.mxu0
    %2565 = vmatpush.bf16.msra.mxu0 %v1848
    %2566 = vmatpush.bf16.msra.mxu0 %v1844
    %2567 = vmatpush.bf16.msra.mxu0 %v1840
    %2568 = vmatpush.bf16.msra.mxu0 %v1836
    %2569 = vmatpush.bf16.msra.mxu0 %v1832
    %2570 = vmatpush.bf16.msra.mxu0 %v1828
    %2571 = vmatpush.bf16.msra.mxu0 %v1824
    %2572 = vmatpush.bf16.msra.mxu0 %v1820
    %2573 = vmatmul.bf16.gmra.mxu0 %v652
    %v2574 = vpop.f32.mrf.mxu0
    %v2575 = vadd.f32 %v2562, %v2574
    %v2576 = vpop.f32.mrf.mxu0
    %2577 = vdwg.mxu0
    %2578 = vmatpush.bf16.msra.mxu0 %v1880
    %2579 = vmatpush.bf16.msra.mxu0 %v1876
    %2580 = vmatpush.bf16.msra.mxu0 %v1872
    %2581 = vmatpush.bf16.msra.mxu0 %v1868
    %2582 = vmatpush.bf16.msra.mxu0 %v1864
    %2583 = vmatpush.bf16.msra.mxu0 %v1860
    %2584 = vmatpush.bf16.msra.mxu0 %v1856
    %2585 = vmatpush.bf16.msra.mxu0 %v1852
    %2586 = vmatmul.bf16.gmra.mxu0 %v653
    %v2587 = vpop.f32.mrf.mxu0
    %v2588 = vadd.f32 %v2575, %v2587
    %v2589 = vpop.f32.mrf.mxu0
    %2590 = vdwg.mxu0
    %2591 = vmatpush.bf16.msra.mxu0 %v1912
    %2592 = vmatpush.bf16.msra.mxu0 %v1908
    %2593 = vmatpush.bf16.msra.mxu0 %v1904
    %2594 = vmatpush.bf16.msra.mxu0 %v1900
    %2595 = vmatpush.bf16.msra.mxu0 %v1896
    %2596 = vmatpush.bf16.msra.mxu0 %v1892
    %2597 = vmatpush.bf16.msra.mxu0 %v1888
    %2598 = vmatpush.bf16.msra.mxu0 %v1884
    %2599 = vmatmul.bf16.gmra.mxu0 %v654
    %v2600 = vpop.f32.mrf.mxu0
    %v2601 = vadd.f32 %v2588, %v2600
    %v2602 = vpop.f32.mrf.mxu0
    %2603 = vdwg.mxu0
    %2604 = vmatpush.bf16.msra.mxu0 %v1944
    %2605 = vmatpush.bf16.msra.mxu0 %v1940
    %2606 = vmatpush.bf16.msra.mxu0 %v1936
    %2607 = vmatpush.bf16.msra.mxu0 %v1932
    %2608 = vmatpush.bf16.msra.mxu0 %v1928
    %2609 = vmatpush.bf16.msra.mxu0 %v1924
    %2610 = vmatpush.bf16.msra.mxu0 %v1920
    %2611 = vmatpush.bf16.msra.mxu0 %v1916
    %2612 = vmatmul.bf16.gmra.mxu0 %v655
    %v2613 = vpop.f32.mrf.mxu0
    %v2614 = vadd.f32 %v2601, %v2613
    %v2615 = vpop.f32.mrf.mxu0
    %2616 = vdwg.mxu0
    %vm2617 = vcmp.gt.f32.partialorder %v2302, 0.0
    %vm2618 = vcmp.gt.f32.partialorder %v2406, 0.0
    %vm2619 = vcmp.gt.f32.partialorder %v2510, 0.0
    %vm2620 = vcmp.gt.f32.partialorder %v2614, 0.0
    %v2621 = vmul.f32 %v2302, 0.2
    %v2622 = vmul.f32 %v2406, 0.2
    %v2623 = vmul.f32 %v2510, 0.2
    %v2624 = vmul.f32 %v2614, 0.2
    %v2625 = vsel %vm2617, %v2302, %v2621
    %v2626 = vsel %vm2618, %v2406, %v2622
    %v2627 = vsel %vm2619, %v2510, %v2623
    %v2628 = vsel %vm2620, %v2614, %v2624
    %v2629 = vpack.c.bf16 %v2625, %v2625
    %v2630 = vpack.c.bf16 %v2626, %v2626
    %v2631 = vpack.c.bf16 %v2627, %v2627
    %v2632 = vpack.c.bf16 %v2628, %v2628
    %v2633 = vld [vmem:[#allocation8] sm:$0xff]
    %v2634 = vld [vmem:[#allocation8 + $0x8] sm:$0xff]
    %v2635 = vld [vmem:[#allocation8 + $0x10] sm:$0xff]
    %v2636 = vld [vmem:[#allocation8 + $0x18] sm:$0xff]
    %v2637 = vld [vmem:[#allocation8 + $0x20] sm:$0xff]
    %v2638 = vld [vmem:[#allocation8 + $0x28] sm:$0xff]
    %v2639 = vld [vmem:[#allocation8 + $0x30] sm:$0xff]
    %v2640 = vld [vmem:[#allocation8 + $0x38] sm:$0xff]
    %v2641 = vld [vmem:[#allocation8 + $0x40] sm:$0xff]
    %v2642 = vld [vmem:[#allocation8 + $0x48] sm:$0xff]
    %v2643 = vld [vmem:[#allocation8 + $0x50] sm:$0xff]
    %v2644 = vld [vmem:[#allocation8 + $0x58] sm:$0xff]
    %v2645 = vld [vmem:[#allocation8 + $0x60] sm:$0xff]
    %v2646 = vld [vmem:[#allocation8 + $0x68] sm:$0xff]
    %v2647 = vld [vmem:[#allocation8 + $0x70] sm:$0xff]
    %v2648 = vld [vmem:[#allocation8 + $0x78] sm:$0xff]
    %v2649 = vld [vmem:[#allocation8 + $0x80] sm:$0xff]
    %v2650 = vld [vmem:[#allocation8 + $0x88] sm:$0xff]
    %v2651 = vld [vmem:[#allocation8 + $0x90] sm:$0xff]
    %v2652 = vld [vmem:[#allocation8 + $0x98] sm:$0xff]
    %v2653 = vld [vmem:[#allocation8 + $0xa0] sm:$0xff]
    %v2654 = vld [vmem:[#allocation8 + $0xa8] sm:$0xff]
    %v2655 = vld [vmem:[#allocation8 + $0xb0] sm:$0xff]
    %v2656 = vld [vmem:[#allocation8 + $0xb8] sm:$0xff]
    %v2657 = vld [vmem:[#allocation8 + $0xc0] sm:$0xff]
    %v2658 = vld [vmem:[#allocation8 + $0xc8] sm:$0xff]
    %v2659 = vld [vmem:[#allocation8 + $0xd0] sm:$0xff]
    %v2660 = vld [vmem:[#allocation8 + $0xd8] sm:$0xff]
    %v2661 = vld [vmem:[#allocation8 + $0xe0] sm:$0xff]
    %v2662 = vld [vmem:[#allocation8 + $0xe8] sm:$0xff]
    %v2663 = vld [vmem:[#allocation8 + $0xf0] sm:$0xff]
    %v2664 = vld [vmem:[#allocation8 + $0xf8] sm:$0xff]
    %v2665 = vld [vmem:[#allocation8 + $0x100] sm:$0xff]
    %v2666 = vld [vmem:[#allocation8 + $0x108] sm:$0xff]
    %v2667 = vld [vmem:[#allocation8 + $0x110] sm:$0xff]
    %v2668 = vld [vmem:[#allocation8 + $0x118] sm:$0xff]
    %v2669 = vld [vmem:[#allocation8 + $0x120] sm:$0xff]
    %v2670 = vld [vmem:[#allocation8 + $0x128] sm:$0xff]
    %v2671 = vld [vmem:[#allocation8 + $0x130] sm:$0xff]
    %v2672 = vld [vmem:[#allocation8 + $0x138] sm:$0xff]
    %v2673 = vld [vmem:[#allocation8 + $0x140] sm:$0xff]
    %v2674 = vld [vmem:[#allocation8 + $0x148] sm:$0xff]
    %v2675 = vld [vmem:[#allocation8 + $0x150] sm:$0xff]
    %v2676 = vld [vmem:[#allocation8 + $0x158] sm:$0xff]
    %v2677 = vld [vmem:[#allocation8 + $0x160] sm:$0xff]
    %v2678 = vld [vmem:[#allocation8 + $0x168] sm:$0xff]
    %v2679 = vld [vmem:[#allocation8 + $0x170] sm:$0xff]
    %v2680 = vld [vmem:[#allocation8 + $0x178] sm:$0xff]
    %v2681 = vld [vmem:[#allocation8 + $0x180] sm:$0xff]
    %v2682 = vld [vmem:[#allocation8 + $0x188] sm:$0xff]
    %v2683 = vld [vmem:[#allocation8 + $0x190] sm:$0xff]
    %v2684 = vld [vmem:[#allocation8 + $0x198] sm:$0xff]
    %v2685 = vld [vmem:[#allocation8 + $0x1a0] sm:$0xff]
    %v2686 = vld [vmem:[#allocation8 + $0x1a8] sm:$0xff]
    %v2687 = vld [vmem:[#allocation8 + $0x1b0] sm:$0xff]
    %v2688 = vld [vmem:[#allocation8 + $0x1b8] sm:$0xff]
    %v2689 = vld [vmem:[#allocation8 + $0x1c0] sm:$0xff]
    %v2690 = vld [vmem:[#allocation8 + $0x1c8] sm:$0xff]
    %v2691 = vld [vmem:[#allocation8 + $0x1d0] sm:$0xff]
    %v2692 = vld [vmem:[#allocation8 + $0x1d8] sm:$0xff]
    %v2693 = vld [vmem:[#allocation8 + $0x1e0] sm:$0xff]
    %v2694 = vld [vmem:[#allocation8 + $0x1e8] sm:$0xff]
    %v2695 = vld [vmem:[#allocation8 + $0x1f0] sm:$0xff]
    %v2696 = vld [vmem:[#allocation8 + $0x1f8] sm:$0xff]
    %v2697 = vld [vmem:[#allocation8 + $0x200] sm:$0xff]
    %v2698 = vld [vmem:[#allocation8 + $0x208] sm:$0xff]
    %v2699 = vld [vmem:[#allocation8 + $0x210] sm:$0xff]
    %v2700 = vld [vmem:[#allocation8 + $0x218] sm:$0xff]
    %v2701 = vld [vmem:[#allocation8 + $0x220] sm:$0xff]
    %v2702 = vld [vmem:[#allocation8 + $0x228] sm:$0xff]
    %v2703 = vld [vmem:[#allocation8 + $0x230] sm:$0xff]
    %v2704 = vld [vmem:[#allocation8 + $0x238] sm:$0xff]
    %v2705 = vld [vmem:[#allocation8 + $0x240] sm:$0xff]
    %v2706 = vld [vmem:[#allocation8 + $0x248] sm:$0xff]
    %v2707 = vld [vmem:[#allocation8 + $0x250] sm:$0xff]
    %v2708 = vld [vmem:[#allocation8 + $0x258] sm:$0xff]
    %v2709 = vld [vmem:[#allocation8 + $0x260] sm:$0xff]
    %v2710 = vld [vmem:[#allocation8 + $0x268] sm:$0xff]
    %v2711 = vld [vmem:[#allocation8 + $0x270] sm:$0xff]
    %v2712 = vld [vmem:[#allocation8 + $0x278] sm:$0xff]
    %v2713 = vld [vmem:[#allocation8 + $0x280] sm:$0xff]
    %v2714 = vld [vmem:[#allocation8 + $0x288] sm:$0xff]
    %v2715 = vld [vmem:[#allocation8 + $0x290] sm:$0xff]
    %v2716 = vld [vmem:[#allocation8 + $0x298] sm:$0xff]
    %v2717 = vld [vmem:[#allocation8 + $0x2a0] sm:$0xff]
    %v2718 = vld [vmem:[#allocation8 + $0x2a8] sm:$0xff]
    %v2719 = vld [vmem:[#allocation8 + $0x2b0] sm:$0xff]
    %v2720 = vld [vmem:[#allocation8 + $0x2b8] sm:$0xff]
    %v2721 = vld [vmem:[#allocation8 + $0x2c0] sm:$0xff]
    %v2722 = vld [vmem:[#allocation8 + $0x2c8] sm:$0xff]
    %v2723 = vld [vmem:[#allocation8 + $0x2d0] sm:$0xff]
    %v2724 = vld [vmem:[#allocation8 + $0x2d8] sm:$0xff]
    %v2725 = vld [vmem:[#allocation8 + $0x2e0] sm:$0xff]
    %v2726 = vld [vmem:[#allocation8 + $0x2e8] sm:$0xff]
    %v2727 = vld [vmem:[#allocation8 + $0x2f0] sm:$0xff]
    %v2728 = vld [vmem:[#allocation8 + $0x2f8] sm:$0xff]
    %v2729 = vld [vmem:[#allocation8 + $0x300] sm:$0xff]
    %v2730 = vld [vmem:[#allocation8 + $0x308] sm:$0xff]
    %v2731 = vld [vmem:[#allocation8 + $0x310] sm:$0xff]
    %v2732 = vld [vmem:[#allocation8 + $0x318] sm:$0xff]
    %v2733 = vld [vmem:[#allocation8 + $0x320] sm:$0xff]
    %v2734 = vld [vmem:[#allocation8 + $0x328] sm:$0xff]
    %v2735 = vld [vmem:[#allocation8 + $0x330] sm:$0xff]
    %v2736 = vld [vmem:[#allocation8 + $0x338] sm:$0xff]
    %v2737 = vld [vmem:[#allocation8 + $0x340] sm:$0xff]
    %v2738 = vld [vmem:[#allocation8 + $0x348] sm:$0xff]
    %v2739 = vld [vmem:[#allocation8 + $0x350] sm:$0xff]
    %v2740 = vld [vmem:[#allocation8 + $0x358] sm:$0xff]
    %v2741 = vld [vmem:[#allocation8 + $0x360] sm:$0xff]
    %v2742 = vld [vmem:[#allocation8 + $0x368] sm:$0xff]
    %v2743 = vld [vmem:[#allocation8 + $0x370] sm:$0xff]
    %v2744 = vld [vmem:[#allocation8 + $0x378] sm:$0xff]
    %v2745 = vld [vmem:[#allocation8 + $0x380] sm:$0xff]
    %v2746 = vld [vmem:[#allocation8 + $0x388] sm:$0xff]
    %v2747 = vld [vmem:[#allocation8 + $0x390] sm:$0xff]
    %v2748 = vld [vmem:[#allocation8 + $0x398] sm:$0xff]
    %v2749 = vld [vmem:[#allocation8 + $0x3a0] sm:$0xff]
    %v2750 = vld [vmem:[#allocation8 + $0x3a8] sm:$0xff]
    %v2751 = vld [vmem:[#allocation8 + $0x3b0] sm:$0xff]
    %v2752 = vld [vmem:[#allocation8 + $0x3b8] sm:$0xff]
    %v2753 = vld [vmem:[#allocation8 + $0x3c0] sm:$0xff]
    %v2754 = vld [vmem:[#allocation8 + $0x3c8] sm:$0xff]
    %v2755 = vld [vmem:[#allocation8 + $0x3d0] sm:$0xff]
    %v2756 = vld [vmem:[#allocation8 + $0x3d8] sm:$0xff]
    %v2757 = vld [vmem:[#allocation8 + $0x3e0] sm:$0xff]
    %v2758 = vld [vmem:[#allocation8 + $0x3e8] sm:$0xff]
    %v2759 = vld [vmem:[#allocation8 + $0x3f0] sm:$0xff]
    %v2760 = vld [vmem:[#allocation8 + $0x3f8] sm:$0xff]
    %v2762 = vperm.slane %v116, 0
    %v2763 = vperm.slane %v116, 1
    %v2764 = vperm.slane %v116, 2
    %v2765 = vperm.slane %v116, 3
    %v2898 = vunpack.c.l.b16 %v2633
    %v2899 = vunpack.c.h.b16 %v2633
    %v2900 = vunpack.c.l.b16 %v2634
    %v2901 = vunpack.c.h.b16 %v2634
    %v2902 = vunpack.c.l.b16 %v2635
    %v2903 = vunpack.c.h.b16 %v2635
    %v2904 = vunpack.c.l.b16 %v2636
    %v2905 = vunpack.c.h.b16 %v2636
    %v2906 = vunpack.c.l.b16 %v2637
    %v2907 = vunpack.c.h.b16 %v2637
    %v2908 = vunpack.c.l.b16 %v2638
    %v2909 = vunpack.c.h.b16 %v2638
    %v2910 = vunpack.c.l.b16 %v2639
    %v2911 = vunpack.c.h.b16 %v2639
    %v2912 = vunpack.c.l.b16 %v2640
    %v2913 = vunpack.c.h.b16 %v2640
    %v2914 = vunpack.c.l.b16 %v2641
    %v2915 = vunpack.c.h.b16 %v2641
    %v2916 = vunpack.c.l.b16 %v2642
    %v2917 = vunpack.c.h.b16 %v2642
    %v2918 = vunpack.c.l.b16 %v2643
    %v2919 = vunpack.c.h.b16 %v2643
    %v2920 = vunpack.c.l.b16 %v2644
    %v2921 = vunpack.c.h.b16 %v2644
    %v2922 = vunpack.c.l.b16 %v2645
    %v2923 = vunpack.c.h.b16 %v2645
    %v2924 = vunpack.c.l.b16 %v2646
    %v2925 = vunpack.c.h.b16 %v2646
    %v2926 = vunpack.c.l.b16 %v2647
    %v2927 = vunpack.c.h.b16 %v2647
    %v2928 = vunpack.c.l.b16 %v2648
    %v2929 = vunpack.c.h.b16 %v2648
    %v2930 = vunpack.c.l.b16 %v2649
    %v2931 = vunpack.c.h.b16 %v2649
    %v2932 = vunpack.c.l.b16 %v2650
    %v2933 = vunpack.c.h.b16 %v2650
    %v2934 = vunpack.c.l.b16 %v2651
    %v2935 = vunpack.c.h.b16 %v2651
    %v2936 = vunpack.c.l.b16 %v2652
    %v2937 = vunpack.c.h.b16 %v2652
    %v2938 = vunpack.c.l.b16 %v2653
    %v2939 = vunpack.c.h.b16 %v2653
    %v2940 = vunpack.c.l.b16 %v2654
    %v2941 = vunpack.c.h.b16 %v2654
    %v2942 = vunpack.c.l.b16 %v2655
    %v2943 = vunpack.c.h.b16 %v2655
    %v2944 = vunpack.c.l.b16 %v2656
    %v2945 = vunpack.c.h.b16 %v2656
    %v2946 = vunpack.c.l.b16 %v2657
    %v2947 = vunpack.c.h.b16 %v2657
    %v2948 = vunpack.c.l.b16 %v2658
    %v2949 = vunpack.c.h.b16 %v2658
    %v2950 = vunpack.c.l.b16 %v2659
    %v2951 = vunpack.c.h.b16 %v2659
    %v2952 = vunpack.c.l.b16 %v2660
    %v2953 = vunpack.c.h.b16 %v2660
    %v2954 = vunpack.c.l.b16 %v2661
    %v2955 = vunpack.c.h.b16 %v2661
    %v2956 = vunpack.c.l.b16 %v2662
    %v2957 = vunpack.c.h.b16 %v2662
    %v2958 = vunpack.c.l.b16 %v2663
    %v2959 = vunpack.c.h.b16 %v2663
    %v2960 = vunpack.c.l.b16 %v2664
    %v2961 = vunpack.c.h.b16 %v2664
    %v2962 = vunpack.c.l.b16 %v2665
    %v2963 = vunpack.c.h.b16 %v2665
    %v2964 = vunpack.c.l.b16 %v2666
    %v2965 = vunpack.c.h.b16 %v2666
    %v2966 = vunpack.c.l.b16 %v2667
    %v2967 = vunpack.c.h.b16 %v2667
    %v2968 = vunpack.c.l.b16 %v2668
    %v2969 = vunpack.c.h.b16 %v2668
    %v2970 = vunpack.c.l.b16 %v2669
    %v2971 = vunpack.c.h.b16 %v2669
    %v2972 = vunpack.c.l.b16 %v2670
    %v2973 = vunpack.c.h.b16 %v2670
    %v2974 = vunpack.c.l.b16 %v2671
    %v2975 = vunpack.c.h.b16 %v2671
    %v2976 = vunpack.c.l.b16 %v2672
    %v2977 = vunpack.c.h.b16 %v2672
    %v2978 = vunpack.c.l.b16 %v2673
    %v2979 = vunpack.c.h.b16 %v2673
    %v2980 = vunpack.c.l.b16 %v2674
    %v2981 = vunpack.c.h.b16 %v2674
    %v2982 = vunpack.c.l.b16 %v2675
    %v2983 = vunpack.c.h.b16 %v2675
    %v2984 = vunpack.c.l.b16 %v2676
    %v2985 = vunpack.c.h.b16 %v2676
    %v2986 = vunpack.c.l.b16 %v2677
    %v2987 = vunpack.c.h.b16 %v2677
    %v2988 = vunpack.c.l.b16 %v2678
    %v2989 = vunpack.c.h.b16 %v2678
    %v2990 = vunpack.c.l.b16 %v2679
    %v2991 = vunpack.c.h.b16 %v2679
    %v2992 = vunpack.c.l.b16 %v2680
    %v2993 = vunpack.c.h.b16 %v2680
    %v2994 = vunpack.c.l.b16 %v2681
    %v2995 = vunpack.c.h.b16 %v2681
    %v2996 = vunpack.c.l.b16 %v2682
    %v2997 = vunpack.c.h.b16 %v2682
    %v2998 = vunpack.c.l.b16 %v2683
    %v2999 = vunpack.c.h.b16 %v2683
    %v3000 = vunpack.c.l.b16 %v2684
    %v3001 = vunpack.c.h.b16 %v2684
    %v3002 = vunpack.c.l.b16 %v2685
    %v3003 = vunpack.c.h.b16 %v2685
    %v3004 = vunpack.c.l.b16 %v2686
    %v3005 = vunpack.c.h.b16 %v2686
    %v3006 = vunpack.c.l.b16 %v2687
    %v3007 = vunpack.c.h.b16 %v2687
    %v3008 = vunpack.c.l.b16 %v2688
    %v3009 = vunpack.c.h.b16 %v2688
    %v3010 = vunpack.c.l.b16 %v2689
    %v3011 = vunpack.c.h.b16 %v2689
    %v3012 = vunpack.c.l.b16 %v2690
    %v3013 = vunpack.c.h.b16 %v2690
    %v3014 = vunpack.c.l.b16 %v2691
    %v3015 = vunpack.c.h.b16 %v2691
    %v3016 = vunpack.c.l.b16 %v2692
    %v3017 = vunpack.c.h.b16 %v2692
    %v3018 = vunpack.c.l.b16 %v2693
    %v3019 = vunpack.c.h.b16 %v2693
    %v3020 = vunpack.c.l.b16 %v2694
    %v3021 = vunpack.c.h.b16 %v2694
    %v3022 = vunpack.c.l.b16 %v2695
    %v3023 = vunpack.c.h.b16 %v2695
    %v3024 = vunpack.c.l.b16 %v2696
    %v3025 = vunpack.c.h.b16 %v2696
    %v3026 = vunpack.c.l.b16 %v2697
    %v3027 = vunpack.c.h.b16 %v2697
    %v3028 = vunpack.c.l.b16 %v2698
    %v3029 = vunpack.c.h.b16 %v2698
    %v3030 = vunpack.c.l.b16 %v2699
    %v3031 = vunpack.c.h.b16 %v2699
    %v3032 = vunpack.c.l.b16 %v2700
    %v3033 = vunpack.c.h.b16 %v2700
    %v3034 = vunpack.c.l.b16 %v2701
    %v3035 = vunpack.c.h.b16 %v2701
    %v3036 = vunpack.c.l.b16 %v2702
    %v3037 = vunpack.c.h.b16 %v2702
    %v3038 = vunpack.c.l.b16 %v2703
    %v3039 = vunpack.c.h.b16 %v2703
    %v3040 = vunpack.c.l.b16 %v2704
    %v3041 = vunpack.c.h.b16 %v2704
    %v3042 = vunpack.c.l.b16 %v2705
    %v3043 = vunpack.c.h.b16 %v2705
    %v3044 = vunpack.c.l.b16 %v2706
    %v3045 = vunpack.c.h.b16 %v2706
    %v3046 = vunpack.c.l.b16 %v2707
    %v3047 = vunpack.c.h.b16 %v2707
    %v3048 = vunpack.c.l.b16 %v2708
    %v3049 = vunpack.c.h.b16 %v2708
    %v3050 = vunpack.c.l.b16 %v2709
    %v3051 = vunpack.c.h.b16 %v2709
    %v3052 = vunpack.c.l.b16 %v2710
    %v3053 = vunpack.c.h.b16 %v2710
    %v3054 = vunpack.c.l.b16 %v2711
    %v3055 = vunpack.c.h.b16 %v2711
    %v3056 = vunpack.c.l.b16 %v2712
    %v3057 = vunpack.c.h.b16 %v2712
    %v3058 = vunpack.c.l.b16 %v2713
    %v3059 = vunpack.c.h.b16 %v2713
    %v3060 = vunpack.c.l.b16 %v2714
    %v3061 = vunpack.c.h.b16 %v2714
    %v3062 = vunpack.c.l.b16 %v2715
    %v3063 = vunpack.c.h.b16 %v2715
    %v3064 = vunpack.c.l.b16 %v2716
    %v3065 = vunpack.c.h.b16 %v2716
    %v3066 = vunpack.c.l.b16 %v2717
    %v3067 = vunpack.c.h.b16 %v2717
    %v3068 = vunpack.c.l.b16 %v2718
    %v3069 = vunpack.c.h.b16 %v2718
    %v3070 = vunpack.c.l.b16 %v2719
    %v3071 = vunpack.c.h.b16 %v2719
    %v3072 = vunpack.c.l.b16 %v2720
    %v3073 = vunpack.c.h.b16 %v2720
    %v3074 = vunpack.c.l.b16 %v2721
    %v3075 = vunpack.c.h.b16 %v2721
    %v3076 = vunpack.c.l.b16 %v2722
    %v3077 = vunpack.c.h.b16 %v2722
    %v3078 = vunpack.c.l.b16 %v2723
    %v3079 = vunpack.c.h.b16 %v2723
    %v3080 = vunpack.c.l.b16 %v2724
    %v3081 = vunpack.c.h.b16 %v2724
    %v3082 = vunpack.c.l.b16 %v2725
    %v3083 = vunpack.c.h.b16 %v2725
    %v3084 = vunpack.c.l.b16 %v2726
    %v3085 = vunpack.c.h.b16 %v2726
    %v3086 = vunpack.c.l.b16 %v2727
    %v3087 = vunpack.c.h.b16 %v2727
    %v3088 = vunpack.c.l.b16 %v2728
    %v3089 = vunpack.c.h.b16 %v2728
    %v3090 = vunpack.c.l.b16 %v2729
    %v3091 = vunpack.c.h.b16 %v2729
    %v3092 = vunpack.c.l.b16 %v2730
    %v3093 = vunpack.c.h.b16 %v2730
    %v3094 = vunpack.c.l.b16 %v2731
    %v3095 = vunpack.c.h.b16 %v2731
    %v3096 = vunpack.c.l.b16 %v2732
    %v3097 = vunpack.c.h.b16 %v2732
    %v3098 = vunpack.c.l.b16 %v2733
    %v3099 = vunpack.c.h.b16 %v2733
    %v3100 = vunpack.c.l.b16 %v2734
    %v3101 = vunpack.c.h.b16 %v2734
    %v3102 = vunpack.c.l.b16 %v2735
    %v3103 = vunpack.c.h.b16 %v2735
    %v3104 = vunpack.c.l.b16 %v2736
    %v3105 = vunpack.c.h.b16 %v2736
    %v3106 = vunpack.c.l.b16 %v2737
    %v3107 = vunpack.c.h.b16 %v2737
    %v3108 = vunpack.c.l.b16 %v2738
    %v3109 = vunpack.c.h.b16 %v2738
    %v3110 = vunpack.c.l.b16 %v2739
    %v3111 = vunpack.c.h.b16 %v2739
    %v3112 = vunpack.c.l.b16 %v2740
    %v3113 = vunpack.c.h.b16 %v2740
    %v3114 = vunpack.c.l.b16 %v2741
    %v3115 = vunpack.c.h.b16 %v2741
    %v3116 = vunpack.c.l.b16 %v2742
    %v3117 = vunpack.c.h.b16 %v2742
    %v3118 = vunpack.c.l.b16 %v2743
    %v3119 = vunpack.c.h.b16 %v2743
    %v3120 = vunpack.c.l.b16 %v2744
    %v3121 = vunpack.c.h.b16 %v2744
    %v3122 = vunpack.c.l.b16 %v2745
    %v3123 = vunpack.c.h.b16 %v2745
    %v3124 = vunpack.c.l.b16 %v2746
    %v3125 = vunpack.c.h.b16 %v2746
    %v3126 = vunpack.c.l.b16 %v2747
    %v3127 = vunpack.c.h.b16 %v2747
    %v3128 = vunpack.c.l.b16 %v2748
    %v3129 = vunpack.c.h.b16 %v2748
    %v3130 = vunpack.c.l.b16 %v2749
    %v3131 = vunpack.c.h.b16 %v2749
    %v3132 = vunpack.c.l.b16 %v2750
    %v3133 = vunpack.c.h.b16 %v2750
    %v3134 = vunpack.c.l.b16 %v2751
    %v3135 = vunpack.c.h.b16 %v2751
    %v3136 = vunpack.c.l.b16 %v2752
    %v3137 = vunpack.c.h.b16 %v2752
    %v3138 = vunpack.c.l.b16 %v2753
    %v3139 = vunpack.c.h.b16 %v2753
    %v3140 = vunpack.c.l.b16 %v2754
    %v3141 = vunpack.c.h.b16 %v2754
    %v3142 = vunpack.c.l.b16 %v2755
    %v3143 = vunpack.c.h.b16 %v2755
    %v3144 = vunpack.c.l.b16 %v2756
    %v3145 = vunpack.c.h.b16 %v2756
    %v3146 = vunpack.c.l.b16 %v2757
    %v3147 = vunpack.c.h.b16 %v2757
    %v3148 = vunpack.c.l.b16 %v2758
    %v3149 = vunpack.c.h.b16 %v2758
    %v3150 = vunpack.c.l.b16 %v2759
    %v3151 = vunpack.c.h.b16 %v2759
    %v3152 = vunpack.c.l.b16 %v2760
    %v3153 = vunpack.c.h.b16 %v2760
    %v3154 = vpack.c.b16 %v2902, %v2898
    %v3155 = vpack.c.b16 %v2903, %v2899
    %v3156 = vpack.c.b16 %v2904, %v2900
    %v3157 = vpack.c.b16 %v2905, %v2901
    %v3158 = vpack.c.b16 %v2910, %v2906
    %v3159 = vpack.c.b16 %v2911, %v2907
    %v3160 = vpack.c.b16 %v2912, %v2908
    %v3161 = vpack.c.b16 %v2913, %v2909
    %v3162 = vpack.c.b16 %v2918, %v2914
    %v3163 = vpack.c.b16 %v2919, %v2915
    %v3164 = vpack.c.b16 %v2920, %v2916
    %v3165 = vpack.c.b16 %v2921, %v2917
    %v3166 = vpack.c.b16 %v2926, %v2922
    %v3167 = vpack.c.b16 %v2927, %v2923
    %v3168 = vpack.c.b16 %v2928, %v2924
    %v3169 = vpack.c.b16 %v2929, %v2925
    %v3170 = vpack.c.b16 %v2934, %v2930
    %v3171 = vpack.c.b16 %v2935, %v2931
    %v3172 = vpack.c.b16 %v2936, %v2932
    %v3173 = vpack.c.b16 %v2937, %v2933
    %v3174 = vpack.c.b16 %v2942, %v2938
    %v3175 = vpack.c.b16 %v2943, %v2939
    %v3176 = vpack.c.b16 %v2944, %v2940
    %v3177 = vpack.c.b16 %v2945, %v2941
    %v3178 = vpack.c.b16 %v2950, %v2946
    %v3179 = vpack.c.b16 %v2951, %v2947
    %v3180 = vpack.c.b16 %v2952, %v2948
    %v3181 = vpack.c.b16 %v2953, %v2949
    %v3182 = vpack.c.b16 %v2958, %v2954
    %v3183 = vpack.c.b16 %v2959, %v2955
    %v3184 = vpack.c.b16 %v2960, %v2956
    %v3185 = vpack.c.b16 %v2961, %v2957
    %v3186 = vpack.c.b16 %v2966, %v2962
    %v3187 = vpack.c.b16 %v2967, %v2963
    %v3188 = vpack.c.b16 %v2968, %v2964
    %v3189 = vpack.c.b16 %v2969, %v2965
    %v3190 = vpack.c.b16 %v2974, %v2970
    %v3191 = vpack.c.b16 %v2975, %v2971
    %v3192 = vpack.c.b16 %v2976, %v2972
    %v3193 = vpack.c.b16 %v2977, %v2973
    %v3194 = vpack.c.b16 %v2982, %v2978
    %v3195 = vpack.c.b16 %v2983, %v2979
    %v3196 = vpack.c.b16 %v2984, %v2980
    %v3197 = vpack.c.b16 %v2985, %v2981
    %v3198 = vpack.c.b16 %v2990, %v2986
    %v3199 = vpack.c.b16 %v2991, %v2987
    %v3200 = vpack.c.b16 %v2992, %v2988
    %v3201 = vpack.c.b16 %v2993, %v2989
    %v3202 = vpack.c.b16 %v2998, %v2994
    %v3203 = vpack.c.b16 %v2999, %v2995
    %v3204 = vpack.c.b16 %v3000, %v2996
    %v3205 = vpack.c.b16 %v3001, %v2997
    %v3206 = vpack.c.b16 %v3006, %v3002
    %v3207 = vpack.c.b16 %v3007, %v3003
    %v3208 = vpack.c.b16 %v3008, %v3004
    %v3209 = vpack.c.b16 %v3009, %v3005
    %v3210 = vpack.c.b16 %v3014, %v3010
    %v3211 = vpack.c.b16 %v3015, %v3011
    %v3212 = vpack.c.b16 %v3016, %v3012
    %v3213 = vpack.c.b16 %v3017, %v3013
    %v3214 = vpack.c.b16 %v3022, %v3018
    %v3215 = vpack.c.b16 %v3023, %v3019
    %v3216 = vpack.c.b16 %v3024, %v3020
    %v3217 = vpack.c.b16 %v3025, %v3021
    %v3218 = vpack.c.b16 %v3030, %v3026
    %v3219 = vpack.c.b16 %v3031, %v3027
    %v3220 = vpack.c.b16 %v3032, %v3028
    %v3221 = vpack.c.b16 %v3033, %v3029
    %v3222 = vpack.c.b16 %v3038, %v3034
    %v3223 = vpack.c.b16 %v3039, %v3035
    %v3224 = vpack.c.b16 %v3040, %v3036
    %v3225 = vpack.c.b16 %v3041, %v3037
    %v3226 = vpack.c.b16 %v3046, %v3042
    %v3227 = vpack.c.b16 %v3047, %v3043
    %v3228 = vpack.c.b16 %v3048, %v3044
    %v3229 = vpack.c.b16 %v3049, %v3045
    %v3230 = vpack.c.b16 %v3054, %v3050
    %v3231 = vpack.c.b16 %v3055, %v3051
    %v3232 = vpack.c.b16 %v3056, %v3052
    %v3233 = vpack.c.b16 %v3057, %v3053
    %v3234 = vpack.c.b16 %v3062, %v3058
    %v3235 = vpack.c.b16 %v3063, %v3059
    %v3236 = vpack.c.b16 %v3064, %v3060
    %v3237 = vpack.c.b16 %v3065, %v3061
    %v3238 = vpack.c.b16 %v3070, %v3066
    %v3239 = vpack.c.b16 %v3071, %v3067
    %v3240 = vpack.c.b16 %v3072, %v3068
    %v3241 = vpack.c.b16 %v3073, %v3069
    %v3242 = vpack.c.b16 %v3078, %v3074
    %v3243 = vpack.c.b16 %v3079, %v3075
    %v3244 = vpack.c.b16 %v3080, %v3076
    %v3245 = vpack.c.b16 %v3081, %v3077
    %v3246 = vpack.c.b16 %v3086, %v3082
    %v3247 = vpack.c.b16 %v3087, %v3083
    %v3248 = vpack.c.b16 %v3088, %v3084
    %v3249 = vpack.c.b16 %v3089, %v3085
    %v3250 = vpack.c.b16 %v3094, %v3090
    %v3251 = vpack.c.b16 %v3095, %v3091
    %v3252 = vpack.c.b16 %v3096, %v3092
    %v3253 = vpack.c.b16 %v3097, %v3093
    %v3254 = vpack.c.b16 %v3102, %v3098
    %v3255 = vpack.c.b16 %v3103, %v3099
    %v3256 = vpack.c.b16 %v3104, %v3100
    %v3257 = vpack.c.b16 %v3105, %v3101
    %v3258 = vpack.c.b16 %v3110, %v3106
    %v3259 = vpack.c.b16 %v3111, %v3107
    %v3260 = vpack.c.b16 %v3112, %v3108
    %v3261 = vpack.c.b16 %v3113, %v3109
    %v3262 = vpack.c.b16 %v3118, %v3114
    %v3263 = vpack.c.b16 %v3119, %v3115
    %v3264 = vpack.c.b16 %v3120, %v3116
    %v3265 = vpack.c.b16 %v3121, %v3117
    %v3266 = vpack.c.b16 %v3126, %v3122
    %v3267 = vpack.c.b16 %v3127, %v3123
    %v3268 = vpack.c.b16 %v3128, %v3124
    %v3269 = vpack.c.b16 %v3129, %v3125
    %v3270 = vpack.c.b16 %v3134, %v3130
    %v3271 = vpack.c.b16 %v3135, %v3131
    %v3272 = vpack.c.b16 %v3136, %v3132
    %v3273 = vpack.c.b16 %v3137, %v3133
    %v3274 = vpack.c.b16 %v3142, %v3138
    %v3275 = vpack.c.b16 %v3143, %v3139
    %v3276 = vpack.c.b16 %v3144, %v3140
    %v3277 = vpack.c.b16 %v3145, %v3141
    %v3278 = vpack.c.b16 %v3150, %v3146
    %v3279 = vpack.c.b16 %v3151, %v3147
    %v3280 = vpack.c.b16 %v3152, %v3148
    %v3281 = vpack.c.b16 %v3153, %v3149
    %3410 = vmatpush.bf16.msra.mxu0 %v3182
    %3411 = vmatpush.bf16.msra.mxu0 %v3178
    %3412 = vmatpush.bf16.msra.mxu0 %v3174
    %3413 = vmatpush.bf16.msra.mxu0 %v3170
    %3414 = vmatpush.bf16.msra.mxu0 %v3166
    %3415 = vmatpush.bf16.msra.mxu0 %v3162
    %3416 = vmatpush.bf16.msra.mxu0 %v3158
    %3417 = vmatpush.bf16.msra.mxu0 %v3154
    %3418 = vmatmul.bf16.gmra.mxu0 %v2629
    %v3419 = vpop.f32.mrf.mxu0
    %v3420 = vadd.f32 %v2762, %v3419
    %v3421 = vpop.f32.mrf.mxu0
    %3422 = vdwg.mxu0
    %3423 = vmatpush.bf16.msra.mxu0 %v3214
    %3424 = vmatpush.bf16.msra.mxu0 %v3210
    %3425 = vmatpush.bf16.msra.mxu0 %v3206
    %3426 = vmatpush.bf16.msra.mxu0 %v3202
    %3427 = vmatpush.bf16.msra.mxu0 %v3198
    %3428 = vmatpush.bf16.msra.mxu0 %v3194
    %3429 = vmatpush.bf16.msra.mxu0 %v3190
    %3430 = vmatpush.bf16.msra.mxu0 %v3186
    %3431 = vmatmul.bf16.gmra.mxu0 %v2630
    %v3432 = vpop.f32.mrf.mxu0
    %v3433 = vadd.f32 %v3420, %v3432
    %v3434 = vpop.f32.mrf.mxu0
    %3435 = vdwg.mxu0
    %3436 = vmatpush.bf16.msra.mxu0 %v3246
    %3437 = vmatpush.bf16.msra.mxu0 %v3242
    %3438 = vmatpush.bf16.msra.mxu0 %v3238
    %3439 = vmatpush.bf16.msra.mxu0 %v3234
    %3440 = vmatpush.bf16.msra.mxu0 %v3230
    %3441 = vmatpush.bf16.msra.mxu0 %v3226
    %3442 = vmatpush.bf16.msra.mxu0 %v3222
    %3443 = vmatpush.bf16.msra.mxu0 %v3218
    %3444 = vmatmul.bf16.gmra.mxu0 %v2631
    %v3445 = vpop.f32.mrf.mxu0
    %v3446 = vadd.f32 %v3433, %v3445
    %v3447 = vpop.f32.mrf.mxu0
    %3448 = vdwg.mxu0
    %3449 = vmatpush.bf16.msra.mxu0 %v3278
    %3450 = vmatpush.bf16.msra.mxu0 %v3274
    %3451 = vmatpush.bf16.msra.mxu0 %v3270
    %3452 = vmatpush.bf16.msra.mxu0 %v3266
    %3453 = vmatpush.bf16.msra.mxu0 %v3262
    %3454 = vmatpush.bf16.msra.mxu0 %v3258
    %3455 = vmatpush.bf16.msra.mxu0 %v3254
    %3456 = vmatpush.bf16.msra.mxu0 %v3250
    %3457 = vmatmul.bf16.gmra.mxu0 %v2632
    %v3458 = vpop.f32.mrf.mxu0
    %v3459 = vadd.f32 %v3446, %v3458
    %v3460 = vpop.f32.mrf.mxu0
    %3461 = vdwg.mxu0
    %3462 = vmatpush.bf16.msra.mxu0 %v3183
    %3463 = vmatpush.bf16.msra.mxu0 %v3179
    %3464 = vmatpush.bf16.msra.mxu0 %v3175
    %3465 = vmatpush.bf16.msra.mxu0 %v3171
    %3466 = vmatpush.bf16.msra.mxu0 %v3167
    %3467 = vmatpush.bf16.msra.mxu0 %v3163
    %3468 = vmatpush.bf16.msra.mxu0 %v3159
    %3469 = vmatpush.bf16.msra.mxu0 %v3155
    %3470 = vmatmul.bf16.gmra.mxu0 %v2629
    %v3471 = vpop.f32.mrf.mxu0
    %v3472 = vadd.f32 %v2763, %v3471
    %v3473 = vpop.f32.mrf.mxu0
    %3474 = vdwg.mxu0
    %3475 = vmatpush.bf16.msra.mxu0 %v3215
    %3476 = vmatpush.bf16.msra.mxu0 %v3211
    %3477 = vmatpush.bf16.msra.mxu0 %v3207
    %3478 = vmatpush.bf16.msra.mxu0 %v3203
    %3479 = vmatpush.bf16.msra.mxu0 %v3199
    %3480 = vmatpush.bf16.msra.mxu0 %v3195
    %3481 = vmatpush.bf16.msra.mxu0 %v3191
    %3482 = vmatpush.bf16.msra.mxu0 %v3187
    %3483 = vmatmul.bf16.gmra.mxu0 %v2630
    %v3484 = vpop.f32.mrf.mxu0
    %v3485 = vadd.f32 %v3472, %v3484
    %v3486 = vpop.f32.mrf.mxu0
    %3487 = vdwg.mxu0
    %3488 = vmatpush.bf16.msra.mxu0 %v3247
    %3489 = vmatpush.bf16.msra.mxu0 %v3243
    %3490 = vmatpush.bf16.msra.mxu0 %v3239
    %3491 = vmatpush.bf16.msra.mxu0 %v3235
    %3492 = vmatpush.bf16.msra.mxu0 %v3231
    %3493 = vmatpush.bf16.msra.mxu0 %v3227
    %3494 = vmatpush.bf16.msra.mxu0 %v3223
    %3495 = vmatpush.bf16.msra.mxu0 %v3219
    %3496 = vmatmul.bf16.gmra.mxu0 %v2631
    %v3497 = vpop.f32.mrf.mxu0
    %v3498 = vadd.f32 %v3485, %v3497
    %v3499 = vpop.f32.mrf.mxu0
    %3500 = vdwg.mxu0
    %3501 = vmatpush.bf16.msra.mxu0 %v3279
    %3502 = vmatpush.bf16.msra.mxu0 %v3275
    %3503 = vmatpush.bf16.msra.mxu0 %v3271
    %3504 = vmatpush.bf16.msra.mxu0 %v3267
    %3505 = vmatpush.bf16.msra.mxu0 %v3263
    %3506 = vmatpush.bf16.msra.mxu0 %v3259
    %3507 = vmatpush.bf16.msra.mxu0 %v3255
    %3508 = vmatpush.bf16.msra.mxu0 %v3251
    %3509 = vmatmul.bf16.gmra.mxu0 %v2632
    %v3510 = vpop.f32.mrf.mxu0
    %v3511 = vadd.f32 %v3498, %v3510
    %v3512 = vpop.f32.mrf.mxu0
    %3513 = vdwg.mxu0
    %3514 = vmatpush.bf16.msra.mxu0 %v3184
    %3515 = vmatpush.bf16.msra.mxu0 %v3180
    %3516 = vmatpush.bf16.msra.mxu0 %v3176
    %3517 = vmatpush.bf16.msra.mxu0 %v3172
    %3518 = vmatpush.bf16.msra.mxu0 %v3168
    %3519 = vmatpush.bf16.msra.mxu0 %v3164
    %3520 = vmatpush.bf16.msra.mxu0 %v3160
    %3521 = vmatpush.bf16.msra.mxu0 %v3156
    %3522 = vmatmul.bf16.gmra.mxu0 %v2629
    %v3523 = vpop.f32.mrf.mxu0
    %v3524 = vadd.f32 %v2764, %v3523
    %v3525 = vpop.f32.mrf.mxu0
    %3526 = vdwg.mxu0
    %3527 = vmatpush.bf16.msra.mxu0 %v3216
    %3528 = vmatpush.bf16.msra.mxu0 %v3212
    %3529 = vmatpush.bf16.msra.mxu0 %v3208
    %3530 = vmatpush.bf16.msra.mxu0 %v3204
    %3531 = vmatpush.bf16.msra.mxu0 %v3200
    %3532 = vmatpush.bf16.msra.mxu0 %v3196
    %3533 = vmatpush.bf16.msra.mxu0 %v3192
    %3534 = vmatpush.bf16.msra.mxu0 %v3188
    %3535 = vmatmul.bf16.gmra.mxu0 %v2630
    %v3536 = vpop.f32.mrf.mxu0
    %v3537 = vadd.f32 %v3524, %v3536
    %v3538 = vpop.f32.mrf.mxu0
    %3539 = vdwg.mxu0
    %3540 = vmatpush.bf16.msra.mxu0 %v3248
    %3541 = vmatpush.bf16.msra.mxu0 %v3244
    %3542 = vmatpush.bf16.msra.mxu0 %v3240
    %3543 = vmatpush.bf16.msra.mxu0 %v3236
    %3544 = vmatpush.bf16.msra.mxu0 %v3232
    %3545 = vmatpush.bf16.msra.mxu0 %v3228
    %3546 = vmatpush.bf16.msra.mxu0 %v3224
    %3547 = vmatpush.bf16.msra.mxu0 %v3220
    %3548 = vmatmul.bf16.gmra.mxu0 %v2631
    %v3549 = vpop.f32.mrf.mxu0
    %v3550 = vadd.f32 %v3537, %v3549
    %v3551 = vpop.f32.mrf.mxu0
    %3552 = vdwg.mxu0
    %3553 = vmatpush.bf16.msra.mxu0 %v3280
    %3554 = vmatpush.bf16.msra.mxu0 %v3276
    %3555 = vmatpush.bf16.msra.mxu0 %v3272
    %3556 = vmatpush.bf16.msra.mxu0 %v3268
    %3557 = vmatpush.bf16.msra.mxu0 %v3264
    %3558 = vmatpush.bf16.msra.mxu0 %v3260
    %3559 = vmatpush.bf16.msra.mxu0 %v3256
    %3560 = vmatpush.bf16.msra.mxu0 %v3252
    %3561 = vmatmul.bf16.gmra.mxu0 %v2632
    %v3562 = vpop.f32.mrf.mxu0
    %v3563 = vadd.f32 %v3550, %v3562
    %v3564 = vpop.f32.mrf.mxu0
    %3565 = vdwg.mxu0
    %3566 = vmatpush.bf16.msra.mxu0 %v3185
    %3567 = vmatpush.bf16.msra.mxu0 %v3181
    %3568 = vmatpush.bf16.msra.mxu0 %v3177
    %3569 = vmatpush.bf16.msra.mxu0 %v3173
    %3570 = vmatpush.bf16.msra.mxu0 %v3169
    %3571 = vmatpush.bf16.msra.mxu0 %v3165
    %3572 = vmatpush.bf16.msra.mxu0 %v3161
    %3573 = vmatpush.bf16.msra.mxu0 %v3157
    %3574 = vmatmul.bf16.gmra.mxu0 %v2629
    %v3575 = vpop.f32.mrf.mxu0
    %v3576 = vadd.f32 %v2765, %v3575
    %v3577 = vpop.f32.mrf.mxu0
    %3578 = vdwg.mxu0
    %3579 = vmatpush.bf16.msra.mxu0 %v3217
    %3580 = vmatpush.bf16.msra.mxu0 %v3213
    %3581 = vmatpush.bf16.msra.mxu0 %v3209
    %3582 = vmatpush.bf16.msra.mxu0 %v3205
    %3583 = vmatpush.bf16.msra.mxu0 %v3201
    %3584 = vmatpush.bf16.msra.mxu0 %v3197
    %3585 = vmatpush.bf16.msra.mxu0 %v3193
    %3586 = vmatpush.bf16.msra.mxu0 %v3189
    %3587 = vmatmul.bf16.gmra.mxu0 %v2630
    %v3588 = vpop.f32.mrf.mxu0
    %v3589 = vadd.f32 %v3576, %v3588
    %v3590 = vpop.f32.mrf.mxu0
    %3591 = vdwg.mxu0
    %3592 = vmatpush.bf16.msra.mxu0 %v3249
    %3593 = vmatpush.bf16.msra.mxu0 %v3245
    %3594 = vmatpush.bf16.msra.mxu0 %v3241
    %3595 = vmatpush.bf16.msra.mxu0 %v3237
    %3596 = vmatpush.bf16.msra.mxu0 %v3233
    %3597 = vmatpush.bf16.msra.mxu0 %v3229
    %3598 = vmatpush.bf16.msra.mxu0 %v3225
    %3599 = vmatpush.bf16.msra.mxu0 %v3221
    %3600 = vmatmul.bf16.gmra.mxu0 %v2631
    %v3601 = vpop.f32.mrf.mxu0
    %v3602 = vadd.f32 %v3589, %v3601
    %v3603 = vpop.f32.mrf.mxu0
    %3604 = vdwg.mxu0
    %3605 = vmatpush.bf16.msra.mxu0 %v3281
    %3606 = vmatpush.bf16.msra.mxu0 %v3277
    %3607 = vmatpush.bf16.msra.mxu0 %v3273
    %3608 = vmatpush.bf16.msra.mxu0 %v3269
    %3609 = vmatpush.bf16.msra.mxu0 %v3265
    %3610 = vmatpush.bf16.msra.mxu0 %v3261
    %3611 = vmatpush.bf16.msra.mxu0 %v3257
    %3612 = vmatpush.bf16.msra.mxu0 %v3253
    %3613 = vmatmul.bf16.gmra.mxu0 %v2632
    %v3614 = vpop.f32.mrf.mxu0
    %v3615 = vadd.f32 %v3602, %v3614
    %v3616 = vpop.f32.mrf.mxu0
    %3617 = vdwg.mxu0
    %vm3618 = vcmp.gt.f32.partialorder %v3459, 0.0
    %vm3619 = vcmp.gt.f32.partialorder %v3511, 0.0
    %vm3620 = vcmp.gt.f32.partialorder %v3563, 0.0
    %vm3621 = vcmp.gt.f32.partialorder %v3615, 0.0
    %v3622 = vmul.f32 %v3459, 0.2
    %v3623 = vmul.f32 %v3511, 0.2
    %v3624 = vmul.f32 %v3563, 0.2
    %v3625 = vmul.f32 %v3615, 0.2
    %v3626 = vsel %vm3618, %v3459, %v3622
    %v3627 = vsel %vm3619, %v3511, %v3623
    %v3628 = vsel %vm3620, %v3563, %v3624
    %v3629 = vsel %vm3621, %v3615, %v3625
    %v3630 = vpack.c.bf16 %v3626, %v3626
    %v3631 = vpack.c.bf16 %v3627, %v3627
    %v3632 = vpack.c.bf16 %v3628, %v3628
    %v3633 = vpack.c.bf16 %v3629, %v3629
    %v3634 = vld [vmem:[#allocation10] sm:$0xf]
    %v3635 = vld [vmem:[#allocation10 + $0x4] sm:$0xf]
    %v3636 = vld [vmem:[#allocation10 + $0x8] sm:$0xf]
    %v3637 = vld [vmem:[#allocation10 + $0xc] sm:$0xf]
    %v3638 = vld [vmem:[#allocation10 + $0x10] sm:$0xf]
    %v3639 = vld [vmem:[#allocation10 + $0x14] sm:$0xf]
    %v3640 = vld [vmem:[#allocation10 + $0x18] sm:$0xf]
    %v3641 = vld [vmem:[#allocation10 + $0x1c] sm:$0xf]
    %v3642 = vld [vmem:[#allocation10 + $0x20] sm:$0xf]
    %v3643 = vld [vmem:[#allocation10 + $0x24] sm:$0xf]
    %v3644 = vld [vmem:[#allocation10 + $0x28] sm:$0xf]
    %v3645 = vld [vmem:[#allocation10 + $0x2c] sm:$0xf]
    %v3646 = vld [vmem:[#allocation10 + $0x30] sm:$0xf]
    %v3647 = vld [vmem:[#allocation10 + $0x34] sm:$0xf]
    %v3648 = vld [vmem:[#allocation10 + $0x38] sm:$0xf]
    %v3649 = vld [vmem:[#allocation10 + $0x3c] sm:$0xf]
    %v3650 = vld [vmem:[#allocation10 + $0x40] sm:$0xf]
    %v3651 = vld [vmem:[#allocation10 + $0x44] sm:$0xf]
    %v3652 = vld [vmem:[#allocation10 + $0x48] sm:$0xf]
    %v3653 = vld [vmem:[#allocation10 + $0x4c] sm:$0xf]
    %v3654 = vld [vmem:[#allocation10 + $0x50] sm:$0xf]
    %v3655 = vld [vmem:[#allocation10 + $0x54] sm:$0xf]
    %v3656 = vld [vmem:[#allocation10 + $0x58] sm:$0xf]
    %v3657 = vld [vmem:[#allocation10 + $0x5c] sm:$0xf]
    %v3658 = vld [vmem:[#allocation10 + $0x60] sm:$0xf]
    %v3659 = vld [vmem:[#allocation10 + $0x64] sm:$0xf]
    %v3660 = vld [vmem:[#allocation10 + $0x68] sm:$0xf]
    %v3661 = vld [vmem:[#allocation10 + $0x6c] sm:$0xf]
    %v3662 = vld [vmem:[#allocation10 + $0x70] sm:$0xf]
    %v3663 = vld [vmem:[#allocation10 + $0x74] sm:$0xf]
    %v3664 = vld [vmem:[#allocation10 + $0x78] sm:$0xf]
    %v3665 = vld [vmem:[#allocation10 + $0x7c] sm:$0xf]
    %v3666 = vld [vmem:[#allocation10 + $0x80] sm:$0xf]
    %v3667 = vld [vmem:[#allocation10 + $0x84] sm:$0xf]
    %v3668 = vld [vmem:[#allocation10 + $0x88] sm:$0xf]
    %v3669 = vld [vmem:[#allocation10 + $0x8c] sm:$0xf]
    %v3670 = vld [vmem:[#allocation10 + $0x90] sm:$0xf]
    %v3671 = vld [vmem:[#allocation10 + $0x94] sm:$0xf]
    %v3672 = vld [vmem:[#allocation10 + $0x98] sm:$0xf]
    %v3673 = vld [vmem:[#allocation10 + $0x9c] sm:$0xf]
    %v3674 = vld [vmem:[#allocation10 + $0xa0] sm:$0xf]
    %v3675 = vld [vmem:[#allocation10 + $0xa4] sm:$0xf]
    %v3676 = vld [vmem:[#allocation10 + $0xa8] sm:$0xf]
    %v3677 = vld [vmem:[#allocation10 + $0xac] sm:$0xf]
    %v3678 = vld [vmem:[#allocation10 + $0xb0] sm:$0xf]
    %v3679 = vld [vmem:[#allocation10 + $0xb4] sm:$0xf]
    %v3680 = vld [vmem:[#allocation10 + $0xb8] sm:$0xf]
    %v3681 = vld [vmem:[#allocation10 + $0xbc] sm:$0xf]
    %v3682 = vld [vmem:[#allocation10 + $0xc0] sm:$0xf]
    %v3683 = vld [vmem:[#allocation10 + $0xc4] sm:$0xf]
    %v3684 = vld [vmem:[#allocation10 + $0xc8] sm:$0xf]
    %v3685 = vld [vmem:[#allocation10 + $0xcc] sm:$0xf]
    %v3686 = vld [vmem:[#allocation10 + $0xd0] sm:$0xf]
    %v3687 = vld [vmem:[#allocation10 + $0xd4] sm:$0xf]
    %v3688 = vld [vmem:[#allocation10 + $0xd8] sm:$0xf]
    %v3689 = vld [vmem:[#allocation10 + $0xdc] sm:$0xf]
    %v3690 = vld [vmem:[#allocation10 + $0xe0] sm:$0xf]
    %v3691 = vld [vmem:[#allocation10 + $0xe4] sm:$0xf]
    %v3692 = vld [vmem:[#allocation10 + $0xe8] sm:$0xf]
    %v3693 = vld [vmem:[#allocation10 + $0xec] sm:$0xf]
    %v3694 = vld [vmem:[#allocation10 + $0xf0] sm:$0xf]
    %v3695 = vld [vmem:[#allocation10 + $0xf4] sm:$0xf]
    %v3696 = vld [vmem:[#allocation10 + $0xf8] sm:$0xf]
    %v3697 = vld [vmem:[#allocation10 + $0xfc] sm:$0xf]
    %v3699 = vperm.slane %v117, 0
    %v3765 = vunpack.c.l.b16 %v3634
    %v3766 = vunpack.c.l.b16 %v3635
    %v3767 = vunpack.c.l.b16 %v3636
    %v3768 = vunpack.c.l.b16 %v3637
    %v3769 = vunpack.c.l.b16 %v3638
    %v3770 = vunpack.c.l.b16 %v3639
    %v3771 = vunpack.c.l.b16 %v3640
    %v3772 = vunpack.c.l.b16 %v3641
    %v3773 = vunpack.c.l.b16 %v3642
    %v3774 = vunpack.c.l.b16 %v3643
    %v3775 = vunpack.c.l.b16 %v3644
    %v3776 = vunpack.c.l.b16 %v3645
    %v3777 = vunpack.c.l.b16 %v3646
    %v3778 = vunpack.c.l.b16 %v3647
    %v3779 = vunpack.c.l.b16 %v3648
    %v3780 = vunpack.c.l.b16 %v3649
    %v3781 = vunpack.c.l.b16 %v3650
    %v3782 = vunpack.c.l.b16 %v3651
    %v3783 = vunpack.c.l.b16 %v3652
    %v3784 = vunpack.c.l.b16 %v3653
    %v3785 = vunpack.c.l.b16 %v3654
    %v3786 = vunpack.c.l.b16 %v3655
    %v3787 = vunpack.c.l.b16 %v3656
    %v3788 = vunpack.c.l.b16 %v3657
    %v3789 = vunpack.c.l.b16 %v3658
    %v3790 = vunpack.c.l.b16 %v3659
    %v3791 = vunpack.c.l.b16 %v3660
    %v3792 = vunpack.c.l.b16 %v3661
    %v3793 = vunpack.c.l.b16 %v3662
    %v3794 = vunpack.c.l.b16 %v3663
    %v3795 = vunpack.c.l.b16 %v3664
    %v3796 = vunpack.c.l.b16 %v3665
    %v3797 = vunpack.c.l.b16 %v3666
    %v3798 = vunpack.c.l.b16 %v3667
    %v3799 = vunpack.c.l.b16 %v3668
    %v3800 = vunpack.c.l.b16 %v3669
    %v3801 = vunpack.c.l.b16 %v3670
    %v3802 = vunpack.c.l.b16 %v3671
    %v3803 = vunpack.c.l.b16 %v3672
    %v3804 = vunpack.c.l.b16 %v3673
    %v3805 = vunpack.c.l.b16 %v3674
    %v3806 = vunpack.c.l.b16 %v3675
    %v3807 = vunpack.c.l.b16 %v3676
    %v3808 = vunpack.c.l.b16 %v3677
    %v3809 = vunpack.c.l.b16 %v3678
    %v3810 = vunpack.c.l.b16 %v3679
    %v3811 = vunpack.c.l.b16 %v3680
    %v3812 = vunpack.c.l.b16 %v3681
    %v3813 = vunpack.c.l.b16 %v3682
    %v3814 = vunpack.c.l.b16 %v3683
    %v3815 = vunpack.c.l.b16 %v3684
    %v3816 = vunpack.c.l.b16 %v3685
    %v3817 = vunpack.c.l.b16 %v3686
    %v3818 = vunpack.c.l.b16 %v3687
    %v3819 = vunpack.c.l.b16 %v3688
    %v3820 = vunpack.c.l.b16 %v3689
    %v3821 = vunpack.c.l.b16 %v3690
    %v3822 = vunpack.c.l.b16 %v3691
    %v3823 = vunpack.c.l.b16 %v3692
    %v3824 = vunpack.c.l.b16 %v3693
    %v3825 = vunpack.c.l.b16 %v3694
    %v3826 = vunpack.c.l.b16 %v3695
    %v3827 = vunpack.c.l.b16 %v3696
    %v3828 = vunpack.c.l.b16 %v3697
    %v3829 = vpack.c.b16 %v3766, %v3765
    %v3830 = vpack.c.b16 %v3768, %v3767
    %v3831 = vpack.c.b16 %v3770, %v3769
    %v3832 = vpack.c.b16 %v3772, %v3771
    %v3833 = vpack.c.b16 %v3774, %v3773
    %v3834 = vpack.c.b16 %v3776, %v3775
    %v3835 = vpack.c.b16 %v3778, %v3777
    %v3836 = vpack.c.b16 %v3780, %v3779
    %v3837 = vpack.c.b16 %v3782, %v3781
    %v3838 = vpack.c.b16 %v3784, %v3783
    %v3839 = vpack.c.b16 %v3786, %v3785
    %v3840 = vpack.c.b16 %v3788, %v3787
    %v3841 = vpack.c.b16 %v3790, %v3789
    %v3842 = vpack.c.b16 %v3792, %v3791
    %v3843 = vpack.c.b16 %v3794, %v3793
    %v3844 = vpack.c.b16 %v3796, %v3795
    %v3845 = vpack.c.b16 %v3798, %v3797
    %v3846 = vpack.c.b16 %v3800, %v3799
    %v3847 = vpack.c.b16 %v3802, %v3801
    %v3848 = vpack.c.b16 %v3804, %v3803
    %v3849 = vpack.c.b16 %v3806, %v3805
    %v3850 = vpack.c.b16 %v3808, %v3807
    %v3851 = vpack.c.b16 %v3810, %v3809
    %v3852 = vpack.c.b16 %v3812, %v3811
    %v3853 = vpack.c.b16 %v3814, %v3813
    %v3854 = vpack.c.b16 %v3816, %v3815
    %v3855 = vpack.c.b16 %v3818, %v3817
    %v3856 = vpack.c.b16 %v3820, %v3819
    %v3857 = vpack.c.b16 %v3822, %v3821
    %v3858 = vpack.c.b16 %v3824, %v3823
    %v3859 = vpack.c.b16 %v3826, %v3825
    %v3860 = vpack.c.b16 %v3828, %v3827
    %3893 = vmatpush.bf16.msra.mxu0 %v3836
    %3894 = vmatpush.bf16.msra.mxu0 %v3835
    %3895 = vmatpush.bf16.msra.mxu0 %v3834
    %3896 = vmatpush.bf16.msra.mxu0 %v3833
    %3897 = vmatpush.bf16.msra.mxu0 %v3832
    %3898 = vmatpush.bf16.msra.mxu0 %v3831
    %3899 = vmatpush.bf16.msra.mxu0 %v3830
    %3900 = vmatpush.bf16.msra.mxu0 %v3829
    %3901 = vmatmul.bf16.gmra.mxu0 %v3630
    %v3902 = vpop.f32.mrf.mxu0
    %v3903 = vadd.f32 %v3699, %v3902
    %v3904 = vpop.f32.mrf.mxu0
    %3905 = vdwg.mxu0
    %3906 = vmatpush.bf16.msra.mxu0 %v3844
    %3907 = vmatpush.bf16.msra.mxu0 %v3843
    %3908 = vmatpush.bf16.msra.mxu0 %v3842
    %3909 = vmatpush.bf16.msra.mxu0 %v3841
    %3910 = vmatpush.bf16.msra.mxu0 %v3840
    %3911 = vmatpush.bf16.msra.mxu0 %v3839
    %3912 = vmatpush.bf16.msra.mxu0 %v3838
    %3913 = vmatpush.bf16.msra.mxu0 %v3837
    %3914 = vmatmul.bf16.gmra.mxu0 %v3631
    %v3915 = vpop.f32.mrf.mxu0
    %v3916 = vadd.f32 %v3903, %v3915
    %v3917 = vpop.f32.mrf.mxu0
    %3918 = vdwg.mxu0
    %3919 = vmatpush.bf16.msra.mxu0 %v3852
    %3920 = vmatpush.bf16.msra.mxu0 %v3851
    %3921 = vmatpush.bf16.msra.mxu0 %v3850
    %3922 = vmatpush.bf16.msra.mxu0 %v3849
    %3923 = vmatpush.bf16.msra.mxu0 %v3848
    %3924 = vmatpush.bf16.msra.mxu0 %v3847
    %3925 = vmatpush.bf16.msra.mxu0 %v3846
    %3926 = vmatpush.bf16.msra.mxu0 %v3845
    %3927 = vmatmul.bf16.gmra.mxu0 %v3632
    %v3928 = vpop.f32.mrf.mxu0
    %v3929 = vadd.f32 %v3916, %v3928
    %v3930 = vpop.f32.mrf.mxu0
    %3931 = vdwg.mxu0
    %3932 = vmatpush.bf16.msra.mxu0 %v3860
    %3933 = vmatpush.bf16.msra.mxu0 %v3859
    %3934 = vmatpush.bf16.msra.mxu0 %v3858
    %3935 = vmatpush.bf16.msra.mxu0 %v3857
    %3936 = vmatpush.bf16.msra.mxu0 %v3856
    %3937 = vmatpush.bf16.msra.mxu0 %v3855
    %3938 = vmatpush.bf16.msra.mxu0 %v3854
    %3939 = vmatpush.bf16.msra.mxu0 %v3853
    %3940 = vmatmul.bf16.gmra.mxu0 %v3633
    %v3941 = vpop.f32.mrf.mxu0
    %v3942 = vadd.f32 %v3929, %v3941
    %v3943 = vpop.f32.mrf.mxu0
    %3944 = vdwg.mxu0
    %v3945 = vtanh.pop %v3942
    %v3946 = vmax.f32 %v3945, 0.0
    %3947 = vst [vmem:[#allocation13] sm:$0xff] %v3946
    // Predicated region
    $region50: #{tpu_custom_call.1} parent=1 // pred_check
      _
    $region51: #{tpu_custom_call.1} parent=1 // pred_check_branch
      %3949 = sbr.rel (0) target = $region53
    $region52: #{tpu_custom_call.1} parent=1 // pred_region
      %3951 = vsyncadd [#allocation4], 0
      %s3953 = sshll.u32 [#allocation13], 4
      %s3954 = int_to_ptr.vmem [resolvable:$true] %s3953
      %s3955 = sshll.u32 %s6, 4
      %s3956 = int_to_ptr.hbm [resolvable:$true] %s3955
      %3958 = dma.vmem_to_hbm [thread:$0]  %s3954, 128, %s3956, [#allocation4]
    $region53: #{tpu_custom_call.1} parent=1 // pred_fallthru
      _
    // Predicated region
    $region54: #{tpu_custom_call.1} parent=1 // pred_check
      _
    $region55: #{tpu_custom_call.1} parent=1 // pred_check_branch
      %3960 = sbr.rel (0) target = $region57
    $region56: #{tpu_custom_call.1} parent=1 // pred_region
      %3962 = dma.done [#allocation4], 128
    $region57: #{tpu_custom_call.1} parent=1 // pred_fallthru
      _
    %3963 = vsyncpa [#allocation3], 1
    %3964 = vsyncpa [#allocation6], 1
    %3965 = vsyncpa [#allocation9], 1
    %3966 = vsyncpa [#allocation12], 1
    %3967 = vsyncpa [#allocation4], 1

</llo_original>
